<compile_context>
chip_gen: v7x
topology: tpu7x:2x2x1
jax: 0.10.0
libtpu: 0.0.40
codegen_flags: <defaults>
</compile_context>

<pallas_src>
import jax
import jax.numpy as jnp
from jax import lax
from jax.experimental import pallas as pl
from jax.experimental.pallas import tpu as pltpu

INPUT = 300
IPAD = 384           # K padded to a multiple of 128 (MXU / lane alignment)
HIDDEN = 256
FC2 = 128


def _round_up(x, m):
    return (x + m - 1) // m * m


# ----------------------- fused LSTM + MLP-head kernel ------------------------
def lstm_mlp_kernel(x_ref, wih_ref, whh_ref, b_ref,
                    w1_ref, b1_ref, w2_ref, b2_ref, w3_ref, b3_ref,
                    out_ref, h_sc, c_sc, gx_sc):
    t = pl.program_id(1)                      # time-block index (axis 1)
    Tt, Bb, Ip = x_ref.shape
    H = HIDDEN

    @pl.when(t == 0)
    def _():
        h_sc[...] = jnp.zeros_like(h_sc)
        c_sc[...] = jnp.zeros_like(c_sc)

    # Hoisted input projection: one large matmul for the whole timestep block.
    # (bf16 operands, f32 accumulation; bias added here, once.)
    xb = x_ref[...].reshape(Tt * Bb, Ip)                       # bf16
    gx = jnp.dot(xb, wih_ref[...],
                 preferred_element_type=jnp.float32) + b_ref[...]
    gx_sc[...] = gx.reshape(Tt, Bb, 4 * H)                     # f32

    def step(s, carry):
        h, c = carry                                           # (Bb, H) f32
        g = gx_sc[s] + jnp.dot(h.astype(jnp.bfloat16), whh_ref[...],
                               preferred_element_type=jnp.float32)
        i_g = jax.nn.sigmoid(g[:, 0 * H:1 * H])
        f_g = jax.nn.sigmoid(g[:, 1 * H:2 * H])
        g_g = jnp.tanh(g[:, 2 * H:3 * H])
        o_g = jax.nn.sigmoid(g[:, 3 * H:4 * H])
        c = f_g * c + i_g * g_g
        h = o_g * jnp.tanh(c)
        return h, c

    h, c = lax.fori_loop(0, Tt, step, (h_sc[...], c_sc[...]), unroll=True)
    h_sc[...] = h
    c_sc[...] = c

    # Fused MLP head on the final timestep block.
    @pl.when(t == pl.num_programs(1) - 1)
    def _():
        h1 = jnp.maximum(
            jnp.dot(h.astype(jnp.bfloat16), w1_ref[...],
                    preferred_element_type=jnp.float32) + b1_ref[...], 0.0)
        h2 = jnp.maximum(
            jnp.dot(h1.astype(jnp.bfloat16), w2_ref[...],
                    preferred_element_type=jnp.float32) + b2_ref[...], 0.0)
        out = jnp.dot(h2, w3_ref[...],
                      preferred_element_type=jnp.float32) + b3_ref[...]
        out_ref[...] = out.astype(out_ref.dtype)


def lstm_net_pallas(x_tm_pad, params, Tt):
    """x_tm_pad: (T, BPAD, IPAD) bf16 time-major, batch/feature padded."""
    T, BPAD, _ = x_tm_pad.shape
    H = HIDDEN
    Bb = min(BPAD, 128)
    grid = (BPAD // Bb, T // Tt)
    return pl.pallas_call(
        lstm_mlp_kernel,
        out_shape=jax.ShapeDtypeStruct((BPAD, 1), jnp.float32),
        grid_spec=pltpu.PrefetchScalarGridSpec(
            num_scalar_prefetch=0,
            grid=grid,
            in_specs=[
                pl.BlockSpec((Tt, Bb, IPAD), lambda b, t: (t, b, 0)),
                pl.BlockSpec((IPAD, 4 * H), lambda b, t: (0, 0)),
                pl.BlockSpec((H, 4 * H), lambda b, t: (0, 0)),
                pl.BlockSpec((1, 4 * H), lambda b, t: (0, 0)),
                pl.BlockSpec((H, H), lambda b, t: (0, 0)),
                pl.BlockSpec((1, H), lambda b, t: (0, 0)),
                pl.BlockSpec((H, FC2), lambda b, t: (0, 0)),
                pl.BlockSpec((1, FC2), lambda b, t: (0, 0)),
                pl.BlockSpec((FC2, 1), lambda b, t: (0, 0)),
                pl.BlockSpec((1, 1), lambda b, t: (0, 0)),
            ],
            out_specs=pl.BlockSpec((Bb, 1), lambda b, t: (b, 0)),
            scratch_shapes=[
                pltpu.VMEM((Bb, H), jnp.float32),            # h carry
                pltpu.VMEM((Bb, H), jnp.float32),            # c carry
                pltpu.VMEM((Tt, Bb, 4 * H), jnp.float32),    # hoisted gates_x
            ],
        ),
        compiler_params=pltpu.CompilerParams(
            dimension_semantics=("parallel", "arbitrary")),
    )(x_tm_pad, params["wih_t"], params["whh_t"], params["b_lstm"],
      params["w1"], params["b1"], params["w2"], params["b2"],
      params["w3"], params["b3"])


@jax.jit
def lstm_net_forward(x_btI, params):
    """x_btI: (B, T, 300) batch-first, like the PyTorch module."""
    B, T, _ = x_btI.shape
    # Largest timestep-block factor <= 8 that divides T.
    Tt = max(d for d in range(1, min(T, 8) + 1) if T % d == 0)
    # Pad batch to a sublane-aligned size and features to IPAD (zeros are
    # numerically inert in the contraction; padded batch rows are discarded).
    BPAD = _round_up(B, 8)
    if BPAD > 128:
        BPAD = _round_up(B, 128)
    x = jnp.pad(x_btI, ((0, BPAD - B), (0, 0), (0, IPAD - INPUT)))
    x_tm = jnp.transpose(x, (1, 0, 2)).astype(jnp.bfloat16)   # (T, BPAD, IPAD)
    out = lstm_net_pallas(x_tm, params, Tt)
    return out[:B]


# ---------------------------- parameter setup --------------------------------
def init_params(key):
    ks = jax.random.split(key, 10)
    k_lstm = 1.0 / jnp.sqrt(HIDDEN)
    k_fc = 1.0 / jnp.sqrt(HIDDEN)
    k_fc3 = 1.0 / jnp.sqrt(FC2)

    def u(k, shape, s):
        return jax.random.uniform(k, shape, jnp.float32, -s, s)

    wih_t = u(ks[0], (INPUT, 4 * HIDDEN), k_lstm)
    # LSTM/MLP weights pre-transposed for (B,in)@(in,out); PyTorch gate order
    # i,f,g,o preserved along the 4H axis; b_ih + b_hh pre-summed.
    return {
        "wih_t": jnp.pad(wih_t, ((0, IPAD - INPUT), (0, 0))).astype(jnp.bfloat16),
        "whh_t": u(ks[1], (HIDDEN, 4 * HIDDEN), k_lstm).astype(jnp.bfloat16),
        "b_lstm": (u(ks[2], (1, 4 * HIDDEN), k_lstm)
                   + u(ks[3], (1, 4 * HIDDEN), k_lstm)),
        "w1": u(ks[4], (HIDDEN, HIDDEN), k_fc).astype(jnp.bfloat16),
        "b1": u(ks[5], (1, HIDDEN), k_fc),
        "w2": u(ks[6], (HIDDEN, FC2), k_fc).astype(jnp.bfloat16),
        "b2": u(ks[7], (1, FC2), k_fc),
        "w3": u(ks[8], (FC2, 1), k_fc3),      # final tiny dot kept f32
        "b3": u(ks[9], (1, 1), k_fc3),
    }


# ------------------------------ reference ------------------------------------
def reference_forward(x_btI, p):
    """Pure-JAX reference mirroring the kernel's numerics (bf16 matmul
    operands, f32 accumulation / gate math)."""
    B, T, _ = x_btI.shape
    xp = jnp.pad(x_btI, ((0, 0), (0, 0), (0, IPAD - INPUT))).astype(jnp.bfloat16)

    def step(carry, xt):
        h, c = carry
        gates = (jnp.dot(xt, p["wih_t"], preferred_element_type=jnp.float32)
                 + jnp.dot(h.astype(jnp.bfloat16), p["whh_t"],
                           preferred_element_type=jnp.float32)
                 + p["b_lstm"])
        H = HIDDEN
        i = jax.nn.sigmoid(gates[:, :H])
        f = jax.nn.sigmoid(gates[:, H:2 * H])
        g = jnp.tanh(gates[:, 2 * H:3 * H])
        o = jax.nn.sigmoid(gates[:, 3 * H:])
        c = f * c + i * g
        h = o * jnp.tanh(c)
        return (h, c), None

    h0 = jnp.zeros((B, HIDDEN), jnp.float32)
    (h, _), _ = lax.scan(step, (h0, h0), jnp.transpose(xp, (1, 0, 2)))
    h1 = jnp.maximum(jnp.dot(h.astype(jnp.bfloat16), p["w1"],
                             preferred_element_type=jnp.float32) + p["b1"], 0.0)
    h2 = jnp.maximum(jnp.dot(h1.astype(jnp.bfloat16), p["w2"],
                             preferred_element_type=jnp.float32) + p["b2"], 0.0)
    return jnp.dot(h2, p["w3"], preferred_element_type=jnp.float32) + p["b3"]


if __name__ == "__main__":
    B, T = 8, 16
    key = jax.random.PRNGKey(0)
    kx, kp = jax.random.split(key)
    x = jax.random.normal(kx, (B, T, INPUT), jnp.float32)
    params = init_params(kp)

    out = lstm_net_forward(x, params)
    jax.block_until_ready(out)
    assert out.shape == (B, 1)

    ref = reference_forward(x, params)
    assert jnp.allclose(out, ref, rtol=2e-3, atol=2e-3), (out, ref)

    print("KERNEL_OK")
</pallas_src>

<mosaic_0001>
module attributes {stable_mosaic.version = 11 : i64} {
  func.func @lstm_mlp_kernel(%arg0: i32, %arg1: i32, %arg2: memref<8x8x384xbf16, #tpu.memory_space<vmem>>, %arg3: memref<384x1024xbf16, #tpu.memory_space<vmem>>, %arg4: memref<256x1024xbf16, #tpu.memory_space<vmem>>, %arg5: memref<1x1024xf32, #tpu.memory_space<vmem>>, %arg6: memref<256x256xbf16, #tpu.memory_space<vmem>>, %arg7: memref<1x256xf32, #tpu.memory_space<vmem>>, %arg8: memref<256x128xbf16, #tpu.memory_space<vmem>>, %arg9: memref<1x128xf32, #tpu.memory_space<vmem>>, %arg10: memref<128x1xf32, #tpu.memory_space<vmem>>, %arg11: memref<1x1xf32, #tpu.memory_space<vmem>>, %arg12: memref<8x1xf32, #tpu.memory_space<vmem>>, %arg13: memref<8x256xf32, #tpu.memory_space<vmem>>, %arg14: memref<8x256xf32, #tpu.memory_space<vmem>>, %arg15: memref<8x8x1024xf32, #tpu.memory_space<vmem>>) attributes {dimension_semantics = [#tpu.dimension_semantics<parallel>, #tpu.dimension_semantics<arbitrary>], iteration_bounds = array<i64: 1, 2>, scalar_prefetch = 0 : i64, scratch_operands = 3 : i64, tpu.core_type = #tpu.core_type<tc>, window_params = [{transform_indices = @transform_0, window_bounds = array<i64: 8, 8, 384>}, {pipeline_mode = #tpu.pipeline_mode<synchronous>, transform_indices = @transform_1, window_bounds = array<i64: 384, 1024>}, {pipeline_mode = #tpu.pipeline_mode<synchronous>, transform_indices = @transform_2, window_bounds = array<i64: 256, 1024>}, {pipeline_mode = #tpu.pipeline_mode<synchronous>, transform_indices = @transform_3, window_bounds = array<i64: 1, 1024>}, {pipeline_mode = #tpu.pipeline_mode<synchronous>, transform_indices = @transform_4, window_bounds = array<i64: 256, 256>}, {pipeline_mode = #tpu.pipeline_mode<synchronous>, transform_indices = @transform_5, window_bounds = array<i64: 1, 256>}, {pipeline_mode = #tpu.pipeline_mode<synchronous>, transform_indices = @transform_6, window_bounds = array<i64: 256, 128>}, {pipeline_mode = #tpu.pipeline_mode<synchronous>, transform_indices = @transform_7, window_bounds = array<i64: 1, 128>}, {pipeline_mode = #tpu.pipeline_mode<synchronous>, transform_indices = @transform_8, window_bounds = array<i64: 128, 1>}, {pipeline_mode = #tpu.pipeline_mode<synchronous>, transform_indices = @transform_9, window_bounds = array<i64: 1, 1>}, {transform_indices = @transform_10, window_bounds = array<i64: 8, 1>}]} {
    %c0_i32 = arith.constant 0 : i32
    %0 = arith.cmpi eq, %arg1, %c0_i32 : i32
    %1 = arith.extui %0 : i1 to i32
    %c0_i32_0 = arith.constant 0 : i32
    %2 = arith.cmpi ne, %1, %c0_i32_0 : i32
    scf.if %2 {
      %cst_85 = arith.constant 0.000000e+00 : f32
      %275 = vector.broadcast %cst_85 : f32 to vector<8x256xf32>
      %c0_86 = arith.constant 0 : index
      %c0_87 = arith.constant 0 : index
      %276 = vector.load %arg13[%c0_86, %c0_87] : memref<8x256xf32, #tpu.memory_space<vmem>>, vector<8x256xf32>
      tpu.vector_store %arg13[%c0_86, %c0_87], %275 {strides = array<i32>} : memref<8x256xf32, #tpu.memory_space<vmem>>, vector<8x256xf32>,
      %cst_88 = arith.constant 0.000000e+00 : f32
      %277 = vector.broadcast %cst_88 : f32 to vector<8x256xf32>
      %c0_89 = arith.constant 0 : index
      %c0_90 = arith.constant 0 : index
      %278 = vector.load %arg14[%c0_89, %c0_90] : memref<8x256xf32, #tpu.memory_space<vmem>>, vector<8x256xf32>
      tpu.vector_store %arg14[%c0_89, %c0_90], %277 {strides = array<i32>} : memref<8x256xf32, #tpu.memory_space<vmem>>, vector<8x256xf32>,
    } else {
    }
    %c0 = arith.constant 0 : index
    %c0_1 = arith.constant 0 : index
    %c0_2 = arith.constant 0 : index
    %3 = vector.load %arg2[%c0, %c0_1, %c0_2] : memref<8x8x384xbf16, #tpu.memory_space<vmem>>, vector<8x8x384xbf16>
    %4 = vector.shape_cast %3 : vector<8x8x384xbf16> to vector<64x384xbf16>
    %c0_3 = arith.constant 0 : index
    %c0_4 = arith.constant 0 : index
    %5 = vector.load %arg3[%c0_3, %c0_4] : memref<384x1024xbf16, #tpu.memory_space<vmem>>, vector<384x1024xbf16>
    %cst = arith.constant dense<0.000000e+00> : vector<64x1024xf32>
    %6 = tpu.matmul %4, %5, %cst {dimension_numbers = #tpu.dot_dimension_numbers<[1], [0], [0], [1], [0, 0, 1, 1], [], []>} : vector<64x384xbf16>, vector<384x1024xbf16>, vector<64x1024xf32> -> vector<64x1024xf32>
    %c0_5 = arith.constant 0 : index
    %c0_6 = arith.constant 0 : index
    %7 = vector.load %arg5[%c0_5, %c0_6] : memref<1x1024xf32, #tpu.memory_space<vmem>>, vector<1x1024xf32>
    %8 = vector.broadcast %7 : vector<1x1024xf32> to vector<64x1024xf32>
    %9 = arith.addf %6, %8 : vector<64x1024xf32>
    %10 = vector.shape_cast %9 : vector<64x1024xf32> to vector<8x8x1024xf32>
    %c0_7 = arith.constant 0 : index
    %c0_8 = arith.constant 0 : index
    %c0_9 = arith.constant 0 : index
    %11 = vector.load %arg15[%c0_7, %c0_8, %c0_9] : memref<8x8x1024xf32, #tpu.memory_space<vmem>>, vector<8x8x1024xf32>
    tpu.vector_store %arg15[%c0_7, %c0_8, %c0_9], %10 {strides = array<i32>} : memref<8x8x1024xf32, #tpu.memory_space<vmem>>, vector<8x8x1024xf32>,
    %c0_10 = arith.constant 0 : index
    %c0_11 = arith.constant 0 : index
    %12 = vector.load %arg13[%c0_10, %c0_11] : memref<8x256xf32, #tpu.memory_space<vmem>>, vector<8x256xf32>
    %c0_12 = arith.constant 0 : index
    %c0_13 = arith.constant 0 : index
    %13 = vector.load %arg14[%c0_12, %c0_13] : memref<8x256xf32, #tpu.memory_space<vmem>>, vector<8x256xf32>
    %c0_i32_14 = arith.constant 0 : i32
    %14 = arith.index_cast %c0_i32_14 : i32 to index
    %c0_15 = arith.constant 0 : index
    %c0_16 = arith.constant 0 : index
    %15 = vector.load %arg15[%14, %c0_15, %c0_16] : memref<8x8x1024xf32, #tpu.memory_space<vmem>>, vector<1x8x1024xf32>
    %16 = vector.shape_cast %15 : vector<1x8x1024xf32> to vector<8x1024xf32>
    %17 = arith.truncf %12 : vector<8x256xf32> to vector<8x256xbf16>
    %c0_17 = arith.constant 0 : index
    %c0_18 = arith.constant 0 : index
    %18 = vector.load %arg4[%c0_17, %c0_18] : memref<256x1024xbf16, #tpu.memory_space<vmem>>, vector<256x1024xbf16>
    %cst_19 = arith.constant dense<0.000000e+00> : vector<8x1024xf32>
    %19 = tpu.matmul %17, %18, %cst_19 {dimension_numbers = #tpu.dot_dimension_numbers<[1], [0], [0], [1], [0, 0, 1, 1], [], []>} : vector<8x256xbf16>, vector<256x1024xbf16>, vector<8x1024xf32> -> vector<8x1024xf32>
    %20 = arith.addf %16, %19 : vector<8x1024xf32>
    %21 = vector.extract_strided_slice %20 {offsets = [0, 0], sizes = [8, 256], strides = [1, 1]} : vector<8x1024xf32> to vector<8x256xf32>
    %22 = arith.negf %21 : vector<8x256xf32>
    %23 = math.exp %22 : vector<8x256xf32>
    %cst_20 = arith.constant 1.000000e+00 : f32
    %24 = vector.broadcast %cst_20 : f32 to vector<8x256xf32>
    %25 = arith.addf %24, %23 : vector<8x256xf32>
    %26 = arith.divf %24, %25 : vector<8x256xf32>
    %27 = vector.extract_strided_slice %20 {offsets = [0, 256], sizes = [8, 256], strides = [1, 1]} : vector<8x1024xf32> to vector<8x256xf32>
    %28 = arith.negf %27 : vector<8x256xf32>
    %29 = math.exp %28 : vector<8x256xf32>
    %cst_21 = arith.constant 1.000000e+00 : f32
    %30 = vector.broadcast %cst_21 : f32 to vector<8x256xf32>
    %31 = arith.addf %30, %29 : vector<8x256xf32>
    %32 = arith.divf %30, %31 : vector<8x256xf32>
    %33 = vector.extract_strided_slice %20 {offsets = [0, 512], sizes = [8, 256], strides = [1, 1]} : vector<8x1024xf32> to vector<8x256xf32>
    %34 = math.tanh %33 : vector<8x256xf32>
    %35 = vector.extract_strided_slice %20 {offsets = [0, 768], sizes = [8, 256], strides = [1, 1]} : vector<8x1024xf32> to vector<8x256xf32>
    %36 = arith.negf %35 : vector<8x256xf32>
    %37 = math.exp %36 : vector<8x256xf32>
    %cst_22 = arith.constant 1.000000e+00 : f32
    %38 = vector.broadcast %cst_22 : f32 to vector<8x256xf32>
    %39 = arith.addf %38, %37 : vector<8x256xf32>
    %40 = arith.divf %38, %39 : vector<8x256xf32>
    %41 = arith.mulf %32, %13 : vector<8x256xf32>
    %42 = arith.mulf %26, %34 : vector<8x256xf32>
    %43 = arith.addf %41, %42 : vector<8x256xf32>
    %44 = math.tanh %43 : vector<8x256xf32>
    %45 = arith.mulf %40, %44 : vector<8x256xf32>
    %c1_i32 = arith.constant 1 : i32
    %46 = arith.index_cast %c1_i32 : i32 to index
    %c0_23 = arith.constant 0 : index
    %c0_24 = arith.constant 0 : index
    %47 = vector.load %arg15[%46, %c0_23, %c0_24] : memref<8x8x1024xf32, #tpu.memory_space<vmem>>, vector<1x8x1024xf32>
    %48 = vector.shape_cast %47 : vector<1x8x1024xf32> to vector<8x1024xf32>
    %49 = arith.truncf %45 : vector<8x256xf32> to vector<8x256xbf16>
    %c0_25 = arith.constant 0 : index
    %c0_26 = arith.constant 0 : index
    %50 = vector.load %arg4[%c0_25, %c0_26] : memref<256x1024xbf16, #tpu.memory_space<vmem>>, vector<256x1024xbf16>
    %cst_27 = arith.constant dense<0.000000e+00> : vector<8x1024xf32>
    %51 = tpu.matmul %49, %50, %cst_27 {dimension_numbers = #tpu.dot_dimension_numbers<[1], [0], [0], [1], [0, 0, 1, 1], [], []>} : vector<8x256xbf16>, vector<256x1024xbf16>, vector<8x1024xf32> -> vector<8x1024xf32>
    %52 = arith.addf %48, %51 : vector<8x1024xf32>
    %53 = vector.extract_strided_slice %52 {offsets = [0, 0], sizes = [8, 256], strides = [1, 1]} : vector<8x1024xf32> to vector<8x256xf32>
    %54 = arith.negf %53 : vector<8x256xf32>
    %55 = math.exp %54 : vector<8x256xf32>
    %cst_28 = arith.constant 1.000000e+00 : f32
    %56 = vector.broadcast %cst_28 : f32 to vector<8x256xf32>
    %57 = arith.addf %56, %55 : vector<8x256xf32>
    %58 = arith.divf %56, %57 : vector<8x256xf32>
    %59 = vector.extract_strided_slice %52 {offsets = [0, 256], sizes = [8, 256], strides = [1, 1]} : vector<8x1024xf32> to vector<8x256xf32>
    %60 = arith.negf %59 : vector<8x256xf32>
    %61 = math.exp %60 : vector<8x256xf32>
    %cst_29 = arith.constant 1.000000e+00 : f32
    %62 = vector.broadcast %cst_29 : f32 to vector<8x256xf32>
    %63 = arith.addf %62, %61 : vector<8x256xf32>
    %64 = arith.divf %62, %63 : vector<8x256xf32>
    %65 = vector.extract_strided_slice %52 {offsets = [0, 512], sizes = [8, 256], strides = [1, 1]} : vector<8x1024xf32> to vector<8x256xf32>
    %66 = math.tanh %65 : vector<8x256xf32>
    %67 = vector.extract_strided_slice %52 {offsets = [0, 768], sizes = [8, 256], strides = [1, 1]} : vector<8x1024xf32> to vector<8x256xf32>
    %68 = arith.negf %67 : vector<8x256xf32>
    %69 = math.exp %68 : vector<8x256xf32>
    %cst_30 = arith.constant 1.000000e+00 : f32
    %70 = vector.broadcast %cst_30 : f32 to vector<8x256xf32>
    %71 = arith.addf %70, %69 : vector<8x256xf32>
    %72 = arith.divf %70, %71 : vector<8x256xf32>
    %73 = arith.mulf %64, %43 : vector<8x256xf32>
    %74 = arith.mulf %58, %66 : vector<8x256xf32>
    %75 = arith.addf %73, %74 : vector<8x256xf32>
    %76 = math.tanh %75 : vector<8x256xf32>
    %77 = arith.mulf %72, %76 : vector<8x256xf32>
    %c2_i32 = arith.constant 2 : i32
    %78 = arith.index_cast %c2_i32 : i32 to index
    %c0_31 = arith.constant 0 : index
    %c0_32 = arith.constant 0 : index
    %79 = vector.load %arg15[%78, %c0_31, %c0_32] : memref<8x8x1024xf32, #tpu.memory_space<vmem>>, vector<1x8x1024xf32>
    %80 = vector.shape_cast %79 : vector<1x8x1024xf32> to vector<8x1024xf32>
    %81 = arith.truncf %77 : vector<8x256xf32> to vector<8x256xbf16>
    %c0_33 = arith.constant 0 : index
    %c0_34 = arith.constant 0 : index
    %82 = vector.load %arg4[%c0_33, %c0_34] : memref<256x1024xbf16, #tpu.memory_space<vmem>>, vector<256x1024xbf16>
    %cst_35 = arith.constant dense<0.000000e+00> : vector<8x1024xf32>
    %83 = tpu.matmul %81, %82, %cst_35 {dimension_numbers = #tpu.dot_dimension_numbers<[1], [0], [0], [1], [0, 0, 1, 1], [], []>} : vector<8x256xbf16>, vector<256x1024xbf16>, vector<8x1024xf32> -> vector<8x1024xf32>
    %84 = arith.addf %80, %83 : vector<8x1024xf32>
    %85 = vector.extract_strided_slice %84 {offsets = [0, 0], sizes = [8, 256], strides = [1, 1]} : vector<8x1024xf32> to vector<8x256xf32>
    %86 = arith.negf %85 : vector<8x256xf32>
    %87 = math.exp %86 : vector<8x256xf32>
    %cst_36 = arith.constant 1.000000e+00 : f32
    %88 = vector.broadcast %cst_36 : f32 to vector<8x256xf32>
    %89 = arith.addf %88, %87 : vector<8x256xf32>
    %90 = arith.divf %88, %89 : vector<8x256xf32>
    %91 = vector.extract_strided_slice %84 {offsets = [0, 256], sizes = [8, 256], strides = [1, 1]} : vector<8x1024xf32> to vector<8x256xf32>
    %92 = arith.negf %91 : vector<8x256xf32>
    %93 = math.exp %92 : vector<8x256xf32>
    %cst_37 = arith.constant 1.000000e+00 : f32
    %94 = vector.broadcast %cst_37 : f32 to vector<8x256xf32>
    %95 = arith.addf %94, %93 : vector<8x256xf32>
    %96 = arith.divf %94, %95 : vector<8x256xf32>
    %97 = vector.extract_strided_slice %84 {offsets = [0, 512], sizes = [8, 256], strides = [1, 1]} : vector<8x1024xf32> to vector<8x256xf32>
    %98 = math.tanh %97 : vector<8x256xf32>
    %99 = vector.extract_strided_slice %84 {offsets = [0, 768], sizes = [8, 256], strides = [1, 1]} : vector<8x1024xf32> to vector<8x256xf32>
    %100 = arith.negf %99 : vector<8x256xf32>
    %101 = math.exp %100 : vector<8x256xf32>
    %cst_38 = arith.constant 1.000000e+00 : f32
    %102 = vector.broadcast %cst_38 : f32 to vector<8x256xf32>
    %103 = arith.addf %102, %101 : vector<8x256xf32>
    %104 = arith.divf %102, %103 : vector<8x256xf32>
    %105 = arith.mulf %96, %75 : vector<8x256xf32>
    %106 = arith.mulf %90, %98 : vector<8x256xf32>
    %107 = arith.addf %105, %106 : vector<8x256xf32>
    %108 = math.tanh %107 : vector<8x256xf32>
    %109 = arith.mulf %104, %108 : vector<8x256xf32>
    %c3_i32 = arith.constant 3 : i32
    %110 = arith.index_cast %c3_i32 : i32 to index
    %c0_39 = arith.constant 0 : index
    %c0_40 = arith.constant 0 : index
    %111 = vector.load %arg15[%110, %c0_39, %c0_40] : memref<8x8x1024xf32, #tpu.memory_space<vmem>>, vector<1x8x1024xf32>
    %112 = vector.shape_cast %111 : vector<1x8x1024xf32> to vector<8x1024xf32>
    %113 = arith.truncf %109 : vector<8x256xf32> to vector<8x256xbf16>
    %c0_41 = arith.constant 0 : index
    %c0_42 = arith.constant 0 : index
    %114 = vector.load %arg4[%c0_41, %c0_42] : memref<256x1024xbf16, #tpu.memory_space<vmem>>, vector<256x1024xbf16>
    %cst_43 = arith.constant dense<0.000000e+00> : vector<8x1024xf32>
    %115 = tpu.matmul %113, %114, %cst_43 {dimension_numbers = #tpu.dot_dimension_numbers<[1], [0], [0], [1], [0, 0, 1, 1], [], []>} : vector<8x256xbf16>, vector<256x1024xbf16>, vector<8x1024xf32> -> vector<8x1024xf32>
    %116 = arith.addf %112, %115 : vector<8x1024xf32>
    %117 = vector.extract_strided_slice %116 {offsets = [0, 0], sizes = [8, 256], strides = [1, 1]} : vector<8x1024xf32> to vector<8x256xf32>
    %118 = arith.negf %117 : vector<8x256xf32>
    %119 = math.exp %118 : vector<8x256xf32>
    %cst_44 = arith.constant 1.000000e+00 : f32
    %120 = vector.broadcast %cst_44 : f32 to vector<8x256xf32>
    %121 = arith.addf %120, %119 : vector<8x256xf32>
    %122 = arith.divf %120, %121 : vector<8x256xf32>
    %123 = vector.extract_strided_slice %116 {offsets = [0, 256], sizes = [8, 256], strides = [1, 1]} : vector<8x1024xf32> to vector<8x256xf32>
    %124 = arith.negf %123 : vector<8x256xf32>
    %125 = math.exp %124 : vector<8x256xf32>
    %cst_45 = arith.constant 1.000000e+00 : f32
    %126 = vector.broadcast %cst_45 : f32 to vector<8x256xf32>
    %127 = arith.addf %126, %125 : vector<8x256xf32>
    %128 = arith.divf %126, %127 : vector<8x256xf32>
    %129 = vector.extract_strided_slice %116 {offsets = [0, 512], sizes = [8, 256], strides = [1, 1]} : vector<8x1024xf32> to vector<8x256xf32>
    %130 = math.tanh %129 : vector<8x256xf32>
    %131 = vector.extract_strided_slice %116 {offsets = [0, 768], sizes = [8, 256], strides = [1, 1]} : vector<8x1024xf32> to vector<8x256xf32>
    %132 = arith.negf %131 : vector<8x256xf32>
    %133 = math.exp %132 : vector<8x256xf32>
    %cst_46 = arith.constant 1.000000e+00 : f32
    %134 = vector.broadcast %cst_46 : f32 to vector<8x256xf32>
    %135 = arith.addf %134, %133 : vector<8x256xf32>
    %136 = arith.divf %134, %135 : vector<8x256xf32>
    %137 = arith.mulf %128, %107 : vector<8x256xf32>
    %138 = arith.mulf %122, %130 : vector<8x256xf32>
    %139 = arith.addf %137, %138 : vector<8x256xf32>
    %140 = math.tanh %139 : vector<8x256xf32>
    %141 = arith.mulf %136, %140 : vector<8x256xf32>
    %c4_i32 = arith.constant 4 : i32
    %142 = arith.index_cast %c4_i32 : i32 to index
    %c0_47 = arith.constant 0 : index
    %c0_48 = arith.constant 0 : index
    %143 = vector.load %arg15[%142, %c0_47, %c0_48] : memref<8x8x1024xf32, #tpu.memory_space<vmem>>, vector<1x8x1024xf32>
    %144 = vector.shape_cast %143 : vector<1x8x1024xf32> to vector<8x1024xf32>
    %145 = arith.truncf %141 : vector<8x256xf32> to vector<8x256xbf16>
    %c0_49 = arith.constant 0 : index
    %c0_50 = arith.constant 0 : index
    %146 = vector.load %arg4[%c0_49, %c0_50] : memref<256x1024xbf16, #tpu.memory_space<vmem>>, vector<256x1024xbf16>
    %cst_51 = arith.constant dense<0.000000e+00> : vector<8x1024xf32>
    %147 = tpu.matmul %145, %146, %cst_51 {dimension_numbers = #tpu.dot_dimension_numbers<[1], [0], [0], [1], [0, 0, 1, 1], [], []>} : vector<8x256xbf16>, vector<256x1024xbf16>, vector<8x1024xf32> -> vector<8x1024xf32>
    %148 = arith.addf %144, %147 : vector<8x1024xf32>
    %149 = vector.extract_strided_slice %148 {offsets = [0, 0], sizes = [8, 256], strides = [1, 1]} : vector<8x1024xf32> to vector<8x256xf32>
    %150 = arith.negf %149 : vector<8x256xf32>
    %151 = math.exp %150 : vector<8x256xf32>
    %cst_52 = arith.constant 1.000000e+00 : f32
    %152 = vector.broadcast %cst_52 : f32 to vector<8x256xf32>
    %153 = arith.addf %152, %151 : vector<8x256xf32>
    %154 = arith.divf %152, %153 : vector<8x256xf32>
    %155 = vector.extract_strided_slice %148 {offsets = [0, 256], sizes = [8, 256], strides = [1, 1]} : vector<8x1024xf32> to vector<8x256xf32>
    %156 = arith.negf %155 : vector<8x256xf32>
    %157 = math.exp %156 : vector<8x256xf32>
    %cst_53 = arith.constant 1.000000e+00 : f32
    %158 = vector.broadcast %cst_53 : f32 to vector<8x256xf32>
    %159 = arith.addf %158, %157 : vector<8x256xf32>
    %160 = arith.divf %158, %159 : vector<8x256xf32>
    %161 = vector.extract_strided_slice %148 {offsets = [0, 512], sizes = [8, 256], strides = [1, 1]} : vector<8x1024xf32> to vector<8x256xf32>
    %162 = math.tanh %161 : vector<8x256xf32>
    %163 = vector.extract_strided_slice %148 {offsets = [0, 768], sizes = [8, 256], strides = [1, 1]} : vector<8x1024xf32> to vector<8x256xf32>
    %164 = arith.negf %163 : vector<8x256xf32>
    %165 = math.exp %164 : vector<8x256xf32>
    %cst_54 = arith.constant 1.000000e+00 : f32
    %166 = vector.broadcast %cst_54 : f32 to vector<8x256xf32>
    %167 = arith.addf %166, %165 : vector<8x256xf32>
    %168 = arith.divf %166, %167 : vector<8x256xf32>
    %169 = arith.mulf %160, %139 : vector<8x256xf32>
    %170 = arith.mulf %154, %162 : vector<8x256xf32>
    %171 = arith.addf %169, %170 : vector<8x256xf32>
    %172 = math.tanh %171 : vector<8x256xf32>
    %173 = arith.mulf %168, %172 : vector<8x256xf32>
    %c5_i32 = arith.constant 5 : i32
    %174 = arith.index_cast %c5_i32 : i32 to index
    %c0_55 = arith.constant 0 : index
    %c0_56 = arith.constant 0 : index
    %175 = vector.load %arg15[%174, %c0_55, %c0_56] : memref<8x8x1024xf32, #tpu.memory_space<vmem>>, vector<1x8x1024xf32>
    %176 = vector.shape_cast %175 : vector<1x8x1024xf32> to vector<8x1024xf32>
    %177 = arith.truncf %173 : vector<8x256xf32> to vector<8x256xbf16>
    %c0_57 = arith.constant 0 : index
    %c0_58 = arith.constant 0 : index
    %178 = vector.load %arg4[%c0_57, %c0_58] : memref<256x1024xbf16, #tpu.memory_space<vmem>>, vector<256x1024xbf16>
    %cst_59 = arith.constant dense<0.000000e+00> : vector<8x1024xf32>
    %179 = tpu.matmul %177, %178, %cst_59 {dimension_numbers = #tpu.dot_dimension_numbers<[1], [0], [0], [1], [0, 0, 1, 1], [], []>} : vector<8x256xbf16>, vector<256x1024xbf16>, vector<8x1024xf32> -> vector<8x1024xf32>
    %180 = arith.addf %176, %179 : vector<8x1024xf32>
    %181 = vector.extract_strided_slice %180 {offsets = [0, 0], sizes = [8, 256], strides = [1, 1]} : vector<8x1024xf32> to vector<8x256xf32>
    %182 = arith.negf %181 : vector<8x256xf32>
    %183 = math.exp %182 : vector<8x256xf32>
    %cst_60 = arith.constant 1.000000e+00 : f32
    %184 = vector.broadcast %cst_60 : f32 to vector<8x256xf32>
    %185 = arith.addf %184, %183 : vector<8x256xf32>
    %186 = arith.divf %184, %185 : vector<8x256xf32>
    %187 = vector.extract_strided_slice %180 {offsets = [0, 256], sizes = [8, 256], strides = [1, 1]} : vector<8x1024xf32> to vector<8x256xf32>
    %188 = arith.negf %187 : vector<8x256xf32>
    %189 = math.exp %188 : vector<8x256xf32>
    %cst_61 = arith.constant 1.000000e+00 : f32
    %190 = vector.broadcast %cst_61 : f32 to vector<8x256xf32>
    %191 = arith.addf %190, %189 : vector<8x256xf32>
    %192 = arith.divf %190, %191 : vector<8x256xf32>
    %193 = vector.extract_strided_slice %180 {offsets = [0, 512], sizes = [8, 256], strides = [1, 1]} : vector<8x1024xf32> to vector<8x256xf32>
    %194 = math.tanh %193 : vector<8x256xf32>
    %195 = vector.extract_strided_slice %180 {offsets = [0, 768], sizes = [8, 256], strides = [1, 1]} : vector<8x1024xf32> to vector<8x256xf32>
    %196 = arith.negf %195 : vector<8x256xf32>
    %197 = math.exp %196 : vector<8x256xf32>
    %cst_62 = arith.constant 1.000000e+00 : f32
    %198 = vector.broadcast %cst_62 : f32 to vector<8x256xf32>
    %199 = arith.addf %198, %197 : vector<8x256xf32>
    %200 = arith.divf %198, %199 : vector<8x256xf32>
    %201 = arith.mulf %192, %171 : vector<8x256xf32>
    %202 = arith.mulf %186, %194 : vector<8x256xf32>
    %203 = arith.addf %201, %202 : vector<8x256xf32>
    %204 = math.tanh %203 : vector<8x256xf32>
    %205 = arith.mulf %200, %204 : vector<8x256xf32>
    %c6_i32 = arith.constant 6 : i32
    %206 = arith.index_cast %c6_i32 : i32 to index
    %c0_63 = arith.constant 0 : index
    %c0_64 = arith.constant 0 : index
    %207 = vector.load %arg15[%206, %c0_63, %c0_64] : memref<8x8x1024xf32, #tpu.memory_space<vmem>>, vector<1x8x1024xf32>
    %208 = vector.shape_cast %207 : vector<1x8x1024xf32> to vector<8x1024xf32>
    %209 = arith.truncf %205 : vector<8x256xf32> to vector<8x256xbf16>
    %c0_65 = arith.constant 0 : index
    %c0_66 = arith.constant 0 : index
    %210 = vector.load %arg4[%c0_65, %c0_66] : memref<256x1024xbf16, #tpu.memory_space<vmem>>, vector<256x1024xbf16>
    %cst_67 = arith.constant dense<0.000000e+00> : vector<8x1024xf32>
    %211 = tpu.matmul %209, %210, %cst_67 {dimension_numbers = #tpu.dot_dimension_numbers<[1], [0], [0], [1], [0, 0, 1, 1], [], []>} : vector<8x256xbf16>, vector<256x1024xbf16>, vector<8x1024xf32> -> vector<8x1024xf32>
    %212 = arith.addf %208, %211 : vector<8x1024xf32>
    %213 = vector.extract_strided_slice %212 {offsets = [0, 0], sizes = [8, 256], strides = [1, 1]} : vector<8x1024xf32> to vector<8x256xf32>
    %214 = arith.negf %213 : vector<8x256xf32>
    %215 = math.exp %214 : vector<8x256xf32>
    %cst_68 = arith.constant 1.000000e+00 : f32
    %216 = vector.broadcast %cst_68 : f32 to vector<8x256xf32>
    %217 = arith.addf %216, %215 : vector<8x256xf32>
    %218 = arith.divf %216, %217 : vector<8x256xf32>
    %219 = vector.extract_strided_slice %212 {offsets = [0, 256], sizes = [8, 256], strides = [1, 1]} : vector<8x1024xf32> to vector<8x256xf32>
    %220 = arith.negf %219 : vector<8x256xf32>
    %221 = math.exp %220 : vector<8x256xf32>
    %cst_69 = arith.constant 1.000000e+00 : f32
    %222 = vector.broadcast %cst_69 : f32 to vector<8x256xf32>
    %223 = arith.addf %222, %221 : vector<8x256xf32>
    %224 = arith.divf %222, %223 : vector<8x256xf32>
    %225 = vector.extract_strided_slice %212 {offsets = [0, 512], sizes = [8, 256], strides = [1, 1]} : vector<8x1024xf32> to vector<8x256xf32>
    %226 = math.tanh %225 : vector<8x256xf32>
    %227 = vector.extract_strided_slice %212 {offsets = [0, 768], sizes = [8, 256], strides = [1, 1]} : vector<8x1024xf32> to vector<8x256xf32>
    %228 = arith.negf %227 : vector<8x256xf32>
    %229 = math.exp %228 : vector<8x256xf32>
    %cst_70 = arith.constant 1.000000e+00 : f32
    %230 = vector.broadcast %cst_70 : f32 to vector<8x256xf32>
    %231 = arith.addf %230, %229 : vector<8x256xf32>
    %232 = arith.divf %230, %231 : vector<8x256xf32>
    %233 = arith.mulf %224, %203 : vector<8x256xf32>
    %234 = arith.mulf %218, %226 : vector<8x256xf32>
    %235 = arith.addf %233, %234 : vector<8x256xf32>
    %236 = math.tanh %235 : vector<8x256xf32>
    %237 = arith.mulf %232, %236 : vector<8x256xf32>
    %c7_i32 = arith.constant 7 : i32
    %238 = arith.index_cast %c7_i32 : i32 to index
    %c0_71 = arith.constant 0 : index
    %c0_72 = arith.constant 0 : index
    %239 = vector.load %arg15[%238, %c0_71, %c0_72] : memref<8x8x1024xf32, #tpu.memory_space<vmem>>, vector<1x8x1024xf32>
    %240 = vector.shape_cast %239 : vector<1x8x1024xf32> to vector<8x1024xf32>
    %241 = arith.truncf %237 : vector<8x256xf32> to vector<8x256xbf16>
    %c0_73 = arith.constant 0 : index
    %c0_74 = arith.constant 0 : index
    %242 = vector.load %arg4[%c0_73, %c0_74] : memref<256x1024xbf16, #tpu.memory_space<vmem>>, vector<256x1024xbf16>
    %cst_75 = arith.constant dense<0.000000e+00> : vector<8x1024xf32>
    %243 = tpu.matmul %241, %242, %cst_75 {dimension_numbers = #tpu.dot_dimension_numbers<[1], [0], [0], [1], [0, 0, 1, 1], [], []>} : vector<8x256xbf16>, vector<256x1024xbf16>, vector<8x1024xf32> -> vector<8x1024xf32>
    %244 = arith.addf %240, %243 : vector<8x1024xf32>
    %245 = vector.extract_strided_slice %244 {offsets = [0, 0], sizes = [8, 256], strides = [1, 1]} : vector<8x1024xf32> to vector<8x256xf32>
    %246 = arith.negf %245 : vector<8x256xf32>
    %247 = math.exp %246 : vector<8x256xf32>
    %cst_76 = arith.constant 1.000000e+00 : f32
    %248 = vector.broadcast %cst_76 : f32 to vector<8x256xf32>
    %249 = arith.addf %248, %247 : vector<8x256xf32>
    %250 = arith.divf %248, %249 : vector<8x256xf32>
    %251 = vector.extract_strided_slice %244 {offsets = [0, 256], sizes = [8, 256], strides = [1, 1]} : vector<8x1024xf32> to vector<8x256xf32>
    %252 = arith.negf %251 : vector<8x256xf32>
    %253 = math.exp %252 : vector<8x256xf32>
    %cst_77 = arith.constant 1.000000e+00 : f32
    %254 = vector.broadcast %cst_77 : f32 to vector<8x256xf32>
    %255 = arith.addf %254, %253 : vector<8x256xf32>
    %256 = arith.divf %254, %255 : vector<8x256xf32>
    %257 = vector.extract_strided_slice %244 {offsets = [0, 512], sizes = [8, 256], strides = [1, 1]} : vector<8x1024xf32> to vector<8x256xf32>
    %258 = math.tanh %257 : vector<8x256xf32>
    %259 = vector.extract_strided_slice %244 {offsets = [0, 768], sizes = [8, 256], strides = [1, 1]} : vector<8x1024xf32> to vector<8x256xf32>
    %260 = arith.negf %259 : vector<8x256xf32>
    %261 = math.exp %260 : vector<8x256xf32>
    %cst_78 = arith.constant 1.000000e+00 : f32
    %262 = vector.broadcast %cst_78 : f32 to vector<8x256xf32>
    %263 = arith.addf %262, %261 : vector<8x256xf32>
    %264 = arith.divf %262, %263 : vector<8x256xf32>
    %265 = arith.mulf %256, %235 : vector<8x256xf32>
    %266 = arith.mulf %250, %258 : vector<8x256xf32>
    %267 = arith.addf %265, %266 : vector<8x256xf32>
    %268 = math.tanh %267 : vector<8x256xf32>
    %269 = arith.mulf %264, %268 : vector<8x256xf32>
    %c8_i32 = arith.constant 8 : i32
    %c0_79 = arith.constant 0 : index
    %c0_80 = arith.constant 0 : index
    %270 = vector.load %arg13[%c0_79, %c0_80] : memref<8x256xf32, #tpu.memory_space<vmem>>, vector<8x256xf32>
    tpu.vector_store %arg13[%c0_79, %c0_80], %269 {strides = array<i32>} : memref<8x256xf32, #tpu.memory_space<vmem>>, vector<8x256xf32>,
    %c0_81 = arith.constant 0 : index
    %c0_82 = arith.constant 0 : index
    %271 = vector.load %arg14[%c0_81, %c0_82] : memref<8x256xf32, #tpu.memory_space<vmem>>, vector<8x256xf32>
    tpu.vector_store %arg14[%c0_81, %c0_82], %267 {strides = array<i32>} : memref<8x256xf32, #tpu.memory_space<vmem>>, vector<8x256xf32>,
    %c1_i32_83 = arith.constant 1 : i32
    %272 = arith.cmpi eq, %arg1, %c1_i32_83 : i32
    %273 = arith.extui %272 : i1 to i32
    %c0_i32_84 = arith.constant 0 : i32
    %274 = arith.cmpi ne, %273, %c0_i32_84 : i32
    scf.if %274 {
      %275 = arith.truncf %269 : vector<8x256xf32> to vector<8x256xbf16>
      %c0_85 = arith.constant 0 : index
      %c0_86 = arith.constant 0 : index
      %276 = vector.load %arg6[%c0_85, %c0_86] : memref<256x256xbf16, #tpu.memory_space<vmem>>, vector<256x256xbf16>
      %cst_87 = arith.constant dense<0.000000e+00> : vector<8x256xf32>
      %277 = tpu.matmul %275, %276, %cst_87 {dimension_numbers = #tpu.dot_dimension_numbers<[1], [0], [0], [1], [0, 0, 1, 1], [], []>} : vector<8x256xbf16>, vector<256x256xbf16>, vector<8x256xf32> -> vector<8x256xf32>
      %c0_88 = arith.constant 0 : index
      %c0_89 = arith.constant 0 : index
      %278 = vector.load %arg7[%c0_88, %c0_89] : memref<1x256xf32, #tpu.memory_space<vmem>>, vector<1x256xf32>
      %279 = vector.broadcast %278 : vector<1x256xf32> to vector<8x256xf32>
      %280 = arith.addf %277, %279 : vector<8x256xf32>
      %cst_90 = arith.constant 0.000000e+00 : f32
      %281 = vector.broadcast %cst_90 : f32 to vector<8x256xf32>
      %282 = arith.maximumf %280, %281 : vector<8x256xf32>
      %283 = arith.truncf %282 : vector<8x256xf32> to vector<8x256xbf16>
      %c0_91 = arith.constant 0 : index
      %c0_92 = arith.constant 0 : index
      %284 = vector.load %arg8[%c0_91, %c0_92] : memref<256x128xbf16, #tpu.memory_space<vmem>>, vector<256x128xbf16>
      %cst_93 = arith.constant dense<0.000000e+00> : vector<8x128xf32>
      %285 = tpu.matmul %283, %284, %cst_93 {dimension_numbers = #tpu.dot_dimension_numbers<[1], [0], [0], [1], [0, 0, 1, 1], [], []>} : vector<8x256xbf16>, vector<256x128xbf16>, vector<8x128xf32> -> vector<8x128xf32>
      %c0_94 = arith.constant 0 : index
      %c0_95 = arith.constant 0 : index
      %286 = vector.load %arg9[%c0_94, %c0_95] : memref<1x128xf32, #tpu.memory_space<vmem>>, vector<1x128xf32>
      %287 = vector.broadcast %286 : vector<1x128xf32> to vector<8x128xf32>
      %288 = arith.addf %285, %287 : vector<8x128xf32>
      %cst_96 = arith.constant 0.000000e+00 : f32
      %289 = vector.broadcast %cst_96 : f32 to vector<8x128xf32>
      %290 = arith.maximumf %288, %289 : vector<8x128xf32>
      %c0_97 = arith.constant 0 : index
      %c0_98 = arith.constant 0 : index
      %291 = vector.load %arg10[%c0_97, %c0_98] : memref<128x1xf32, #tpu.memory_space<vmem>>, vector<128x1xf32>
      %cst_99 = arith.constant dense<0.000000e+00> : vector<8x1xf32>
      %292 = tpu.matmul %290, %291, %cst_99 {dimension_numbers = #tpu.dot_dimension_numbers<[1], [0], [0], [1], [0, 0, 1, 1], [], []>} : vector<8x128xf32>, vector<128x1xf32>, vector<8x1xf32> -> vector<8x1xf32>
      %c0_100 = arith.constant 0 : index
      %c0_101 = arith.constant 0 : index
      %293 = vector.load %arg11[%c0_100, %c0_101] : memref<1x1xf32, #tpu.memory_space<vmem>>, vector<1x1xf32>
      %294 = vector.broadcast %293 : vector<1x1xf32> to vector<8x1xf32>
      %295 = arith.addf %292, %294 : vector<8x1xf32>
      %c0_102 = arith.constant 0 : index
      %c0_103 = arith.constant 0 : index
      %296 = vector.load %arg12[%c0_102, %c0_103] : memref<8x1xf32, #tpu.memory_space<vmem>>, vector<8x1xf32>
      tpu.vector_store %arg12[%c0_102, %c0_103], %295 {strides = array<i32>} : memref<8x1xf32, #tpu.memory_space<vmem>>, vector<8x1xf32>,
    } else {
    }
    return
  }
  func.func @transform_0(%arg0: i32, %arg1: i32) -> (i32, i32, i32) {
    %c0_i32 = arith.constant 0 : i32
    %c0_i32_0 = arith.constant 0 : i32
    return %arg1, %arg0, %c0_i32 : i32, i32, i32
  }
  func.func @transform_1(%arg0: i32, %arg1: i32) -> (i32, i32) {
    %c0_i32 = arith.constant 0 : i32
    %c0_i32_0 = arith.constant 0 : i32
    %c0_i32_1 = arith.constant 0 : i32
    return %c0_i32, %c0_i32_0 : i32, i32
  }
  func.func @transform_2(%arg0: i32, %arg1: i32) -> (i32, i32) {
    %c0_i32 = arith.constant 0 : i32
    %c0_i32_0 = arith.constant 0 : i32
    %c0_i32_1 = arith.constant 0 : i32
    return %c0_i32, %c0_i32_0 : i32, i32
  }
  func.func @transform_3(%arg0: i32, %arg1: i32) -> (i32, i32) {
    %c0_i32 = arith.constant 0 : i32
    %c0_i32_0 = arith.constant 0 : i32
    %c0_i32_1 = arith.constant 0 : i32
    return %c0_i32, %c0_i32_0 : i32, i32
  }
  func.func @transform_4(%arg0: i32, %arg1: i32) -> (i32, i32) {
    %c0_i32 = arith.constant 0 : i32
    %c0_i32_0 = arith.constant 0 : i32
    %c0_i32_1 = arith.constant 0 : i32
    return %c0_i32, %c0_i32_0 : i32, i32
  }
  func.func @transform_5(%arg0: i32, %arg1: i32) -> (i32, i32) {
    %c0_i32 = arith.constant 0 : i32
    %c0_i32_0 = arith.constant 0 : i32
    %c0_i32_1 = arith.constant 0 : i32
    return %c0_i32, %c0_i32_0 : i32, i32
  }
  func.func @transform_6(%arg0: i32, %arg1: i32) -> (i32, i32) {
    %c0_i32 = arith.constant 0 : i32
    %c0_i32_0 = arith.constant 0 : i32
    %c0_i32_1 = arith.constant 0 : i32
    return %c0_i32, %c0_i32_0 : i32, i32
  }
  func.func @transform_7(%arg0: i32, %arg1: i32) -> (i32, i32) {
    %c0_i32 = arith.constant 0 : i32
    %c0_i32_0 = arith.constant 0 : i32
    %c0_i32_1 = arith.constant 0 : i32
    return %c0_i32, %c0_i32_0 : i32, i32
  }
  func.func @transform_8(%arg0: i32, %arg1: i32) -> (i32, i32) {
    %c0_i32 = arith.constant 0 : i32
    %c0_i32_0 = arith.constant 0 : i32
    %c0_i32_1 = arith.constant 0 : i32
    return %c0_i32, %c0_i32_0 : i32, i32
  }
  func.func @transform_9(%arg0: i32, %arg1: i32) -> (i32, i32) {
    %c0_i32 = arith.constant 0 : i32
    %c0_i32_0 = arith.constant 0 : i32
    %c0_i32_1 = arith.constant 0 : i32
    return %c0_i32, %c0_i32_0 : i32, i32
  }
  func.func @transform_10(%arg0: i32, %arg1: i32) -> (i32, i32) {
    %c0_i32 = arith.constant 0 : i32
    %c0_i32_0 = arith.constant 0 : i32
    return %arg0, %c0_i32 : i32, i32
  }
}

</mosaic_0001>

<llo_original>
// kernel: lstm_net_forward.1
$region0: #{lstm_net_forward.1}
  #allocation0 [shape = 'u32[]', space=smem, size = 0x4, offset = 0x4, fixed_abs, tag = 'smem constant byte address 0x4 - core index']
  #allocation1 [shape = 'u32[144,128]{1,0:T(1,128)}', space=vmem, size = 0x12000, scoped, tag = 'internal scratch']
  #allocation2 [shape = 'f32[8,256]{1,0:T(8,128)}', space=vmem, size = 0x2000, scoped, tag = 'scratch operand']
  #allocation3 [shape = 'f32[8,256]{1,0:T(8,128)}', space=vmem, size = 0x2000, scoped, tag = 'scratch operand']
  #allocation4 [shape = 'f32[8,8,1024]{2,1,0:T(8,128)}', space=vmem, size = 0x40000, scoped, tag = 'scratch operand']
  #allocation5 [shape = 'f32[1,1]{1,0:T(1,128)S(1)}', space=vmem, size = 0x200, scoped, tag = 'scoped memory for lstm_net_forward.1']
  %s0 = inlined_call_operand.vmem [shape: bf16[16,8,384], index: 0, kind: input, shape index: {}]
  %s1 = inlined_call_operand.hbm [shape: bf16[384,1024], index: 1, kind: input, shape index: {}]
  %s2 = inlined_call_operand.vmem [shape: bf16[256,1024], index: 2, kind: input, shape index: {}]
  %s3 = inlined_call_operand.vmem [shape: f32[1,1024], index: 3, kind: input, shape index: {}]
  %s4 = inlined_call_operand.hbm [shape: bf16[256,256], index: 4, kind: input, shape index: {}]
  %s5 = inlined_call_operand.vmem [shape: f32[1,256], index: 5, kind: input, shape index: {}]
  %s6 = inlined_call_operand.hbm [shape: bf16[256,128], index: 6, kind: input, shape index: {}]
  %s7 = inlined_call_operand.vmem [shape: f32[1,128], index: 7, kind: input, shape index: {}]
  %s8 = inlined_call_operand.vmem [shape: f32[128,1], index: 8, kind: input, shape index: {}]
  %s9 = inlined_call_operand.<no memory space> [shape: f32[1,1], index: 9, kind: input, shape index: {}]
  %s10 = inlined_call_operand.vmem [shape: f32[8,1], index: 10, kind: output, shape index: {}]
  %s11 = sld [smem:[#allocation0]]
  $region93: #{lstm_net_forward.1} parent=0
    _
  %s13 = ssub.s32 1, %s11
  %s14 = scalar_select 0, %s13, %s11
  %v15 = vstv %s9
  %16 = vst [vmem:[#allocation5] sm:$0x1] %v15
  $region1: #{lstm_net_forward.1} parent=0
    #allocation6 [shape = 'u8[786432]{0}', space=vmem, size = 0xc0000, scoped, tag = 'input window, operand 1, single buffered']
    #allocation7 [shape = 's32[2]{0}', space=sflag, size = 0x8, scoped, tag = 'scoped memory for lstm_net_forward.1']
    #allocation8 [shape = 'u8[131072]{0}', space=vmem, size = 0x20000, scoped, tag = 'input window, operand 4, single buffered']
    #allocation9 [shape = 's32[1]{0}', space=sflag, size = 0x4, scoped, tag = 'scoped memory for lstm_net_forward.1']
    #allocation10 [shape = 'u8[65536]{0}', space=vmem, size = 0x10000, scoped, tag = 'input window, operand 6, single buffered']
    %17 = vsyncpa [#allocation7], 0
    %18 = vsyncpa [#allocation9], 0
    loop: start=0, step=1, limit=4
    $region2: #{lstm_net_forward.1} parent=1 // loop_pre_header
      _
    $region3: #{lstm_net_forward.1} parent=1 // loop_header
      %s20 = sphi 0, %s24
      %p21 = scmp.ge.s32.totalorder %s20, 4
      %s27 = sphi 0, %s39
      %s28 = sphi 0, %s35
      %s29 = sphi 0, %s27
      %s30 = sphi 0, %s28
      %s31 = sphi 0, %s29
      %s32 = sphi 0, %s30
      %s44 = sphi 0, %s46
      %s47 = sphi 0, %s44
      %s48 = sphi 0, %s47
      %s64 = sphi 0, %s48
      %s68 = sphi 0, %s68
      %s70 = sphi 0, %s68
      %s71 = sphi 0, %s70
      %s85 = sphi 0, %s71
      %s89 = sphi 0, %s89
      %s91 = sphi 0, %s89
      %s92 = sphi 0, %s91
      %s106 = sphi 0, %s92
      %s110 = sphi 0, %s110
      %s112 = sphi 0, %s110
      %s113 = sphi 0, %s112
      %s127 = sphi 0, %s113
      %s131 = sphi 0, %s131
      %s133 = sphi 0, %s131
      %s134 = sphi 0, %s133
      %s148 = sphi 0, %s134
      %s152 = sphi 0, %s152
      %s154 = sphi 0, %s152
      %s155 = sphi 0, %s154
      %s169 = sphi 0, %s155
      %s173 = sphi 0, %s173
      %s175 = sphi 0, %s173
      %s176 = sphi 0, %s175
      %s190 = sphi 0, %s176
      %s194 = sphi 0, %s194
      %s196 = sphi 0, %s194
      %s197 = sphi 0, %s196
      %s211 = sphi 0, %s197
      %s215 = sphi 0, %s215
      %s217 = sphi 0, %s215
      %s218 = sphi 0, %s217
      %s232 = sphi 0, %s218
      %s236 = sphi 0, %s236
      %s238 = sphi 0, %s236
      %s239 = sphi 0, %s238
      %s253 = sphi 0, %s239
      %s259 = sphi 0, %s261
      %s262 = sphi 0, %s259
      %s263 = sphi 0, %s262
      %s279 = sphi 0, %s263
    $region4: #{lstm_net_forward.1} parent=1 // loop_header_branch
      %23 = sbr.rel (%p21) target = $region8
    $region5: #{lstm_net_forward.1} parent=1 // loop_body
      %s25 = ssub.s32 %s20, 1
      %s26 = ssub.s32 %s20, 2
      %s33 = sadd.s32 1, %s28
      %p34 = scmp.ge.s32.totalorder %s33, 2
      %s35 = scalar_select %p34, 0, %s33
      %s36 = sadd.s32 1, %s27
      %s37 = scalar_select %p34, %s36, %s27
      %p38 = scmp.ge.s32.totalorder %s37, 1
      %s39 = scalar_select %p38, 0, %s37
      %s40 = ssub.s32 %s28, %s35
      %s41 = ssub.s32 %s27, %s39
      %s42 = sor.u32 %s40, %s41
      %p43 = scmp.eq.s32.totalorder %s42, 0
      %s45 = sadd.s32 %s44, 1
      %s46 = scalar_select %p43, %s44, %s45
      %p49 = pneg %p43
      %p50 = scmp.eq.s32.totalorder %s20, 1
      %p51 = por %p49, %p50
      %p52 = scmp.ne.s32.totalorder %s44, %s47
      %p53 = scmp.eq.s32.totalorder %s20, 0
      %p54 = por %p52, %p53
      %p55 = scmp.ne.s32.totalorder %s44, %s47
      %p56 = scmp.eq.s32.totalorder %s25, 1
      %p57 = por %p55, %p56
      %p58 = scmp.ne.s32.totalorder %s47, %s48
      %p59 = scmp.eq.s32.totalorder %s25, 0
      %p60 = por %p58, %p59
      %p61 = scmp.ne.s32.totalorder %s47, %s48
      %p62 = scmp.eq.s32.totalorder %s26, 1
      %p63 = por %p61, %p62
      %p65 = scmp.ne.s32.totalorder %s48, %s64
      %p66 = scmp.eq.s32.totalorder %s26, 0
      %p67 = por %p65, %p66
      %s69 = sadd.s32 %s68, 1
      %p72 = scmp.eq.s32.totalorder %s20, 1
      %p73 = scmp.ne.s32.totalorder %s68, %s70
      %p74 = scmp.eq.s32.totalorder %s20, 0
      %p75 = por %p73, %p74
      %p76 = scmp.ne.s32.totalorder %s68, %s70
      %p77 = scmp.eq.s32.totalorder %s25, 1
      %p78 = por %p76, %p77
      %p79 = scmp.ne.s32.totalorder %s70, %s71
      %p80 = scmp.eq.s32.totalorder %s25, 0
      %p81 = por %p79, %p80
      %p82 = scmp.ne.s32.totalorder %s70, %s71
      %p83 = scmp.eq.s32.totalorder %s26, 1
      %p84 = por %p82, %p83
      %p86 = scmp.ne.s32.totalorder %s71, %s85
      %p87 = scmp.eq.s32.totalorder %s26, 0
      %p88 = por %p86, %p87
      %s90 = sadd.s32 %s89, 1
      %p93 = scmp.eq.s32.totalorder %s20, 1
      %p94 = scmp.ne.s32.totalorder %s89, %s91
      %p95 = scmp.eq.s32.totalorder %s20, 0
      %p96 = por %p94, %p95
      %p97 = scmp.ne.s32.totalorder %s89, %s91
      %p98 = scmp.eq.s32.totalorder %s25, 1
      %p99 = por %p97, %p98
      %p100 = scmp.ne.s32.totalorder %s91, %s92
      %p101 = scmp.eq.s32.totalorder %s25, 0
      %p102 = por %p100, %p101
      %p103 = scmp.ne.s32.totalorder %s91, %s92
      %p104 = scmp.eq.s32.totalorder %s26, 1
      %p105 = por %p103, %p104
      %p107 = scmp.ne.s32.totalorder %s92, %s106
      %p108 = scmp.eq.s32.totalorder %s26, 0
      %p109 = por %p107, %p108
      %s111 = sadd.s32 %s110, 1
      %p114 = scmp.eq.s32.totalorder %s20, 1
      %p115 = scmp.ne.s32.totalorder %s110, %s112
      %p116 = scmp.eq.s32.totalorder %s20, 0
      %p117 = por %p115, %p116
      %p118 = scmp.ne.s32.totalorder %s110, %s112
      %p119 = scmp.eq.s32.totalorder %s25, 1
      %p120 = por %p118, %p119
      %p121 = scmp.ne.s32.totalorder %s112, %s113
      %p122 = scmp.eq.s32.totalorder %s25, 0
      %p123 = por %p121, %p122
      %p124 = scmp.ne.s32.totalorder %s112, %s113
      %p125 = scmp.eq.s32.totalorder %s26, 1
      %p126 = por %p124, %p125
      %p128 = scmp.ne.s32.totalorder %s113, %s127
      %p129 = scmp.eq.s32.totalorder %s26, 0
      %p130 = por %p128, %p129
      %s132 = sadd.s32 %s131, 1
      %p135 = scmp.eq.s32.totalorder %s20, 1
      %p136 = scmp.ne.s32.totalorder %s131, %s133
      %p137 = scmp.eq.s32.totalorder %s20, 0
      %p138 = por %p136, %p137
      %p139 = scmp.ne.s32.totalorder %s131, %s133
      %p140 = scmp.eq.s32.totalorder %s25, 1
      %p141 = por %p139, %p140
      %p142 = scmp.ne.s32.totalorder %s133, %s134
      %p143 = scmp.eq.s32.totalorder %s25, 0
      %p144 = por %p142, %p143
      %p145 = scmp.ne.s32.totalorder %s133, %s134
      %p146 = scmp.eq.s32.totalorder %s26, 1
      %p147 = por %p145, %p146
      %p149 = scmp.ne.s32.totalorder %s134, %s148
      %p150 = scmp.eq.s32.totalorder %s26, 0
      %p151 = por %p149, %p150
      %s153 = sadd.s32 %s152, 1
      %p156 = scmp.eq.s32.totalorder %s20, 1
      %p157 = scmp.ne.s32.totalorder %s152, %s154
      %p158 = scmp.eq.s32.totalorder %s20, 0
      %p159 = por %p157, %p158
      %p160 = scmp.ne.s32.totalorder %s152, %s154
      %p161 = scmp.eq.s32.totalorder %s25, 1
      %p162 = por %p160, %p161
      %p163 = scmp.ne.s32.totalorder %s154, %s155
      %p164 = scmp.eq.s32.totalorder %s25, 0
      %p165 = por %p163, %p164
      %p166 = scmp.ne.s32.totalorder %s154, %s155
      %p167 = scmp.eq.s32.totalorder %s26, 1
      %p168 = por %p166, %p167
      %p170 = scmp.ne.s32.totalorder %s155, %s169
      %p171 = scmp.eq.s32.totalorder %s26, 0
      %p172 = por %p170, %p171
      %s174 = sadd.s32 %s173, 1
      %p177 = scmp.eq.s32.totalorder %s20, 1
      %p178 = scmp.ne.s32.totalorder %s173, %s175
      %p179 = scmp.eq.s32.totalorder %s20, 0
      %p180 = por %p178, %p179
      %p181 = scmp.ne.s32.totalorder %s173, %s175
      %p182 = scmp.eq.s32.totalorder %s25, 1
      %p183 = por %p181, %p182
      %p184 = scmp.ne.s32.totalorder %s175, %s176
      %p185 = scmp.eq.s32.totalorder %s25, 0
      %p186 = por %p184, %p185
      %p187 = scmp.ne.s32.totalorder %s175, %s176
      %p188 = scmp.eq.s32.totalorder %s26, 1
      %p189 = por %p187, %p188
      %p191 = scmp.ne.s32.totalorder %s176, %s190
      %p192 = scmp.eq.s32.totalorder %s26, 0
      %p193 = por %p191, %p192
      %s195 = sadd.s32 %s194, 1
      %p198 = scmp.eq.s32.totalorder %s20, 1
      %p199 = scmp.ne.s32.totalorder %s194, %s196
      %p200 = scmp.eq.s32.totalorder %s20, 0
      %p201 = por %p199, %p200
      %p202 = scmp.ne.s32.totalorder %s194, %s196
      %p203 = scmp.eq.s32.totalorder %s25, 1
      %p204 = por %p202, %p203
      %p205 = scmp.ne.s32.totalorder %s196, %s197
      %p206 = scmp.eq.s32.totalorder %s25, 0
      %p207 = por %p205, %p206
      %p208 = scmp.ne.s32.totalorder %s196, %s197
      %p209 = scmp.eq.s32.totalorder %s26, 1
      %p210 = por %p208, %p209
      %p212 = scmp.ne.s32.totalorder %s197, %s211
      %p213 = scmp.eq.s32.totalorder %s26, 0
      %p214 = por %p212, %p213
      %s216 = sadd.s32 %s215, 1
      %p219 = scmp.eq.s32.totalorder %s20, 1
      %p220 = scmp.ne.s32.totalorder %s215, %s217
      %p221 = scmp.eq.s32.totalorder %s20, 0
      %p222 = por %p220, %p221
      %p223 = scmp.ne.s32.totalorder %s215, %s217
      %p224 = scmp.eq.s32.totalorder %s25, 1
      %p225 = por %p223, %p224
      %p226 = scmp.ne.s32.totalorder %s217, %s218
      %p227 = scmp.eq.s32.totalorder %s25, 0
      %p228 = por %p226, %p227
      %p229 = scmp.ne.s32.totalorder %s217, %s218
      %p230 = scmp.eq.s32.totalorder %s26, 1
      %p231 = por %p229, %p230
      %p233 = scmp.ne.s32.totalorder %s218, %s232
      %p234 = scmp.eq.s32.totalorder %s26, 0
      %p235 = por %p233, %p234
      %s237 = sadd.s32 %s236, 1
      %p240 = scmp.eq.s32.totalorder %s20, 1
      %p241 = scmp.ne.s32.totalorder %s236, %s238
      %p242 = scmp.eq.s32.totalorder %s20, 0
      %p243 = por %p241, %p242
      %p244 = scmp.ne.s32.totalorder %s236, %s238
      %p245 = scmp.eq.s32.totalorder %s25, 1
      %p246 = por %p244, %p245
      %p247 = scmp.ne.s32.totalorder %s238, %s239
      %p248 = scmp.eq.s32.totalorder %s25, 0
      %p249 = por %p247, %p248
      %p250 = scmp.ne.s32.totalorder %s238, %s239
      %p251 = scmp.eq.s32.totalorder %s26, 1
      %p252 = por %p250, %p251
      %p254 = scmp.ne.s32.totalorder %s239, %s253
      %p255 = scmp.eq.s32.totalorder %s26, 0
      %p256 = por %p254, %p255
      %s257 = ssub.s32 %s27, %s39
      %p258 = scmp.eq.s32.totalorder %s257, 0
      %s260 = sadd.s32 %s259, 1
      %s261 = scalar_select %p258, %s259, %s260
      %p264 = pneg %p258
      %p265 = scmp.eq.s32.totalorder %s20, 1
      %p266 = por %p264, %p265
      %p267 = scmp.ne.s32.totalorder %s259, %s262
      %p268 = scmp.eq.s32.totalorder %s20, 0
      %p269 = por %p267, %p268
      %p270 = scmp.ne.s32.totalorder %s259, %s262
      %p271 = scmp.eq.s32.totalorder %s25, 1
      %p272 = por %p270, %p271
      %p273 = scmp.ne.s32.totalorder %s262, %s263
      %p274 = scmp.eq.s32.totalorder %s25, 0
      %p275 = por %p273, %p274
      %p276 = scmp.ne.s32.totalorder %s262, %s263
      %p277 = scmp.eq.s32.totalorder %s26, 1
      %p278 = por %p276, %p277
      %p280 = scmp.ne.s32.totalorder %s263, %s279
      %p281 = scmp.eq.s32.totalorder %s26, 0
      %p282 = por %p280, %p281
      %p283 = scmp.le.s32.totalorder 1, %s20
      %p284 = scmp.lt.s32.totalorder %s20, 3
      %p285 = pnand %p283, %p284
      %p286 = pneg %p285
      // Predicated region
      $region9: #{lstm_net_forward.1} parent=5 // pred_check
        _
      $region10: #{lstm_net_forward.1} parent=5 // pred_check_branch
        %288 = sbr.rel (%p285) target = $region12
      $region11: #{lstm_net_forward.1} parent=5 // pred_region
        %s289 = ssub.s32 %s20, 1
        // Predicated region
        $region13: #{lstm_net_forward.1} parent=11 // pred_check
          %p290 = pneg %p81
        $region14: #{lstm_net_forward.1} parent=11 // pred_check_branch
          %292 = sbr.rel (%p290) target = $region16
        $region15: #{lstm_net_forward.1} parent=11 // pred_region
          %s294 = ssub.s32 24576, 24576
          %295 = vsyncadd [#allocation7], %s294
          %s296 = sshll.u32 [#allocation6], 4
          %s297 = int_to_ptr.vmem [resolvable:$true] %s296
          %302 = dma.hbm_to_vmem [thread:$0]  %s1, 24576, %s297, [#allocation7], 512, 512, 32
        $region16: #{lstm_net_forward.1} parent=11 // pred_fallthru
          _
        // Predicated region
        $region17: #{lstm_net_forward.1} parent=11 // pred_check
          %p303 = pneg %p102
        $region18: #{lstm_net_forward.1} parent=11 // pred_check_branch
          %305 = sbr.rel (%p303) target = $region20
        $region19: #{lstm_net_forward.1} parent=11 // pred_region
          _
        $region20: #{lstm_net_forward.1} parent=11 // pred_fallthru
          _
        // Predicated region
        $region21: #{lstm_net_forward.1} parent=11 // pred_check
          %p306 = pneg %p123
        $region22: #{lstm_net_forward.1} parent=11 // pred_check_branch
          %308 = sbr.rel (%p306) target = $region24
        $region23: #{lstm_net_forward.1} parent=11 // pred_region
          _
        $region24: #{lstm_net_forward.1} parent=11 // pred_fallthru
          _
        // Predicated region
        $region25: #{lstm_net_forward.1} parent=11 // pred_check
          %p309 = pneg %p144
        $region26: #{lstm_net_forward.1} parent=11 // pred_check_branch
          %311 = sbr.rel (%p309) target = $region28
        $region27: #{lstm_net_forward.1} parent=11 // pred_region
          %s313 = ssub.s32 4096, 4096
          %314 = vsyncadd [#allocation9], %s313
          %s315 = sshll.u32 [#allocation8], 4
          %s316 = int_to_ptr.vmem [resolvable:$true] %s315
          %321 = dma.hbm_to_vmem [thread:$0]  %s4, 4096, %s316, [#allocation9], 128, 128, 8
        $region28: #{lstm_net_forward.1} parent=11 // pred_fallthru
          _
        // Predicated region
        $region29: #{lstm_net_forward.1} parent=11 // pred_check
          %p322 = pneg %p165
        $region30: #{lstm_net_forward.1} parent=11 // pred_check_branch
          %324 = sbr.rel (%p322) target = $region32
        $region31: #{lstm_net_forward.1} parent=11 // pred_region
          _
        $region32: #{lstm_net_forward.1} parent=11 // pred_fallthru
          _
        // Predicated region
        $region33: #{lstm_net_forward.1} parent=11 // pred_check
          %p325 = pneg %p186
        $region34: #{lstm_net_forward.1} parent=11 // pred_check_branch
          %327 = sbr.rel (%p325) target = $region36
        $region35: #{lstm_net_forward.1} parent=11 // pred_region
          %s329 = ssub.s32 2048, 2048
          %330 = vsyncadd [#allocation9], %s329
          %s331 = sshll.u32 [#allocation10], 4
          %s332 = int_to_ptr.vmem [resolvable:$true] %s331
          %337 = dma.hbm_to_vmem [thread:$0]  %s6, 2048, %s332, [#allocation9], 64, 64, 4
        $region36: #{lstm_net_forward.1} parent=11 // pred_fallthru
          _
        // Predicated region
        $region37: #{lstm_net_forward.1} parent=11 // pred_check
          %p338 = pneg %p207
        $region38: #{lstm_net_forward.1} parent=11 // pred_check_branch
          %340 = sbr.rel (%p338) target = $region40
        $region39: #{lstm_net_forward.1} parent=11 // pred_region
          _
        $region40: #{lstm_net_forward.1} parent=11 // pred_fallthru
          _
        // Predicated region
        $region41: #{lstm_net_forward.1} parent=11 // pred_check
          %p341 = pneg %p228
        $region42: #{lstm_net_forward.1} parent=11 // pred_check_branch
          %343 = sbr.rel (%p341) target = $region44
        $region43: #{lstm_net_forward.1} parent=11 // pred_region
          _
        $region44: #{lstm_net_forward.1} parent=11 // pred_fallthru
          _
        // Predicated region
        $region45: #{lstm_net_forward.1} parent=11 // pred_check
          %p344 = pneg %p249
        $region46: #{lstm_net_forward.1} parent=11 // pred_check_branch
          %346 = sbr.rel (%p344) target = $region48
        $region47: #{lstm_net_forward.1} parent=11 // pred_region
          _
        $region48: #{lstm_net_forward.1} parent=11 // pred_fallthru
          _
      $region12: #{lstm_net_forward.1} parent=5 // pred_fallthru
        _
      %p347 = scmp.lt.s32.totalorder %s20, 2
      // Predicated region
      $region49: #{lstm_net_forward.1} parent=5 // pred_check
        %p348 = pneg %p347
      $region50: #{lstm_net_forward.1} parent=5 // pred_check_branch
        %350 = sbr.rel (%p348) target = $region52
      $region51: #{lstm_net_forward.1} parent=5 // pred_region
        // Predicated region
        $region53: #{lstm_net_forward.1} parent=51 // pred_check
          %p351 = pneg %p54
        $region54: #{lstm_net_forward.1} parent=51 // pred_check_branch
          %353 = sbr.rel (%p351) target = $region56
        $region55: #{lstm_net_forward.1} parent=51 // pred_region
          %s354 = smul.u32 8, %s28
          %p355 = scmp.lt.s32.totalorder %s354, 15
          %s356 = scalar_select %p355, %s354, 15
          %p357 = scmp.lt.s32.totalorder %s27, 0
          %s358 = scalar_select %p357, %s27, 0
          %s359 = smul.addr %s358, 3
          %s360 = smul.addr %s356, 3
          %s361 = sadd.s32 %s359, %s360
          %s362 = smul.addr %s361, 4
          %s363 = scalar_lea.vmem %s0, %s362
          %s364 = smul.u32 8, %s28
        $region56: #{lstm_net_forward.1} parent=51 // pred_fallthru
          _
      $region52: #{lstm_net_forward.1} parent=5 // pred_fallthru
        _
      %p365 = scmp.le.s32.totalorder 1, %s20
      %p366 = scmp.lt.s32.totalorder %s20, 3
      %p367 = pnand %p365, %p366
      %p368 = pneg %p367
      // Predicated region
      $region57: #{lstm_net_forward.1} parent=5 // pred_check
        _
      $region58: #{lstm_net_forward.1} parent=5 // pred_check_branch
        %370 = sbr.rel (%p367) target = $region60
      $region59: #{lstm_net_forward.1} parent=5 // pred_region
        %s371 = ssub.s32 %s20, 1
        // Predicated region
        $region61: #{lstm_net_forward.1} parent=59 // pred_check
          %p372 = pneg %p81
        $region62: #{lstm_net_forward.1} parent=59 // pred_check_branch
          %374 = sbr.rel (%p372) target = $region64
        $region63: #{lstm_net_forward.1} parent=59 // pred_region
          %375 = dma.done [#allocation7], 24576
        $region64: #{lstm_net_forward.1} parent=59 // pred_fallthru
          _
        // Predicated region
        $region65: #{lstm_net_forward.1} parent=59 // pred_check
          %p376 = pneg %p144
        $region66: #{lstm_net_forward.1} parent=59 // pred_check_branch
          %378 = sbr.rel (%p376) target = $region68
        $region67: #{lstm_net_forward.1} parent=59 // pred_region
          %379 = dma.done [#allocation9], 4096
        $region68: #{lstm_net_forward.1} parent=59 // pred_fallthru
          _
        // Predicated region
        $region69: #{lstm_net_forward.1} parent=59 // pred_check
          %p380 = pneg %p186
        $region70: #{lstm_net_forward.1} parent=59 // pred_check_branch
          %382 = sbr.rel (%p380) target = $region72
        $region71: #{lstm_net_forward.1} parent=59 // pred_region
          %383 = dma.done [#allocation9], 2048
        $region72: #{lstm_net_forward.1} parent=59 // pred_fallthru
          _
        %s384 = smul.u32 8, %s30
        %p385 = scmp.lt.s32.totalorder %s384, 15
        %s386 = scalar_select %p385, %s384, 15
        %p387 = scmp.lt.s32.totalorder %s29, 0
        %s388 = scalar_select %p387, %s29, 0
        %s389 = smul.addr %s388, 3
        %s390 = smul.addr %s386, 3
        %s391 = sadd.s32 %s389, %s390
        %s392 = smul.addr %s391, 4
        %s393 = scalar_lea.vmem %s0, %s392
        %p394 = pneg %p60
        %p395 = pneg %p57
        %p396 = pneg %p81
        %p397 = pneg %p78
        %p398 = pneg %p102
        %p399 = pneg %p99
        %p400 = pneg %p123
        %p401 = pneg %p120
        %p402 = pneg %p144
        %p403 = pneg %p141
        %p404 = pneg %p165
        %p405 = pneg %p162
        %p406 = pneg %p186
        %p407 = pneg %p183
        %p408 = pneg %p207
        %p409 = pneg %p204
        %p410 = pneg %p228
        %p411 = pneg %p225
        %p412 = pneg %p249
        %p413 = pneg %p246
        %p414 = pneg %p275
        %p415 = pneg %p272
        %p416 = scmp.lt.s32.totalorder %s29, 0
        %s417 = scalar_select %p416, %s29, 0
        %s418 = smul.addr %s417, 8
        %s419 = scalar_lea.vmem %s10, %s418
        %s420 = smul.u32 8, %s30
        %p421 = scmp.lt.s32.totalorder %s420, 15
        %s422 = scalar_select %p421, %s420, 15
        %p423 = scmp.lt.s32.totalorder %s29, 0
        %s424 = scalar_select %p423, %s29, 0
        %s425 = smul.addr %s424, 3
        %s426 = smul.addr %s422, 3
        %s427 = sadd.s32 %s425, %s426
        %s428 = smul.addr %s427, 4
        %s429 = scalar_lea.vmem %s0, %s428
        %s430 = smul.u32 8, %s30
        %p431 = scmp.lt.s32.totalorder %s29, 0
        %s432 = scalar_select %p431, %s29, 0
        %s433 = smul.addr %s432, 8
        %s434 = scalar_lea.vmem %s10, %s433
        %p436 = scmp.eq.s32.totalorder %s30, 0
        // Predicated region
        $region73: #{lstm_net_forward.1} parent=59 // pred_check
          %p437 = pneg %p436
        $region74: #{lstm_net_forward.1} parent=59 // pred_check_branch
          %439 = sbr.rel (%p437) target = $region76
        $region75: #{lstm_net_forward.1} parent=59 // pred_region
          %440 = vst [vmem:[#allocation2] sm:$0xff] 0.0
          %441 = vst [vmem:[#allocation2 + $0x8] sm:$0xff] 0.0
          %442 = vst [vmem:[#allocation3] sm:$0xff] 0.0
          %443 = vst [vmem:[#allocation3 + $0x8] sm:$0xff] 0.0
        $region76: #{lstm_net_forward.1} parent=59 // pred_fallthru
          _
        %v444 = vld [vmem:[%s429] sm:$0xff]
        %v445 = vld [vmem:[%s429 + $0x8] sm:$0xf]
        %v446 = vld [vmem:[%s429 + $0xc] sm:$0xff]
        %v447 = vld [vmem:[%s429 + $0x14] sm:$0xf]
        %v448 = vld [vmem:[%s429 + $0x18] sm:$0xff]
        %v449 = vld [vmem:[%s429 + $0x20] sm:$0xf]
        %v450 = vld [vmem:[%s429 + $0x24] sm:$0xff]
        %v451 = vld [vmem:[%s429 + $0x2c] sm:$0xf]
        %v452 = vld [vmem:[%s429 + $0x30] sm:$0xff]
        %v453 = vld [vmem:[%s429 + $0x38] sm:$0xf]
        %v454 = vld [vmem:[%s429 + $0x3c] sm:$0xff]
        %v455 = vld [vmem:[%s429 + $0x44] sm:$0xf]
        %v456 = vld [vmem:[%s429 + $0x48] sm:$0xff]
        %v457 = vld [vmem:[%s429 + $0x50] sm:$0xf]
        %v458 = vld [vmem:[%s429 + $0x54] sm:$0xff]
        %v459 = vld [vmem:[%s429 + $0x5c] sm:$0xf]
        %v460 = vld [vmem:[#allocation6] sm:$0xff]
        %v461 = vld [vmem:[#allocation6 + $0x8] sm:$0xff]
        %v462 = vld [vmem:[#allocation6 + $0x10] sm:$0xff]
        %v463 = vld [vmem:[#allocation6 + $0x18] sm:$0xff]
        %v464 = vld [vmem:[#allocation6 + $0x20] sm:$0xff]
        %v465 = vld [vmem:[#allocation6 + $0x28] sm:$0xff]
        %v466 = vld [vmem:[#allocation6 + $0x30] sm:$0xff]
        %v467 = vld [vmem:[#allocation6 + $0x38] sm:$0xff]
        %v468 = vld [vmem:[#allocation6 + $0x40] sm:$0xff]
        %v469 = vld [vmem:[#allocation6 + $0x48] sm:$0xff]
        %v470 = vld [vmem:[#allocation6 + $0x50] sm:$0xff]
        %v471 = vld [vmem:[#allocation6 + $0x58] sm:$0xff]
        %v472 = vld [vmem:[#allocation6 + $0x60] sm:$0xff]
        %v473 = vld [vmem:[#allocation6 + $0x68] sm:$0xff]
        %v474 = vld [vmem:[#allocation6 + $0x70] sm:$0xff]
        %v475 = vld [vmem:[#allocation6 + $0x78] sm:$0xff]
        %v476 = vld [vmem:[#allocation6 + $0x80] sm:$0xff]
        %v477 = vld [vmem:[#allocation6 + $0x88] sm:$0xff]
        %v478 = vld [vmem:[#allocation6 + $0x90] sm:$0xff]
        %v479 = vld [vmem:[#allocation6 + $0x98] sm:$0xff]
        %v480 = vld [vmem:[#allocation6 + $0xa0] sm:$0xff]
        %v481 = vld [vmem:[#allocation6 + $0xa8] sm:$0xff]
        %v482 = vld [vmem:[#allocation6 + $0xb0] sm:$0xff]
        %v483 = vld [vmem:[#allocation6 + $0xb8] sm:$0xff]
        %v484 = vld [vmem:[#allocation6 + $0xc0] sm:$0xff]
        %v485 = vld [vmem:[#allocation6 + $0xc8] sm:$0xff]
        %v486 = vld [vmem:[#allocation6 + $0xd0] sm:$0xff]
        %v487 = vld [vmem:[#allocation6 + $0xd8] sm:$0xff]
        %v488 = vld [vmem:[#allocation6 + $0xe0] sm:$0xff]
        %v489 = vld [vmem:[#allocation6 + $0xe8] sm:$0xff]
        %v490 = vld [vmem:[#allocation6 + $0xf0] sm:$0xff]
        %v491 = vld [vmem:[#allocation6 + $0xf8] sm:$0xff]
        %v492 = vld [vmem:[#allocation6 + $0x100] sm:$0xff]
        %v493 = vld [vmem:[#allocation6 + $0x108] sm:$0xff]
        %v494 = vld [vmem:[#allocation6 + $0x110] sm:$0xff]
        %v495 = vld [vmem:[#allocation6 + $0x118] sm:$0xff]
        %v496 = vld [vmem:[#allocation6 + $0x120] sm:$0xff]
        %v497 = vld [vmem:[#allocation6 + $0x128] sm:$0xff]
        %v498 = vld [vmem:[#allocation6 + $0x130] sm:$0xff]
        %v499 = vld [vmem:[#allocation6 + $0x138] sm:$0xff]
        %v500 = vld [vmem:[#allocation6 + $0x140] sm:$0xff]
        %v501 = vld [vmem:[#allocation6 + $0x148] sm:$0xff]
        %v502 = vld [vmem:[#allocation6 + $0x150] sm:$0xff]
        %v503 = vld [vmem:[#allocation6 + $0x158] sm:$0xff]
        %v504 = vld [vmem:[#allocation6 + $0x160] sm:$0xff]
        %v505 = vld [vmem:[#allocation6 + $0x168] sm:$0xff]
        %v506 = vld [vmem:[#allocation6 + $0x170] sm:$0xff]
        %v507 = vld [vmem:[#allocation6 + $0x178] sm:$0xff]
        %v508 = vld [vmem:[#allocation6 + $0x180] sm:$0xff]
        %v509 = vld [vmem:[#allocation6 + $0x188] sm:$0xff]
        %v510 = vld [vmem:[#allocation6 + $0x190] sm:$0xff]
        %v511 = vld [vmem:[#allocation6 + $0x198] sm:$0xff]
        %v512 = vld [vmem:[#allocation6 + $0x1a0] sm:$0xff]
        %v513 = vld [vmem:[#allocation6 + $0x1a8] sm:$0xff]
        %v514 = vld [vmem:[#allocation6 + $0x1b0] sm:$0xff]
        %v515 = vld [vmem:[#allocation6 + $0x1b8] sm:$0xff]
        %v516 = vld [vmem:[#allocation6 + $0x1c0] sm:$0xff]
        %v517 = vld [vmem:[#allocation6 + $0x1c8] sm:$0xff]
        %v518 = vld [vmem:[#allocation6 + $0x1d0] sm:$0xff]
        %v519 = vld [vmem:[#allocation6 + $0x1d8] sm:$0xff]
        %v520 = vld [vmem:[#allocation6 + $0x1e0] sm:$0xff]
        %v521 = vld [vmem:[#allocation6 + $0x1e8] sm:$0xff]
        %v522 = vld [vmem:[#allocation6 + $0x1f0] sm:$0xff]
        %v523 = vld [vmem:[#allocation6 + $0x1f8] sm:$0xff]
        %v524 = vld [vmem:[#allocation6 + $0x200] sm:$0xff]
        %v525 = vld [vmem:[#allocation6 + $0x208] sm:$0xff]
        %v526 = vld [vmem:[#allocation6 + $0x210] sm:$0xff]
        %v527 = vld [vmem:[#allocation6 + $0x218] sm:$0xff]
        %v528 = vld [vmem:[#allocation6 + $0x220] sm:$0xff]
        %v529 = vld [vmem:[#allocation6 + $0x228] sm:$0xff]
        %v530 = vld [vmem:[#allocation6 + $0x230] sm:$0xff]
        %v531 = vld [vmem:[#allocation6 + $0x238] sm:$0xff]
        %v532 = vld [vmem:[#allocation6 + $0x240] sm:$0xff]
        %v533 = vld [vmem:[#allocation6 + $0x248] sm:$0xff]
        %v534 = vld [vmem:[#allocation6 + $0x250] sm:$0xff]
        %v535 = vld [vmem:[#allocation6 + $0x258] sm:$0xff]
        %v536 = vld [vmem:[#allocation6 + $0x260] sm:$0xff]
        %v537 = vld [vmem:[#allocation6 + $0x268] sm:$0xff]
        %v538 = vld [vmem:[#allocation6 + $0x270] sm:$0xff]
        %v539 = vld [vmem:[#allocation6 + $0x278] sm:$0xff]
        %v540 = vld [vmem:[#allocation6 + $0x280] sm:$0xff]
        %v541 = vld [vmem:[#allocation6 + $0x288] sm:$0xff]
        %v542 = vld [vmem:[#allocation6 + $0x290] sm:$0xff]
        %v543 = vld [vmem:[#allocation6 + $0x298] sm:$0xff]
        %v544 = vld [vmem:[#allocation6 + $0x2a0] sm:$0xff]
        %v545 = vld [vmem:[#allocation6 + $0x2a8] sm:$0xff]
        %v546 = vld [vmem:[#allocation6 + $0x2b0] sm:$0xff]
        %v547 = vld [vmem:[#allocation6 + $0x2b8] sm:$0xff]
        %v548 = vld [vmem:[#allocation6 + $0x2c0] sm:$0xff]
        %v549 = vld [vmem:[#allocation6 + $0x2c8] sm:$0xff]
        %v550 = vld [vmem:[#allocation6 + $0x2d0] sm:$0xff]
        %v551 = vld [vmem:[#allocation6 + $0x2d8] sm:$0xff]
        %v552 = vld [vmem:[#allocation6 + $0x2e0] sm:$0xff]
        %v553 = vld [vmem:[#allocation6 + $0x2e8] sm:$0xff]
        %v554 = vld [vmem:[#allocation6 + $0x2f0] sm:$0xff]
        %v555 = vld [vmem:[#allocation6 + $0x2f8] sm:$0xff]
        %v556 = vld [vmem:[#allocation6 + $0x300] sm:$0xff]
        %v557 = vld [vmem:[#allocation6 + $0x308] sm:$0xff]
        %v558 = vld [vmem:[#allocation6 + $0x310] sm:$0xff]
        %v559 = vld [vmem:[#allocation6 + $0x318] sm:$0xff]
        %v560 = vld [vmem:[#allocation6 + $0x320] sm:$0xff]
        %v561 = vld [vmem:[#allocation6 + $0x328] sm:$0xff]
        %v562 = vld [vmem:[#allocation6 + $0x330] sm:$0xff]
        %v563 = vld [vmem:[#allocation6 + $0x338] sm:$0xff]
        %v564 = vld [vmem:[#allocation6 + $0x340] sm:$0xff]
        %v565 = vld [vmem:[#allocation6 + $0x348] sm:$0xff]
        %v566 = vld [vmem:[#allocation6 + $0x350] sm:$0xff]
        %v567 = vld [vmem:[#allocation6 + $0x358] sm:$0xff]
        %v568 = vld [vmem:[#allocation6 + $0x360] sm:$0xff]
        %v569 = vld [vmem:[#allocation6 + $0x368] sm:$0xff]
        %v570 = vld [vmem:[#allocation6 + $0x370] sm:$0xff]
        %v571 = vld [vmem:[#allocation6 + $0x378] sm:$0xff]
        %v572 = vld [vmem:[#allocation6 + $0x380] sm:$0xff]
        %v573 = vld [vmem:[#allocation6 + $0x388] sm:$0xff]
        %v574 = vld [vmem:[#allocation6 + $0x390] sm:$0xff]
        %v575 = vld [vmem:[#allocation6 + $0x398] sm:$0xff]
        %v576 = vld [vmem:[#allocation6 + $0x3a0] sm:$0xff]
        %v577 = vld [vmem:[#allocation6 + $0x3a8] sm:$0xff]
        %v578 = vld [vmem:[#allocation6 + $0x3b0] sm:$0xff]
        %v579 = vld [vmem:[#allocation6 + $0x3b8] sm:$0xff]
        %v580 = vld [vmem:[#allocation6 + $0x3c0] sm:$0xff]
        %v581 = vld [vmem:[#allocation6 + $0x3c8] sm:$0xff]
        %v582 = vld [vmem:[#allocation6 + $0x3d0] sm:$0xff]
        %v583 = vld [vmem:[#allocation6 + $0x3d8] sm:$0xff]
        %v584 = vld [vmem:[#allocation6 + $0x3e0] sm:$0xff]
        %v585 = vld [vmem:[#allocation6 + $0x3e8] sm:$0xff]
        %v586 = vld [vmem:[#allocation6 + $0x3f0] sm:$0xff]
        %v587 = vld [vmem:[#allocation6 + $0x3f8] sm:$0xff]
        %v588 = vld [vmem:[#allocation6 + $0x400] sm:$0xff]
        %v589 = vld [vmem:[#allocation6 + $0x408] sm:$0xff]
        %v590 = vld [vmem:[#allocation6 + $0x410] sm:$0xff]
        %v591 = vld [vmem:[#allocation6 + $0x418] sm:$0xff]
        %v592 = vld [vmem:[#allocation6 + $0x420] sm:$0xff]
        %v593 = vld [vmem:[#allocation6 + $0x428] sm:$0xff]
        %v594 = vld [vmem:[#allocation6 + $0x430] sm:$0xff]
        %v595 = vld [vmem:[#allocation6 + $0x438] sm:$0xff]
        %v596 = vld [vmem:[#allocation6 + $0x440] sm:$0xff]
        %v597 = vld [vmem:[#allocation6 + $0x448] sm:$0xff]
        %v598 = vld [vmem:[#allocation6 + $0x450] sm:$0xff]
        %v599 = vld [vmem:[#allocation6 + $0x458] sm:$0xff]
        %v600 = vld [vmem:[#allocation6 + $0x460] sm:$0xff]
        %v601 = vld [vmem:[#allocation6 + $0x468] sm:$0xff]
        %v602 = vld [vmem:[#allocation6 + $0x470] sm:$0xff]
        %v603 = vld [vmem:[#allocation6 + $0x478] sm:$0xff]
        %v604 = vld [vmem:[#allocation6 + $0x480] sm:$0xff]
        %v605 = vld [vmem:[#allocation6 + $0x488] sm:$0xff]
        %v606 = vld [vmem:[#allocation6 + $0x490] sm:$0xff]
        %v607 = vld [vmem:[#allocation6 + $0x498] sm:$0xff]
        %v608 = vld [vmem:[#allocation6 + $0x4a0] sm:$0xff]
        %v609 = vld [vmem:[#allocation6 + $0x4a8] sm:$0xff]
        %v610 = vld [vmem:[#allocation6 + $0x4b0] sm:$0xff]
        %v611 = vld [vmem:[#allocation6 + $0x4b8] sm:$0xff]
        %v612 = vld [vmem:[#allocation6 + $0x4c0] sm:$0xff]
        %v613 = vld [vmem:[#allocation6 + $0x4c8] sm:$0xff]
        %v614 = vld [vmem:[#allocation6 + $0x4d0] sm:$0xff]
        %v615 = vld [vmem:[#allocation6 + $0x4d8] sm:$0xff]
        %v616 = vld [vmem:[#allocation6 + $0x4e0] sm:$0xff]
        %v617 = vld [vmem:[#allocation6 + $0x4e8] sm:$0xff]
        %v618 = vld [vmem:[#allocation6 + $0x4f0] sm:$0xff]
        %v619 = vld [vmem:[#allocation6 + $0x4f8] sm:$0xff]
        %v620 = vld [vmem:[#allocation6 + $0x500] sm:$0xff]
        %v621 = vld [vmem:[#allocation6 + $0x508] sm:$0xff]
        %v622 = vld [vmem:[#allocation6 + $0x510] sm:$0xff]
        %v623 = vld [vmem:[#allocation6 + $0x518] sm:$0xff]
        %v624 = vld [vmem:[#allocation6 + $0x520] sm:$0xff]
        %v625 = vld [vmem:[#allocation6 + $0x528] sm:$0xff]
        %v626 = vld [vmem:[#allocation6 + $0x530] sm:$0xff]
        %v627 = vld [vmem:[#allocation6 + $0x538] sm:$0xff]
        %v628 = vld [vmem:[#allocation6 + $0x540] sm:$0xff]
        %v629 = vld [vmem:[#allocation6 + $0x548] sm:$0xff]
        %v630 = vld [vmem:[#allocation6 + $0x550] sm:$0xff]
        %v631 = vld [vmem:[#allocation6 + $0x558] sm:$0xff]
        %v632 = vld [vmem:[#allocation6 + $0x560] sm:$0xff]
        %v633 = vld [vmem:[#allocation6 + $0x568] sm:$0xff]
        %v634 = vld [vmem:[#allocation6 + $0x570] sm:$0xff]
        %v635 = vld [vmem:[#allocation6 + $0x578] sm:$0xff]
        %v636 = vld [vmem:[#allocation6 + $0x580] sm:$0xff]
        %v637 = vld [vmem:[#allocation6 + $0x588] sm:$0xff]
        %v638 = vld [vmem:[#allocation6 + $0x590] sm:$0xff]
        %v639 = vld [vmem:[#allocation6 + $0x598] sm:$0xff]
        %v640 = vld [vmem:[#allocation6 + $0x5a0] sm:$0xff]
        %v641 = vld [vmem:[#allocation6 + $0x5a8] sm:$0xff]
        %v642 = vld [vmem:[#allocation6 + $0x5b0] sm:$0xff]
        %v643 = vld [vmem:[#allocation6 + $0x5b8] sm:$0xff]
        %v644 = vld [vmem:[#allocation6 + $0x5c0] sm:$0xff]
        %v645 = vld [vmem:[#allocation6 + $0x5c8] sm:$0xff]
        %v646 = vld [vmem:[#allocation6 + $0x5d0] sm:$0xff]
        %v647 = vld [vmem:[#allocation6 + $0x5d8] sm:$0xff]
        %v648 = vld [vmem:[#allocation6 + $0x5e0] sm:$0xff]
        %v649 = vld [vmem:[#allocation6 + $0x5e8] sm:$0xff]
        %v650 = vld [vmem:[#allocation6 + $0x5f0] sm:$0xff]
        %v651 = vld [vmem:[#allocation6 + $0x5f8] sm:$0xff]
        %v652 = vld [vmem:[%s3] sm:$0xff]
        %v654 = vlaneseq
        %v655 = vshrl.u32 %v654, 7
        %v656 = vsub.s32 0, %v655
        %v657 = vrot.slane %v652, %v656
        %v658 = vlaneseq
        %v659 = vshrl.u32 %v658, 7
        %v660 = vsub.s32 1, %v659
        %v661 = vrot.slane %v652, %v660
        %v662 = vlaneseq
        %v663 = vshrl.u32 %v662, 7
        %v664 = vsub.s32 2, %v663
        %v665 = vrot.slane %v652, %v664
        %v666 = vlaneseq
        %v667 = vshrl.u32 %v666, 7
        %v668 = vsub.s32 3, %v667
        %v669 = vrot.slane %v652, %v668
        %v670 = vlaneseq
        %v671 = vshrl.u32 %v670, 7
        %v672 = vsub.s32 4, %v671
        %v673 = vrot.slane %v652, %v672
        %v674 = vlaneseq
        %v675 = vshrl.u32 %v674, 7
        %v676 = vsub.s32 5, %v675
        %v677 = vrot.slane %v652, %v676
        %v678 = vlaneseq
        %v679 = vshrl.u32 %v678, 7
        %v680 = vsub.s32 6, %v679
        %v681 = vrot.slane %v652, %v680
        %v682 = vlaneseq
        %v683 = vshrl.u32 %v682, 7
        %v684 = vsub.s32 7, %v683
        %v685 = vrot.slane %v652, %v684
        %v710 = vunpack.c.l.b16 %v444
        %v711 = vunpack.c.h.b16 %v444
        %v712 = vunpack.c.l.b16 %v445
        %v713 = vunpack.c.l.b16 %v446
        %v714 = vunpack.c.h.b16 %v446
        %v715 = vunpack.c.l.b16 %v447
        %v716 = vunpack.c.l.b16 %v448
        %v717 = vunpack.c.h.b16 %v448
        %v718 = vunpack.c.l.b16 %v449
        %v719 = vunpack.c.l.b16 %v450
        %v720 = vunpack.c.h.b16 %v450
        %v721 = vunpack.c.l.b16 %v451
        %v722 = vunpack.c.l.b16 %v452
        %v723 = vunpack.c.h.b16 %v452
        %v724 = vunpack.c.l.b16 %v453
        %v725 = vunpack.c.l.b16 %v454
        %v726 = vunpack.c.h.b16 %v454
        %v727 = vunpack.c.l.b16 %v455
        %v728 = vunpack.c.l.b16 %v456
        %v729 = vunpack.c.h.b16 %v456
        %v730 = vunpack.c.l.b16 %v457
        %v731 = vunpack.c.l.b16 %v458
        %v732 = vunpack.c.h.b16 %v458
        %v733 = vunpack.c.l.b16 %v459
        %v734 = vpack.c.b16 %v713, %v710
        %v735 = vpack.c.b16 %v714, %v711
        %v736 = vpack.c.b16 %v715, %v712
        %v737 = vpack.c.b16 %v719, %v716
        %v738 = vpack.c.b16 %v720, %v717
        %v739 = vpack.c.b16 %v721, %v718
        %v740 = vpack.c.b16 %v725, %v722
        %v741 = vpack.c.b16 %v726, %v723
        %v742 = vpack.c.b16 %v727, %v724
        %v743 = vpack.c.b16 %v731, %v728
        %v744 = vpack.c.b16 %v732, %v729
        %v745 = vpack.c.b16 %v733, %v730
        %v950 = vunpack.c.l.b16 %v460
        %v951 = vunpack.c.h.b16 %v460
        %v952 = vunpack.c.l.b16 %v461
        %v953 = vunpack.c.h.b16 %v461
        %v954 = vunpack.c.l.b16 %v462
        %v955 = vunpack.c.h.b16 %v462
        %v956 = vunpack.c.l.b16 %v463
        %v957 = vunpack.c.h.b16 %v463
        %v958 = vunpack.c.l.b16 %v464
        %v959 = vunpack.c.h.b16 %v464
        %v960 = vunpack.c.l.b16 %v465
        %v961 = vunpack.c.h.b16 %v465
        %v962 = vunpack.c.l.b16 %v466
        %v963 = vunpack.c.h.b16 %v466
        %v964 = vunpack.c.l.b16 %v467
        %v965 = vunpack.c.h.b16 %v467
        %v966 = vunpack.c.l.b16 %v468
        %v967 = vunpack.c.h.b16 %v468
        %v968 = vunpack.c.l.b16 %v469
        %v969 = vunpack.c.h.b16 %v469
        %v970 = vunpack.c.l.b16 %v470
        %v971 = vunpack.c.h.b16 %v470
        %v972 = vunpack.c.l.b16 %v471
        %v973 = vunpack.c.h.b16 %v471
        %v974 = vunpack.c.l.b16 %v472
        %v975 = vunpack.c.h.b16 %v472
        %v976 = vunpack.c.l.b16 %v473
        %v977 = vunpack.c.h.b16 %v473
        %v978 = vunpack.c.l.b16 %v474
        %v979 = vunpack.c.h.b16 %v474
        %v980 = vunpack.c.l.b16 %v475
        %v981 = vunpack.c.h.b16 %v475
        %v982 = vunpack.c.l.b16 %v476
        %v983 = vunpack.c.h.b16 %v476
        %v984 = vunpack.c.l.b16 %v477
        %v985 = vunpack.c.h.b16 %v477
        %v986 = vunpack.c.l.b16 %v478
        %v987 = vunpack.c.h.b16 %v478
        %v988 = vunpack.c.l.b16 %v479
        %v989 = vunpack.c.h.b16 %v479
        %v990 = vunpack.c.l.b16 %v480
        %v991 = vunpack.c.h.b16 %v480
        %v992 = vunpack.c.l.b16 %v481
        %v993 = vunpack.c.h.b16 %v481
        %v994 = vunpack.c.l.b16 %v482
        %v995 = vunpack.c.h.b16 %v482
        %v996 = vunpack.c.l.b16 %v483
        %v997 = vunpack.c.h.b16 %v483
        %v998 = vunpack.c.l.b16 %v484
        %v999 = vunpack.c.h.b16 %v484
        %v1000 = vunpack.c.l.b16 %v485
        %v1001 = vunpack.c.h.b16 %v485
        %v1002 = vunpack.c.l.b16 %v486
        %v1003 = vunpack.c.h.b16 %v486
        %v1004 = vunpack.c.l.b16 %v487
        %v1005 = vunpack.c.h.b16 %v487
        %v1006 = vunpack.c.l.b16 %v488
        %v1007 = vunpack.c.h.b16 %v488
        %v1008 = vunpack.c.l.b16 %v489
        %v1009 = vunpack.c.h.b16 %v489
        %v1010 = vunpack.c.l.b16 %v490
        %v1011 = vunpack.c.h.b16 %v490
        %v1012 = vunpack.c.l.b16 %v491
        %v1013 = vunpack.c.h.b16 %v491
        %v1014 = vunpack.c.l.b16 %v492
        %v1015 = vunpack.c.h.b16 %v492
        %v1016 = vunpack.c.l.b16 %v493
        %v1017 = vunpack.c.h.b16 %v493
        %v1018 = vunpack.c.l.b16 %v494
        %v1019 = vunpack.c.h.b16 %v494
        %v1020 = vunpack.c.l.b16 %v495
        %v1021 = vunpack.c.h.b16 %v495
        %v1022 = vunpack.c.l.b16 %v496
        %v1023 = vunpack.c.h.b16 %v496
        %v1024 = vunpack.c.l.b16 %v497
        %v1025 = vunpack.c.h.b16 %v497
        %v1026 = vunpack.c.l.b16 %v498
        %v1027 = vunpack.c.h.b16 %v498
        %v1028 = vunpack.c.l.b16 %v499
        %v1029 = vunpack.c.h.b16 %v499
        %v1030 = vunpack.c.l.b16 %v500
        %v1031 = vunpack.c.h.b16 %v500
        %v1032 = vunpack.c.l.b16 %v501
        %v1033 = vunpack.c.h.b16 %v501
        %v1034 = vunpack.c.l.b16 %v502
        %v1035 = vunpack.c.h.b16 %v502
        %v1036 = vunpack.c.l.b16 %v503
        %v1037 = vunpack.c.h.b16 %v503
        %v1038 = vunpack.c.l.b16 %v504
        %v1039 = vunpack.c.h.b16 %v504
        %v1040 = vunpack.c.l.b16 %v505
        %v1041 = vunpack.c.h.b16 %v505
        %v1042 = vunpack.c.l.b16 %v506
        %v1043 = vunpack.c.h.b16 %v506
        %v1044 = vunpack.c.l.b16 %v507
        %v1045 = vunpack.c.h.b16 %v507
        %v1046 = vunpack.c.l.b16 %v508
        %v1047 = vunpack.c.h.b16 %v508
        %v1048 = vunpack.c.l.b16 %v509
        %v1049 = vunpack.c.h.b16 %v509
        %v1050 = vunpack.c.l.b16 %v510
        %v1051 = vunpack.c.h.b16 %v510
        %v1052 = vunpack.c.l.b16 %v511
        %v1053 = vunpack.c.h.b16 %v511
        %v1054 = vunpack.c.l.b16 %v512
        %v1055 = vunpack.c.h.b16 %v512
        %v1056 = vunpack.c.l.b16 %v513
        %v1057 = vunpack.c.h.b16 %v513
        %v1058 = vunpack.c.l.b16 %v514
        %v1059 = vunpack.c.h.b16 %v514
        %v1060 = vunpack.c.l.b16 %v515
        %v1061 = vunpack.c.h.b16 %v515
        %v1062 = vunpack.c.l.b16 %v516
        %v1063 = vunpack.c.h.b16 %v516
        %v1064 = vunpack.c.l.b16 %v517
        %v1065 = vunpack.c.h.b16 %v517
        %v1066 = vunpack.c.l.b16 %v518
        %v1067 = vunpack.c.h.b16 %v518
        %v1068 = vunpack.c.l.b16 %v519
        %v1069 = vunpack.c.h.b16 %v519
        %v1070 = vunpack.c.l.b16 %v520
        %v1071 = vunpack.c.h.b16 %v520
        %v1072 = vunpack.c.l.b16 %v521
        %v1073 = vunpack.c.h.b16 %v521
        %v1074 = vunpack.c.l.b16 %v522
        %v1075 = vunpack.c.h.b16 %v522
        %v1076 = vunpack.c.l.b16 %v523
        %v1077 = vunpack.c.h.b16 %v523
        %v1078 = vunpack.c.l.b16 %v524
        %v1079 = vunpack.c.h.b16 %v524
        %v1080 = vunpack.c.l.b16 %v525
        %v1081 = vunpack.c.h.b16 %v525
        %v1082 = vunpack.c.l.b16 %v526
        %v1083 = vunpack.c.h.b16 %v526
        %v1084 = vunpack.c.l.b16 %v527
        %v1085 = vunpack.c.h.b16 %v527
        %v1086 = vunpack.c.l.b16 %v528
        %v1087 = vunpack.c.h.b16 %v528
        %v1088 = vunpack.c.l.b16 %v529
        %v1089 = vunpack.c.h.b16 %v529
        %v1090 = vunpack.c.l.b16 %v530
        %v1091 = vunpack.c.h.b16 %v530
        %v1092 = vunpack.c.l.b16 %v531
        %v1093 = vunpack.c.h.b16 %v531
        %v1094 = vunpack.c.l.b16 %v532
        %v1095 = vunpack.c.h.b16 %v532
        %v1096 = vunpack.c.l.b16 %v533
        %v1097 = vunpack.c.h.b16 %v533
        %v1098 = vunpack.c.l.b16 %v534
        %v1099 = vunpack.c.h.b16 %v534
        %v1100 = vunpack.c.l.b16 %v535
        %v1101 = vunpack.c.h.b16 %v535
        %v1102 = vunpack.c.l.b16 %v536
        %v1103 = vunpack.c.h.b16 %v536
        %v1104 = vunpack.c.l.b16 %v537
        %v1105 = vunpack.c.h.b16 %v537
        %v1106 = vunpack.c.l.b16 %v538
        %v1107 = vunpack.c.h.b16 %v538
        %v1108 = vunpack.c.l.b16 %v539
        %v1109 = vunpack.c.h.b16 %v539
        %v1110 = vunpack.c.l.b16 %v540
        %v1111 = vunpack.c.h.b16 %v540
        %v1112 = vunpack.c.l.b16 %v541
        %v1113 = vunpack.c.h.b16 %v541
        %v1114 = vunpack.c.l.b16 %v542
        %v1115 = vunpack.c.h.b16 %v542
        %v1116 = vunpack.c.l.b16 %v543
        %v1117 = vunpack.c.h.b16 %v543
        %v1118 = vunpack.c.l.b16 %v544
        %v1119 = vunpack.c.h.b16 %v544
        %v1120 = vunpack.c.l.b16 %v545
        %v1121 = vunpack.c.h.b16 %v545
        %v1122 = vunpack.c.l.b16 %v546
        %v1123 = vunpack.c.h.b16 %v546
        %v1124 = vunpack.c.l.b16 %v547
        %v1125 = vunpack.c.h.b16 %v547
        %v1126 = vunpack.c.l.b16 %v548
        %v1127 = vunpack.c.h.b16 %v548
        %v1128 = vunpack.c.l.b16 %v549
        %v1129 = vunpack.c.h.b16 %v549
        %v1130 = vunpack.c.l.b16 %v550
        %v1131 = vunpack.c.h.b16 %v550
        %v1132 = vunpack.c.l.b16 %v551
        %v1133 = vunpack.c.h.b16 %v551
        %v1134 = vunpack.c.l.b16 %v552
        %v1135 = vunpack.c.h.b16 %v552
        %v1136 = vunpack.c.l.b16 %v553
        %v1137 = vunpack.c.h.b16 %v553
        %v1138 = vunpack.c.l.b16 %v554
        %v1139 = vunpack.c.h.b16 %v554
        %v1140 = vunpack.c.l.b16 %v555
        %v1141 = vunpack.c.h.b16 %v555
        %v1142 = vunpack.c.l.b16 %v556
        %v1143 = vunpack.c.h.b16 %v556
        %v1144 = vunpack.c.l.b16 %v557
        %v1145 = vunpack.c.h.b16 %v557
        %v1146 = vunpack.c.l.b16 %v558
        %v1147 = vunpack.c.h.b16 %v558
        %v1148 = vunpack.c.l.b16 %v559
        %v1149 = vunpack.c.h.b16 %v559
        %v1150 = vunpack.c.l.b16 %v560
        %v1151 = vunpack.c.h.b16 %v560
        %v1152 = vunpack.c.l.b16 %v561
        %v1153 = vunpack.c.h.b16 %v561
        %v1154 = vunpack.c.l.b16 %v562
        %v1155 = vunpack.c.h.b16 %v562
        %v1156 = vunpack.c.l.b16 %v563
        %v1157 = vunpack.c.h.b16 %v563
        %v1158 = vunpack.c.l.b16 %v564
        %v1159 = vunpack.c.h.b16 %v564
        %v1160 = vunpack.c.l.b16 %v565
        %v1161 = vunpack.c.h.b16 %v565
        %v1162 = vunpack.c.l.b16 %v566
        %v1163 = vunpack.c.h.b16 %v566
        %v1164 = vunpack.c.l.b16 %v567
        %v1165 = vunpack.c.h.b16 %v567
        %v1166 = vunpack.c.l.b16 %v568
        %v1167 = vunpack.c.h.b16 %v568
        %v1168 = vunpack.c.l.b16 %v569
        %v1169 = vunpack.c.h.b16 %v569
        %v1170 = vunpack.c.l.b16 %v570
        %v1171 = vunpack.c.h.b16 %v570
        %v1172 = vunpack.c.l.b16 %v571
        %v1173 = vunpack.c.h.b16 %v571
        %v1174 = vunpack.c.l.b16 %v572
        %v1175 = vunpack.c.h.b16 %v572
        %v1176 = vunpack.c.l.b16 %v573
        %v1177 = vunpack.c.h.b16 %v573
        %v1178 = vunpack.c.l.b16 %v574
        %v1179 = vunpack.c.h.b16 %v574
        %v1180 = vunpack.c.l.b16 %v575
        %v1181 = vunpack.c.h.b16 %v575
        %v1182 = vunpack.c.l.b16 %v576
        %v1183 = vunpack.c.h.b16 %v576
        %v1184 = vunpack.c.l.b16 %v577
        %v1185 = vunpack.c.h.b16 %v577
        %v1186 = vunpack.c.l.b16 %v578
        %v1187 = vunpack.c.h.b16 %v578
        %v1188 = vunpack.c.l.b16 %v579
        %v1189 = vunpack.c.h.b16 %v579
        %v1190 = vunpack.c.l.b16 %v580
        %v1191 = vunpack.c.h.b16 %v580
        %v1192 = vunpack.c.l.b16 %v581
        %v1193 = vunpack.c.h.b16 %v581
        %v1194 = vunpack.c.l.b16 %v582
        %v1195 = vunpack.c.h.b16 %v582
        %v1196 = vunpack.c.l.b16 %v583
        %v1197 = vunpack.c.h.b16 %v583
        %v1198 = vunpack.c.l.b16 %v584
        %v1199 = vunpack.c.h.b16 %v584
        %v1200 = vunpack.c.l.b16 %v585
        %v1201 = vunpack.c.h.b16 %v585
        %v1202 = vunpack.c.l.b16 %v586
        %v1203 = vunpack.c.h.b16 %v586
        %v1204 = vunpack.c.l.b16 %v587
        %v1205 = vunpack.c.h.b16 %v587
        %v1206 = vunpack.c.l.b16 %v588
        %v1207 = vunpack.c.h.b16 %v588
        %v1208 = vunpack.c.l.b16 %v589
        %v1209 = vunpack.c.h.b16 %v589
        %v1210 = vunpack.c.l.b16 %v590
        %v1211 = vunpack.c.h.b16 %v590
        %v1212 = vunpack.c.l.b16 %v591
        %v1213 = vunpack.c.h.b16 %v591
        %v1214 = vunpack.c.l.b16 %v592
        %v1215 = vunpack.c.h.b16 %v592
        %v1216 = vunpack.c.l.b16 %v593
        %v1217 = vunpack.c.h.b16 %v593
        %v1218 = vunpack.c.l.b16 %v594
        %v1219 = vunpack.c.h.b16 %v594
        %v1220 = vunpack.c.l.b16 %v595
        %v1221 = vunpack.c.h.b16 %v595
        %v1222 = vunpack.c.l.b16 %v596
        %v1223 = vunpack.c.h.b16 %v596
        %v1224 = vunpack.c.l.b16 %v597
        %v1225 = vunpack.c.h.b16 %v597
        %v1226 = vunpack.c.l.b16 %v598
        %v1227 = vunpack.c.h.b16 %v598
        %v1228 = vunpack.c.l.b16 %v599
        %v1229 = vunpack.c.h.b16 %v599
        %v1230 = vunpack.c.l.b16 %v600
        %v1231 = vunpack.c.h.b16 %v600
        %v1232 = vunpack.c.l.b16 %v601
        %v1233 = vunpack.c.h.b16 %v601
        %v1234 = vunpack.c.l.b16 %v602
        %v1235 = vunpack.c.h.b16 %v602
        %v1236 = vunpack.c.l.b16 %v603
        %v1237 = vunpack.c.h.b16 %v603
        %v1238 = vunpack.c.l.b16 %v604
        %v1239 = vunpack.c.h.b16 %v604
        %v1240 = vunpack.c.l.b16 %v605
        %v1241 = vunpack.c.h.b16 %v605
        %v1242 = vunpack.c.l.b16 %v606
        %v1243 = vunpack.c.h.b16 %v606
        %v1244 = vunpack.c.l.b16 %v607
        %v1245 = vunpack.c.h.b16 %v607
        %v1246 = vunpack.c.l.b16 %v608
        %v1247 = vunpack.c.h.b16 %v608
        %v1248 = vunpack.c.l.b16 %v609
        %v1249 = vunpack.c.h.b16 %v609
        %v1250 = vunpack.c.l.b16 %v610
        %v1251 = vunpack.c.h.b16 %v610
        %v1252 = vunpack.c.l.b16 %v611
        %v1253 = vunpack.c.h.b16 %v611
        %v1254 = vunpack.c.l.b16 %v612
        %v1255 = vunpack.c.h.b16 %v612
        %v1256 = vunpack.c.l.b16 %v613
        %v1257 = vunpack.c.h.b16 %v613
        %v1258 = vunpack.c.l.b16 %v614
        %v1259 = vunpack.c.h.b16 %v614
        %v1260 = vunpack.c.l.b16 %v615
        %v1261 = vunpack.c.h.b16 %v615
        %v1262 = vunpack.c.l.b16 %v616
        %v1263 = vunpack.c.h.b16 %v616
        %v1264 = vunpack.c.l.b16 %v617
        %v1265 = vunpack.c.h.b16 %v617
        %v1266 = vunpack.c.l.b16 %v618
        %v1267 = vunpack.c.h.b16 %v618
        %v1268 = vunpack.c.l.b16 %v619
        %v1269 = vunpack.c.h.b16 %v619
        %v1270 = vunpack.c.l.b16 %v620
        %v1271 = vunpack.c.h.b16 %v620
        %v1272 = vunpack.c.l.b16 %v621
        %v1273 = vunpack.c.h.b16 %v621
        %v1274 = vunpack.c.l.b16 %v622
        %v1275 = vunpack.c.h.b16 %v622
        %v1276 = vunpack.c.l.b16 %v623
        %v1277 = vunpack.c.h.b16 %v623
        %v1278 = vunpack.c.l.b16 %v624
        %v1279 = vunpack.c.h.b16 %v624
        %v1280 = vunpack.c.l.b16 %v625
        %v1281 = vunpack.c.h.b16 %v625
        %v1282 = vunpack.c.l.b16 %v626
        %v1283 = vunpack.c.h.b16 %v626
        %v1284 = vunpack.c.l.b16 %v627
        %v1285 = vunpack.c.h.b16 %v627
        %v1286 = vunpack.c.l.b16 %v628
        %v1287 = vunpack.c.h.b16 %v628
        %v1288 = vunpack.c.l.b16 %v629
        %v1289 = vunpack.c.h.b16 %v629
        %v1290 = vunpack.c.l.b16 %v630
        %v1291 = vunpack.c.h.b16 %v630
        %v1292 = vunpack.c.l.b16 %v631
        %v1293 = vunpack.c.h.b16 %v631
        %v1294 = vunpack.c.l.b16 %v632
        %v1295 = vunpack.c.h.b16 %v632
        %v1296 = vunpack.c.l.b16 %v633
        %v1297 = vunpack.c.h.b16 %v633
        %v1298 = vunpack.c.l.b16 %v634
        %v1299 = vunpack.c.h.b16 %v634
        %v1300 = vunpack.c.l.b16 %v635
        %v1301 = vunpack.c.h.b16 %v635
        %v1302 = vunpack.c.l.b16 %v636
        %v1303 = vunpack.c.h.b16 %v636
        %v1304 = vunpack.c.l.b16 %v637
        %v1305 = vunpack.c.h.b16 %v637
        %v1306 = vunpack.c.l.b16 %v638
        %v1307 = vunpack.c.h.b16 %v638
        %v1308 = vunpack.c.l.b16 %v639
        %v1309 = vunpack.c.h.b16 %v639
        %v1310 = vunpack.c.l.b16 %v640
        %v1311 = vunpack.c.h.b16 %v640
        %v1312 = vunpack.c.l.b16 %v641
        %v1313 = vunpack.c.h.b16 %v641
        %v1314 = vunpack.c.l.b16 %v642
        %v1315 = vunpack.c.h.b16 %v642
        %v1316 = vunpack.c.l.b16 %v643
        %v1317 = vunpack.c.h.b16 %v643
        %v1318 = vunpack.c.l.b16 %v644
        %v1319 = vunpack.c.h.b16 %v644
        %v1320 = vunpack.c.l.b16 %v645
        %v1321 = vunpack.c.h.b16 %v645
        %v1322 = vunpack.c.l.b16 %v646
        %v1323 = vunpack.c.h.b16 %v646
        %v1324 = vunpack.c.l.b16 %v647
        %v1325 = vunpack.c.h.b16 %v647
        %v1326 = vunpack.c.l.b16 %v648
        %v1327 = vunpack.c.h.b16 %v648
        %v1328 = vunpack.c.l.b16 %v649
        %v1329 = vunpack.c.h.b16 %v649
        %v1330 = vunpack.c.l.b16 %v650
        %v1331 = vunpack.c.h.b16 %v650
        %v1332 = vunpack.c.l.b16 %v651
        %v1333 = vunpack.c.h.b16 %v651
        %v1334 = vpack.c.b16 %v958, %v950
        %v1335 = vpack.c.b16 %v959, %v951
        %v1336 = vpack.c.b16 %v960, %v952
        %v1337 = vpack.c.b16 %v961, %v953
        %v1338 = vpack.c.b16 %v962, %v954
        %v1339 = vpack.c.b16 %v963, %v955
        %v1340 = vpack.c.b16 %v964, %v956
        %v1341 = vpack.c.b16 %v965, %v957
        %v1342 = vpack.c.b16 %v974, %v966
        %v1343 = vpack.c.b16 %v975, %v967
        %v1344 = vpack.c.b16 %v976, %v968
        %v1345 = vpack.c.b16 %v977, %v969
        %v1346 = vpack.c.b16 %v978, %v970
        %v1347 = vpack.c.b16 %v979, %v971
        %v1348 = vpack.c.b16 %v980, %v972
        %v1349 = vpack.c.b16 %v981, %v973
        %v1350 = vpack.c.b16 %v990, %v982
        %v1351 = vpack.c.b16 %v991, %v983
        %v1352 = vpack.c.b16 %v992, %v984
        %v1353 = vpack.c.b16 %v993, %v985
        %v1354 = vpack.c.b16 %v994, %v986
        %v1355 = vpack.c.b16 %v995, %v987
        %v1356 = vpack.c.b16 %v996, %v988
        %v1357 = vpack.c.b16 %v997, %v989
        %v1358 = vpack.c.b16 %v1006, %v998
        %v1359 = vpack.c.b16 %v1007, %v999
        %v1360 = vpack.c.b16 %v1008, %v1000
        %v1361 = vpack.c.b16 %v1009, %v1001
        %v1362 = vpack.c.b16 %v1010, %v1002
        %v1363 = vpack.c.b16 %v1011, %v1003
        %v1364 = vpack.c.b16 %v1012, %v1004
        %v1365 = vpack.c.b16 %v1013, %v1005
        %v1366 = vpack.c.b16 %v1022, %v1014
        %v1367 = vpack.c.b16 %v1023, %v1015
        %v1368 = vpack.c.b16 %v1024, %v1016
        %v1369 = vpack.c.b16 %v1025, %v1017
        %v1370 = vpack.c.b16 %v1026, %v1018
        %v1371 = vpack.c.b16 %v1027, %v1019
        %v1372 = vpack.c.b16 %v1028, %v1020
        %v1373 = vpack.c.b16 %v1029, %v1021
        %v1374 = vpack.c.b16 %v1038, %v1030
        %v1375 = vpack.c.b16 %v1039, %v1031
        %v1376 = vpack.c.b16 %v1040, %v1032
        %v1377 = vpack.c.b16 %v1041, %v1033
        %v1378 = vpack.c.b16 %v1042, %v1034
        %v1379 = vpack.c.b16 %v1043, %v1035
        %v1380 = vpack.c.b16 %v1044, %v1036
        %v1381 = vpack.c.b16 %v1045, %v1037
        %v1382 = vpack.c.b16 %v1054, %v1046
        %v1383 = vpack.c.b16 %v1055, %v1047
        %v1384 = vpack.c.b16 %v1056, %v1048
        %v1385 = vpack.c.b16 %v1057, %v1049
        %v1386 = vpack.c.b16 %v1058, %v1050
        %v1387 = vpack.c.b16 %v1059, %v1051
        %v1388 = vpack.c.b16 %v1060, %v1052
        %v1389 = vpack.c.b16 %v1061, %v1053
        %v1390 = vpack.c.b16 %v1070, %v1062
        %v1391 = vpack.c.b16 %v1071, %v1063
        %v1392 = vpack.c.b16 %v1072, %v1064
        %v1393 = vpack.c.b16 %v1073, %v1065
        %v1394 = vpack.c.b16 %v1074, %v1066
        %v1395 = vpack.c.b16 %v1075, %v1067
        %v1396 = vpack.c.b16 %v1076, %v1068
        %v1397 = vpack.c.b16 %v1077, %v1069
        %v1398 = vpack.c.b16 %v1086, %v1078
        %v1399 = vpack.c.b16 %v1087, %v1079
        %v1400 = vpack.c.b16 %v1088, %v1080
        %v1401 = vpack.c.b16 %v1089, %v1081
        %v1402 = vpack.c.b16 %v1090, %v1082
        %v1403 = vpack.c.b16 %v1091, %v1083
        %v1404 = vpack.c.b16 %v1092, %v1084
        %v1405 = vpack.c.b16 %v1093, %v1085
        %v1406 = vpack.c.b16 %v1102, %v1094
        %v1407 = vpack.c.b16 %v1103, %v1095
        %v1408 = vpack.c.b16 %v1104, %v1096
        %v1409 = vpack.c.b16 %v1105, %v1097
        %v1410 = vpack.c.b16 %v1106, %v1098
        %v1411 = vpack.c.b16 %v1107, %v1099
        %v1412 = vpack.c.b16 %v1108, %v1100
        %v1413 = vpack.c.b16 %v1109, %v1101
        %v1414 = vpack.c.b16 %v1118, %v1110
        %v1415 = vpack.c.b16 %v1119, %v1111
        %v1416 = vpack.c.b16 %v1120, %v1112
        %v1417 = vpack.c.b16 %v1121, %v1113
        %v1418 = vpack.c.b16 %v1122, %v1114
        %v1419 = vpack.c.b16 %v1123, %v1115
        %v1420 = vpack.c.b16 %v1124, %v1116
        %v1421 = vpack.c.b16 %v1125, %v1117
        %v1422 = vpack.c.b16 %v1134, %v1126
        %v1423 = vpack.c.b16 %v1135, %v1127
        %v1424 = vpack.c.b16 %v1136, %v1128
        %v1425 = vpack.c.b16 %v1137, %v1129
        %v1426 = vpack.c.b16 %v1138, %v1130
        %v1427 = vpack.c.b16 %v1139, %v1131
        %v1428 = vpack.c.b16 %v1140, %v1132
        %v1429 = vpack.c.b16 %v1141, %v1133
        %v1430 = vpack.c.b16 %v1150, %v1142
        %v1431 = vpack.c.b16 %v1151, %v1143
        %v1432 = vpack.c.b16 %v1152, %v1144
        %v1433 = vpack.c.b16 %v1153, %v1145
        %v1434 = vpack.c.b16 %v1154, %v1146
        %v1435 = vpack.c.b16 %v1155, %v1147
        %v1436 = vpack.c.b16 %v1156, %v1148
        %v1437 = vpack.c.b16 %v1157, %v1149
        %v1438 = vpack.c.b16 %v1166, %v1158
        %v1439 = vpack.c.b16 %v1167, %v1159
        %v1440 = vpack.c.b16 %v1168, %v1160
        %v1441 = vpack.c.b16 %v1169, %v1161
        %v1442 = vpack.c.b16 %v1170, %v1162
        %v1443 = vpack.c.b16 %v1171, %v1163
        %v1444 = vpack.c.b16 %v1172, %v1164
        %v1445 = vpack.c.b16 %v1173, %v1165
        %v1446 = vpack.c.b16 %v1182, %v1174
        %v1447 = vpack.c.b16 %v1183, %v1175
        %v1448 = vpack.c.b16 %v1184, %v1176
        %v1449 = vpack.c.b16 %v1185, %v1177
        %v1450 = vpack.c.b16 %v1186, %v1178
        %v1451 = vpack.c.b16 %v1187, %v1179
        %v1452 = vpack.c.b16 %v1188, %v1180
        %v1453 = vpack.c.b16 %v1189, %v1181
        %v1454 = vpack.c.b16 %v1198, %v1190
        %v1455 = vpack.c.b16 %v1199, %v1191
        %v1456 = vpack.c.b16 %v1200, %v1192
        %v1457 = vpack.c.b16 %v1201, %v1193
        %v1458 = vpack.c.b16 %v1202, %v1194
        %v1459 = vpack.c.b16 %v1203, %v1195
        %v1460 = vpack.c.b16 %v1204, %v1196
        %v1461 = vpack.c.b16 %v1205, %v1197
        %v1462 = vpack.c.b16 %v1214, %v1206
        %v1463 = vpack.c.b16 %v1215, %v1207
        %v1464 = vpack.c.b16 %v1216, %v1208
        %v1465 = vpack.c.b16 %v1217, %v1209
        %v1466 = vpack.c.b16 %v1218, %v1210
        %v1467 = vpack.c.b16 %v1219, %v1211
        %v1468 = vpack.c.b16 %v1220, %v1212
        %v1469 = vpack.c.b16 %v1221, %v1213
        %v1470 = vpack.c.b16 %v1230, %v1222
        %v1471 = vpack.c.b16 %v1231, %v1223
        %v1472 = vpack.c.b16 %v1232, %v1224
        %v1473 = vpack.c.b16 %v1233, %v1225
        %v1474 = vpack.c.b16 %v1234, %v1226
        %v1475 = vpack.c.b16 %v1235, %v1227
        %v1476 = vpack.c.b16 %v1236, %v1228
        %v1477 = vpack.c.b16 %v1237, %v1229
        %v1478 = vpack.c.b16 %v1246, %v1238
        %v1479 = vpack.c.b16 %v1247, %v1239
        %v1480 = vpack.c.b16 %v1248, %v1240
        %v1481 = vpack.c.b16 %v1249, %v1241
        %v1482 = vpack.c.b16 %v1250, %v1242
        %v1483 = vpack.c.b16 %v1251, %v1243
        %v1484 = vpack.c.b16 %v1252, %v1244
        %v1485 = vpack.c.b16 %v1253, %v1245
        %v1486 = vpack.c.b16 %v1262, %v1254
        %v1487 = vpack.c.b16 %v1263, %v1255
        %v1488 = vpack.c.b16 %v1264, %v1256
        %v1489 = vpack.c.b16 %v1265, %v1257
        %v1490 = vpack.c.b16 %v1266, %v1258
        %v1491 = vpack.c.b16 %v1267, %v1259
        %v1492 = vpack.c.b16 %v1268, %v1260
        %v1493 = vpack.c.b16 %v1269, %v1261
        %v1494 = vpack.c.b16 %v1278, %v1270
        %v1495 = vpack.c.b16 %v1279, %v1271
        %v1496 = vpack.c.b16 %v1280, %v1272
        %v1497 = vpack.c.b16 %v1281, %v1273
        %v1498 = vpack.c.b16 %v1282, %v1274
        %v1499 = vpack.c.b16 %v1283, %v1275
        %v1500 = vpack.c.b16 %v1284, %v1276
        %v1501 = vpack.c.b16 %v1285, %v1277
        %v1502 = vpack.c.b16 %v1294, %v1286
        %v1503 = vpack.c.b16 %v1295, %v1287
        %v1504 = vpack.c.b16 %v1296, %v1288
        %v1505 = vpack.c.b16 %v1297, %v1289
        %v1506 = vpack.c.b16 %v1298, %v1290
        %v1507 = vpack.c.b16 %v1299, %v1291
        %v1508 = vpack.c.b16 %v1300, %v1292
        %v1509 = vpack.c.b16 %v1301, %v1293
        %v1510 = vpack.c.b16 %v1310, %v1302
        %v1511 = vpack.c.b16 %v1311, %v1303
        %v1512 = vpack.c.b16 %v1312, %v1304
        %v1513 = vpack.c.b16 %v1313, %v1305
        %v1514 = vpack.c.b16 %v1314, %v1306
        %v1515 = vpack.c.b16 %v1315, %v1307
        %v1516 = vpack.c.b16 %v1316, %v1308
        %v1517 = vpack.c.b16 %v1317, %v1309
        %v1518 = vpack.c.b16 %v1326, %v1318
        %v1519 = vpack.c.b16 %v1327, %v1319
        %v1520 = vpack.c.b16 %v1328, %v1320
        %v1521 = vpack.c.b16 %v1329, %v1321
        %v1522 = vpack.c.b16 %v1330, %v1322
        %v1523 = vpack.c.b16 %v1331, %v1323
        %v1524 = vpack.c.b16 %v1332, %v1324
        %v1525 = vpack.c.b16 %v1333, %v1325
        %1718 = vmatprep.subr.bf16.mxu0 %v1335
        %1719 = vmatpush1.bf16.msra.mxu0 %v1334
        %1720 = vmatprep.subr.bf16.mxu0 %v1343
        %1721 = vmatpush1.bf16.msra.mxu0 %v1342
        %1722 = vmatprep.subr.bf16.mxu0 %v1351
        %1723 = vmatpush1.bf16.msra.mxu0 %v1350
        %1724 = vmatprep.subr.bf16.mxu0 %v1359
        %1725 = vmatpush1.bf16.msra.mxu0 %v1358
        %1726 = vmatprep.subr.bf16.mxu0 %v1367
        %1727 = vmatpush1.bf16.msra.mxu0 %v1366
        %1728 = vmatprep.subr.bf16.mxu0 %v1375
        %1729 = vmatpush1.bf16.msra.mxu0 %v1374
        %1730 = vmatprep.subr.bf16.mxu0 %v1383
        %1731 = vmatpush1.bf16.msra.mxu0 %v1382
        %1732 = vmatprep.subr.bf16.mxu0 %v1391
        %1733 = vmatpush1.bf16.msra.mxu0 %v1390
        %1734 = vmatprep.subr.bf16.mxu0 %v1399
        %1735 = vmatpush1.bf16.msra.mxu0 %v1398
        %1736 = vmatprep.subr.bf16.mxu0 %v1407
        %1737 = vmatpush1.bf16.msra.mxu0 %v1406
        %1738 = vmatprep.subr.bf16.mxu0 %v1415
        %1739 = vmatpush1.bf16.msra.mxu0 %v1414
        %1740 = vmatprep.subr.bf16.mxu0 %v1423
        %1741 = vmatpush1.bf16.msra.mxu0 %v1422
        %1742 = vmatprep.subr.bf16.mxu0 %v1431
        %1743 = vmatpush1.bf16.msra.mxu0 %v1430
        %1744 = vmatprep.subr.bf16.mxu0 %v1439
        %1745 = vmatpush1.bf16.msra.mxu0 %v1438
        %1746 = vmatprep.subr.bf16.mxu0 %v1447
        %1747 = vmatpush1.bf16.msra.mxu0 %v1446
        %1748 = vmatprep.subr.bf16.mxu0 %v1455
        %1749 = vmatpush1.bf16.msra.mxu0 %v1454
        %1750 = vmatprep.mubr.bf16.mxu0 %v735
        %1751 = vmatmul.mubr.bf16.gmra.mrb[0].mxu0 %v734
        %v1752 = vpop.f32.mrb[0].mxu0
        %v1753 = vadd.f32 %v657, %v1752
        %v1754 = vpop.f32.mrb[0].mxu0
        %v1755 = vadd.f32 %v661, %v1754
        %v1756 = vpop.f32.mrb[0].mxu0
        %v1757 = vadd.f32 %v657, %v1756
        %v1758 = vpop.f32.mrb[0].mxu0
        %v1759 = vadd.f32 %v661, %v1758
        %1760 = vmatprep.mubr.bf16.mxu0 %v738
        %1761 = vmatmul.mubr.bf16.gmra.mrb[0].mxu0 %v737
        %v1762 = vpop.f32.mrb[0].mxu0
        %v1763 = vadd.f32 %v657, %v1762
        %v1764 = vpop.f32.mrb[0].mxu0
        %v1765 = vadd.f32 %v661, %v1764
        %v1766 = vpop.f32.mrb[0].mxu0
        %v1767 = vadd.f32 %v657, %v1766
        %v1768 = vpop.f32.mrb[0].mxu0
        %v1769 = vadd.f32 %v661, %v1768
        %1770 = vmatprep.mubr.bf16.mxu0 %v741
        %1771 = vmatmul.mubr.bf16.gmra.mrb[0].mxu0 %v740
        %v1772 = vpop.f32.mrb[0].mxu0
        %v1773 = vadd.f32 %v657, %v1772
        %v1774 = vpop.f32.mrb[0].mxu0
        %v1775 = vadd.f32 %v661, %v1774
        %v1776 = vpop.f32.mrb[0].mxu0
        %v1777 = vadd.f32 %v657, %v1776
        %v1778 = vpop.f32.mrb[0].mxu0
        %v1779 = vadd.f32 %v661, %v1778
        %1780 = vmatprep.mubr.bf16.mxu0 %v744
        %1781 = vmatmul.mubr.bf16.gmra.mrb[0].mxu0 %v743
        %v1782 = vpop.f32.mrb[0].mxu0
        %v1783 = vadd.f32 %v657, %v1782
        %v1784 = vpop.f32.mrb[0].mxu0
        %v1785 = vadd.f32 %v661, %v1784
        %v1786 = vpop.f32.mrb[0].mxu0
        %v1787 = vadd.f32 %v657, %v1786
        %v1788 = vpop.f32.mrb[0].mxu0
        %v1789 = vadd.f32 %v661, %v1788
        %1790 = vdwg.mxu0
        %1791 = vmatprep.subr.bf16.mxu0 %v1463
        %1792 = vmatpush1.bf16.msra.mxu0 %v1462
        %1793 = vmatprep.subr.bf16.mxu0 %v1471
        %1794 = vmatpush1.bf16.msra.mxu0 %v1470
        %1795 = vmatprep.subr.bf16.mxu0 %v1479
        %1796 = vmatpush1.bf16.msra.mxu0 %v1478
        %1797 = vmatprep.subr.bf16.mxu0 %v1487
        %1798 = vmatpush1.bf16.msra.mxu0 %v1486
        %1799 = vmatprep.subr.bf16.mxu0 %v1495
        %1800 = vmatpush1.bf16.msra.mxu0 %v1494
        %1801 = vmatprep.subr.bf16.mxu0 %v1503
        %1802 = vmatpush1.bf16.msra.mxu0 %v1502
        %1803 = vmatprep.subr.bf16.mxu0 %v1511
        %1804 = vmatpush1.bf16.msra.mxu0 %v1510
        %1805 = vmatprep.subr.bf16.mxu0 %v1519
        %1806 = vmatpush1.bf16.msra.mxu0 %v1518
        %1807 = vmatprep.subr.bf16.mxu0 0
        %1808 = vmatpush1.bf16.msra.mxu0 0
        %1809 = vmatprep.subr.bf16.mxu0 0
        %1810 = vmatpush1.bf16.msra.mxu0 0
        %1811 = vmatprep.subr.bf16.mxu0 0
        %1812 = vmatpush1.bf16.msra.mxu0 0
        %1813 = vmatprep.subr.bf16.mxu0 0
        %1814 = vmatpush1.bf16.msra.mxu0 0
        %1815 = vmatprep.subr.bf16.mxu0 0
        %1816 = vmatpush1.bf16.msra.mxu0 0
        %1817 = vmatprep.subr.bf16.mxu0 0
        %1818 = vmatpush1.bf16.msra.mxu0 0
        %1819 = vmatprep.subr.bf16.mxu0 0
        %1820 = vmatpush1.bf16.msra.mxu0 0
        %1821 = vmatprep.subr.bf16.mxu0 0
        %1822 = vmatpush1.bf16.msra.mxu0 0
        %1823 = vmatprep.mubr.bf16.mxu0 0
        %1824 = vmatmul.mubr.bf16.gmra.mrb[0].mxu0 %v736
        %v1825 = vpop.f32.mrb[0].mxu0
        %v1826 = vadd.f32 %v1753, %v1825
        %v1827 = vpop.f32.mrb[0].mxu0
        %v1828 = vadd.f32 %v1755, %v1827
        %v1829 = vpop.f32.mrb[0].mxu0
        %v1830 = vadd.f32 %v1757, %v1829
        %v1831 = vpop.f32.mrb[0].mxu0
        %v1832 = vadd.f32 %v1759, %v1831
        %1833 = vmatprep.mubr.bf16.mxu0 0
        %1834 = vmatmul.mubr.bf16.gmra.mrb[0].mxu0 %v739
        %v1835 = vpop.f32.mrb[0].mxu0
        %v1836 = vadd.f32 %v1763, %v1835
        %v1837 = vpop.f32.mrb[0].mxu0
        %v1838 = vadd.f32 %v1765, %v1837
        %v1839 = vpop.f32.mrb[0].mxu0
        %v1840 = vadd.f32 %v1767, %v1839
        %v1841 = vpop.f32.mrb[0].mxu0
        %v1842 = vadd.f32 %v1769, %v1841
        %1843 = vmatprep.mubr.bf16.mxu0 0
        %1844 = vmatmul.mubr.bf16.gmra.mrb[0].mxu0 %v742
        %v1845 = vpop.f32.mrb[0].mxu0
        %v1846 = vadd.f32 %v1773, %v1845
        %v1847 = vpop.f32.mrb[0].mxu0
        %v1848 = vadd.f32 %v1775, %v1847
        %v1849 = vpop.f32.mrb[0].mxu0
        %v1850 = vadd.f32 %v1777, %v1849
        %v1851 = vpop.f32.mrb[0].mxu0
        %v1852 = vadd.f32 %v1779, %v1851
        %1853 = vmatprep.mubr.bf16.mxu0 0
        %1854 = vmatmul.mubr.bf16.gmra.mrb[0].mxu0 %v745
        %v1855 = vpop.f32.mrb[0].mxu0
        %v1856 = vadd.f32 %v1783, %v1855
        %v1857 = vpop.f32.mrb[0].mxu0
        %v1858 = vadd.f32 %v1785, %v1857
        %v1859 = vpop.f32.mrb[0].mxu0
        %v1860 = vadd.f32 %v1787, %v1859
        %v1861 = vpop.f32.mrb[0].mxu0
        %v1862 = vadd.f32 %v1789, %v1861
        %1863 = vdwg.mxu0
        %1864 = vmatprep.subr.bf16.mxu0 %v1337
        %1865 = vmatpush1.bf16.msra.mxu0 %v1336
        %1866 = vmatprep.subr.bf16.mxu0 %v1345
        %1867 = vmatpush1.bf16.msra.mxu0 %v1344
        %1868 = vmatprep.subr.bf16.mxu0 %v1353
        %1869 = vmatpush1.bf16.msra.mxu0 %v1352
        %1870 = vmatprep.subr.bf16.mxu0 %v1361
        %1871 = vmatpush1.bf16.msra.mxu0 %v1360
        %1872 = vmatprep.subr.bf16.mxu0 %v1369
        %1873 = vmatpush1.bf16.msra.mxu0 %v1368
        %1874 = vmatprep.subr.bf16.mxu0 %v1377
        %1875 = vmatpush1.bf16.msra.mxu0 %v1376
        %1876 = vmatprep.subr.bf16.mxu0 %v1385
        %1877 = vmatpush1.bf16.msra.mxu0 %v1384
        %1878 = vmatprep.subr.bf16.mxu0 %v1393
        %1879 = vmatpush1.bf16.msra.mxu0 %v1392
        %1880 = vmatprep.subr.bf16.mxu0 %v1401
        %1881 = vmatpush1.bf16.msra.mxu0 %v1400
        %1882 = vmatprep.subr.bf16.mxu0 %v1409
        %1883 = vmatpush1.bf16.msra.mxu0 %v1408
        %1884 = vmatprep.subr.bf16.mxu0 %v1417
        %1885 = vmatpush1.bf16.msra.mxu0 %v1416
        %1886 = vmatprep.subr.bf16.mxu0 %v1425
        %1887 = vmatpush1.bf16.msra.mxu0 %v1424
        %1888 = vmatprep.subr.bf16.mxu0 %v1433
        %1889 = vmatpush1.bf16.msra.mxu0 %v1432
        %1890 = vmatprep.subr.bf16.mxu0 %v1441
        %1891 = vmatpush1.bf16.msra.mxu0 %v1440
        %1892 = vmatprep.subr.bf16.mxu0 %v1449
        %1893 = vmatpush1.bf16.msra.mxu0 %v1448
        %1894 = vmatprep.subr.bf16.mxu0 %v1457
        %1895 = vmatpush1.bf16.msra.mxu0 %v1456
        %1896 = vmatprep.mubr.bf16.mxu0 %v735
        %1897 = vmatmul.mubr.bf16.gmra.mrb[0].mxu0 %v734
        %v1898 = vpop.f32.mrb[0].mxu0
        %v1899 = vadd.f32 %v665, %v1898
        %v1900 = vpop.f32.mrb[0].mxu0
        %v1901 = vadd.f32 %v669, %v1900
        %v1902 = vpop.f32.mrb[0].mxu0
        %v1903 = vadd.f32 %v665, %v1902
        %v1904 = vpop.f32.mrb[0].mxu0
        %v1905 = vadd.f32 %v669, %v1904
        %1906 = vmatprep.mubr.bf16.mxu0 %v738
        %1907 = vmatmul.mubr.bf16.gmra.mrb[0].mxu0 %v737
        %v1908 = vpop.f32.mrb[0].mxu0
        %v1909 = vadd.f32 %v665, %v1908
        %v1910 = vpop.f32.mrb[0].mxu0
        %v1911 = vadd.f32 %v669, %v1910
        %v1912 = vpop.f32.mrb[0].mxu0
        %v1913 = vadd.f32 %v665, %v1912
        %v1914 = vpop.f32.mrb[0].mxu0
        %v1915 = vadd.f32 %v669, %v1914
        %1916 = vmatprep.mubr.bf16.mxu0 %v741
        %1917 = vmatmul.mubr.bf16.gmra.mrb[0].mxu0 %v740
        %v1918 = vpop.f32.mrb[0].mxu0
        %v1919 = vadd.f32 %v665, %v1918
        %v1920 = vpop.f32.mrb[0].mxu0
        %v1921 = vadd.f32 %v669, %v1920
        %v1922 = vpop.f32.mrb[0].mxu0
        %v1923 = vadd.f32 %v665, %v1922
        %v1924 = vpop.f32.mrb[0].mxu0
        %v1925 = vadd.f32 %v669, %v1924
        %1926 = vmatprep.mubr.bf16.mxu0 %v744
        %1927 = vmatmul.mubr.bf16.gmra.mrb[0].mxu0 %v743
        %v1928 = vpop.f32.mrb[0].mxu0
        %v1929 = vadd.f32 %v665, %v1928
        %v1930 = vpop.f32.mrb[0].mxu0
        %v1931 = vadd.f32 %v669, %v1930
        %v1932 = vpop.f32.mrb[0].mxu0
        %v1933 = vadd.f32 %v665, %v1932
        %v1934 = vpop.f32.mrb[0].mxu0
        %v1935 = vadd.f32 %v669, %v1934
        %1936 = vdwg.mxu0
        %1937 = vmatprep.subr.bf16.mxu0 %v1465
        %1938 = vmatpush1.bf16.msra.mxu0 %v1464
        %1939 = vmatprep.subr.bf16.mxu0 %v1473
        %1940 = vmatpush1.bf16.msra.mxu0 %v1472
        %1941 = vmatprep.subr.bf16.mxu0 %v1481
        %1942 = vmatpush1.bf16.msra.mxu0 %v1480
        %1943 = vmatprep.subr.bf16.mxu0 %v1489
        %1944 = vmatpush1.bf16.msra.mxu0 %v1488
        %1945 = vmatprep.subr.bf16.mxu0 %v1497
        %1946 = vmatpush1.bf16.msra.mxu0 %v1496
        %1947 = vmatprep.subr.bf16.mxu0 %v1505
        %1948 = vmatpush1.bf16.msra.mxu0 %v1504
        %1949 = vmatprep.subr.bf16.mxu0 %v1513
        %1950 = vmatpush1.bf16.msra.mxu0 %v1512
        %1951 = vmatprep.subr.bf16.mxu0 %v1521
        %1952 = vmatpush1.bf16.msra.mxu0 %v1520
        %1953 = vmatprep.subr.bf16.mxu0 0
        %1954 = vmatpush1.bf16.msra.mxu0 0
        %1955 = vmatprep.subr.bf16.mxu0 0
        %1956 = vmatpush1.bf16.msra.mxu0 0
        %1957 = vmatprep.subr.bf16.mxu0 0
        %1958 = vmatpush1.bf16.msra.mxu0 0
        %1959 = vmatprep.subr.bf16.mxu0 0
        %1960 = vmatpush1.bf16.msra.mxu0 0
        %1961 = vmatprep.subr.bf16.mxu0 0
        %1962 = vmatpush1.bf16.msra.mxu0 0
        %1963 = vmatprep.subr.bf16.mxu0 0
        %1964 = vmatpush1.bf16.msra.mxu0 0
        %1965 = vmatprep.subr.bf16.mxu0 0
        %1966 = vmatpush1.bf16.msra.mxu0 0
        %1967 = vmatprep.subr.bf16.mxu0 0
        %1968 = vmatpush1.bf16.msra.mxu0 0
        %1969 = vmatprep.mubr.bf16.mxu0 0
        %1970 = vmatmul.mubr.bf16.gmra.mrb[0].mxu0 %v736
        %v1971 = vpop.f32.mrb[0].mxu0
        %v1972 = vadd.f32 %v1899, %v1971
        %v1973 = vpop.f32.mrb[0].mxu0
        %v1974 = vadd.f32 %v1901, %v1973
        %v1975 = vpop.f32.mrb[0].mxu0
        %v1976 = vadd.f32 %v1903, %v1975
        %v1977 = vpop.f32.mrb[0].mxu0
        %v1978 = vadd.f32 %v1905, %v1977
        %1979 = vmatprep.mubr.bf16.mxu0 0
        %1980 = vmatmul.mubr.bf16.gmra.mrb[0].mxu0 %v739
        %v1981 = vpop.f32.mrb[0].mxu0
        %v1982 = vadd.f32 %v1909, %v1981
        %v1983 = vpop.f32.mrb[0].mxu0
        %v1984 = vadd.f32 %v1911, %v1983
        %v1985 = vpop.f32.mrb[0].mxu0
        %v1986 = vadd.f32 %v1913, %v1985
        %v1987 = vpop.f32.mrb[0].mxu0
        %v1988 = vadd.f32 %v1915, %v1987
        %1989 = vmatprep.mubr.bf16.mxu0 0
        %1990 = vmatmul.mubr.bf16.gmra.mrb[0].mxu0 %v742
        %v1991 = vpop.f32.mrb[0].mxu0
        %v1992 = vadd.f32 %v1919, %v1991
        %v1993 = vpop.f32.mrb[0].mxu0
        %v1994 = vadd.f32 %v1921, %v1993
        %v1995 = vpop.f32.mrb[0].mxu0
        %v1996 = vadd.f32 %v1923, %v1995
        %v1997 = vpop.f32.mrb[0].mxu0
        %v1998 = vadd.f32 %v1925, %v1997
        %1999 = vmatprep.mubr.bf16.mxu0 0
        %2000 = vmatmul.mubr.bf16.gmra.mrb[0].mxu0 %v745
        %v2001 = vpop.f32.mrb[0].mxu0
        %v2002 = vadd.f32 %v1929, %v2001
        %v2003 = vpop.f32.mrb[0].mxu0
        %v2004 = vadd.f32 %v1931, %v2003
        %v2005 = vpop.f32.mrb[0].mxu0
        %v2006 = vadd.f32 %v1933, %v2005
        %v2007 = vpop.f32.mrb[0].mxu0
        %v2008 = vadd.f32 %v1935, %v2007
        %2009 = vdwg.mxu0
        %2010 = vmatprep.subr.bf16.mxu0 %v1339
        %2011 = vmatpush1.bf16.msra.mxu0 %v1338
        %2012 = vmatprep.subr.bf16.mxu0 %v1347
        %2013 = vmatpush1.bf16.msra.mxu0 %v1346
        %2014 = vmatprep.subr.bf16.mxu0 %v1355
        %2015 = vmatpush1.bf16.msra.mxu0 %v1354
        %2016 = vmatprep.subr.bf16.mxu0 %v1363
        %2017 = vmatpush1.bf16.msra.mxu0 %v1362
        %2018 = vmatprep.subr.bf16.mxu0 %v1371
        %2019 = vmatpush1.bf16.msra.mxu0 %v1370
        %2020 = vmatprep.subr.bf16.mxu0 %v1379
        %2021 = vmatpush1.bf16.msra.mxu0 %v1378
        %2022 = vmatprep.subr.bf16.mxu0 %v1387
        %2023 = vmatpush1.bf16.msra.mxu0 %v1386
        %2024 = vmatprep.subr.bf16.mxu0 %v1395
        %2025 = vmatpush1.bf16.msra.mxu0 %v1394
        %2026 = vmatprep.subr.bf16.mxu0 %v1403
        %2027 = vmatpush1.bf16.msra.mxu0 %v1402
        %2028 = vmatprep.subr.bf16.mxu0 %v1411
        %2029 = vmatpush1.bf16.msra.mxu0 %v1410
        %2030 = vmatprep.subr.bf16.mxu0 %v1419
        %2031 = vmatpush1.bf16.msra.mxu0 %v1418
        %2032 = vmatprep.subr.bf16.mxu0 %v1427
        %2033 = vmatpush1.bf16.msra.mxu0 %v1426
        %2034 = vmatprep.subr.bf16.mxu0 %v1435
        %2035 = vmatpush1.bf16.msra.mxu0 %v1434
        %2036 = vmatprep.subr.bf16.mxu0 %v1443
        %2037 = vmatpush1.bf16.msra.mxu0 %v1442
        %2038 = vmatprep.subr.bf16.mxu0 %v1451
        %2039 = vmatpush1.bf16.msra.mxu0 %v1450
        %2040 = vmatprep.subr.bf16.mxu0 %v1459
        %2041 = vmatpush1.bf16.msra.mxu0 %v1458
        %2042 = vmatprep.mubr.bf16.mxu0 %v735
        %2043 = vmatmul.mubr.bf16.gmra.mrb[0].mxu0 %v734
        %v2044 = vpop.f32.mrb[0].mxu0
        %v2045 = vadd.f32 %v673, %v2044
        %v2046 = vpop.f32.mrb[0].mxu0
        %v2047 = vadd.f32 %v677, %v2046
        %v2048 = vpop.f32.mrb[0].mxu0
        %v2049 = vadd.f32 %v673, %v2048
        %v2050 = vpop.f32.mrb[0].mxu0
        %v2051 = vadd.f32 %v677, %v2050
        %2052 = vmatprep.mubr.bf16.mxu0 %v738
        %2053 = vmatmul.mubr.bf16.gmra.mrb[0].mxu0 %v737
        %v2054 = vpop.f32.mrb[0].mxu0
        %v2055 = vadd.f32 %v673, %v2054
        %v2056 = vpop.f32.mrb[0].mxu0
        %v2057 = vadd.f32 %v677, %v2056
        %v2058 = vpop.f32.mrb[0].mxu0
        %v2059 = vadd.f32 %v673, %v2058
        %v2060 = vpop.f32.mrb[0].mxu0
        %v2061 = vadd.f32 %v677, %v2060
        %2062 = vmatprep.mubr.bf16.mxu0 %v741
        %2063 = vmatmul.mubr.bf16.gmra.mrb[0].mxu0 %v740
        %v2064 = vpop.f32.mrb[0].mxu0
        %v2065 = vadd.f32 %v673, %v2064
        %v2066 = vpop.f32.mrb[0].mxu0
        %v2067 = vadd.f32 %v677, %v2066
        %v2068 = vpop.f32.mrb[0].mxu0
        %v2069 = vadd.f32 %v673, %v2068
        %v2070 = vpop.f32.mrb[0].mxu0
        %v2071 = vadd.f32 %v677, %v2070
        %2072 = vmatprep.mubr.bf16.mxu0 %v744
        %2073 = vmatmul.mubr.bf16.gmra.mrb[0].mxu0 %v743
        %v2074 = vpop.f32.mrb[0].mxu0
        %v2075 = vadd.f32 %v673, %v2074
        %v2076 = vpop.f32.mrb[0].mxu0
        %v2077 = vadd.f32 %v677, %v2076
        %v2078 = vpop.f32.mrb[0].mxu0
        %v2079 = vadd.f32 %v673, %v2078
        %v2080 = vpop.f32.mrb[0].mxu0
        %v2081 = vadd.f32 %v677, %v2080
        %2082 = vdwg.mxu0
        %2083 = vmatprep.subr.bf16.mxu0 %v1467
        %2084 = vmatpush1.bf16.msra.mxu0 %v1466
        %2085 = vmatprep.subr.bf16.mxu0 %v1475
        %2086 = vmatpush1.bf16.msra.mxu0 %v1474
        %2087 = vmatprep.subr.bf16.mxu0 %v1483
        %2088 = vmatpush1.bf16.msra.mxu0 %v1482
        %2089 = vmatprep.subr.bf16.mxu0 %v1491
        %2090 = vmatpush1.bf16.msra.mxu0 %v1490
        %2091 = vmatprep.subr.bf16.mxu0 %v1499
        %2092 = vmatpush1.bf16.msra.mxu0 %v1498
        %2093 = vmatprep.subr.bf16.mxu0 %v1507
        %2094 = vmatpush1.bf16.msra.mxu0 %v1506
        %2095 = vmatprep.subr.bf16.mxu0 %v1515
        %2096 = vmatpush1.bf16.msra.mxu0 %v1514
        %2097 = vmatprep.subr.bf16.mxu0 %v1523
        %2098 = vmatpush1.bf16.msra.mxu0 %v1522
        %2099 = vmatprep.subr.bf16.mxu0 0
        %2100 = vmatpush1.bf16.msra.mxu0 0
        %2101 = vmatprep.subr.bf16.mxu0 0
        %2102 = vmatpush1.bf16.msra.mxu0 0
        %2103 = vmatprep.subr.bf16.mxu0 0
        %2104 = vmatpush1.bf16.msra.mxu0 0
        %2105 = vmatprep.subr.bf16.mxu0 0
        %2106 = vmatpush1.bf16.msra.mxu0 0
        %2107 = vmatprep.subr.bf16.mxu0 0
        %2108 = vmatpush1.bf16.msra.mxu0 0
        %2109 = vmatprep.subr.bf16.mxu0 0
        %2110 = vmatpush1.bf16.msra.mxu0 0
        %2111 = vmatprep.subr.bf16.mxu0 0
        %2112 = vmatpush1.bf16.msra.mxu0 0
        %2113 = vmatprep.subr.bf16.mxu0 0
        %2114 = vmatpush1.bf16.msra.mxu0 0
        %2115 = vmatprep.mubr.bf16.mxu0 0
        %2116 = vmatmul.mubr.bf16.gmra.mrb[0].mxu0 %v736
        %v2117 = vpop.f32.mrb[0].mxu0
        %v2118 = vadd.f32 %v2045, %v2117
        %v2119 = vpop.f32.mrb[0].mxu0
        %v2120 = vadd.f32 %v2047, %v2119
        %v2121 = vpop.f32.mrb[0].mxu0
        %v2122 = vadd.f32 %v2049, %v2121
        %v2123 = vpop.f32.mrb[0].mxu0
        %v2124 = vadd.f32 %v2051, %v2123
        %2125 = vmatprep.mubr.bf16.mxu0 0
        %2126 = vmatmul.mubr.bf16.gmra.mrb[0].mxu0 %v739
        %v2127 = vpop.f32.mrb[0].mxu0
        %v2128 = vadd.f32 %v2055, %v2127
        %v2129 = vpop.f32.mrb[0].mxu0
        %v2130 = vadd.f32 %v2057, %v2129
        %v2131 = vpop.f32.mrb[0].mxu0
        %v2132 = vadd.f32 %v2059, %v2131
        %v2133 = vpop.f32.mrb[0].mxu0
        %v2134 = vadd.f32 %v2061, %v2133
        %2135 = vmatprep.mubr.bf16.mxu0 0
        %2136 = vmatmul.mubr.bf16.gmra.mrb[0].mxu0 %v742
        %v2137 = vpop.f32.mrb[0].mxu0
        %v2138 = vadd.f32 %v2065, %v2137
        %v2139 = vpop.f32.mrb[0].mxu0
        %v2140 = vadd.f32 %v2067, %v2139
        %v2141 = vpop.f32.mrb[0].mxu0
        %v2142 = vadd.f32 %v2069, %v2141
        %v2143 = vpop.f32.mrb[0].mxu0
        %v2144 = vadd.f32 %v2071, %v2143
        %2145 = vmatprep.mubr.bf16.mxu0 0
        %2146 = vmatmul.mubr.bf16.gmra.mrb[0].mxu0 %v745
        %v2147 = vpop.f32.mrb[0].mxu0
        %v2148 = vadd.f32 %v2075, %v2147
        %v2149 = vpop.f32.mrb[0].mxu0
        %v2150 = vadd.f32 %v2077, %v2149
        %v2151 = vpop.f32.mrb[0].mxu0
        %v2152 = vadd.f32 %v2079, %v2151
        %v2153 = vpop.f32.mrb[0].mxu0
        %v2154 = vadd.f32 %v2081, %v2153
        %2155 = vdwg.mxu0
        %2156 = vmatprep.subr.bf16.mxu0 %v1341
        %2157 = vmatpush1.bf16.msra.mxu0 %v1340
        %2158 = vmatprep.subr.bf16.mxu0 %v1349
        %2159 = vmatpush1.bf16.msra.mxu0 %v1348
        %2160 = vmatprep.subr.bf16.mxu0 %v1357
        %2161 = vmatpush1.bf16.msra.mxu0 %v1356
        %2162 = vmatprep.subr.bf16.mxu0 %v1365
        %2163 = vmatpush1.bf16.msra.mxu0 %v1364
        %2164 = vmatprep.subr.bf16.mxu0 %v1373
        %2165 = vmatpush1.bf16.msra.mxu0 %v1372
        %2166 = vmatprep.subr.bf16.mxu0 %v1381
        %2167 = vmatpush1.bf16.msra.mxu0 %v1380
        %2168 = vmatprep.subr.bf16.mxu0 %v1389
        %2169 = vmatpush1.bf16.msra.mxu0 %v1388
        %2170 = vmatprep.subr.bf16.mxu0 %v1397
        %2171 = vmatpush1.bf16.msra.mxu0 %v1396
        %2172 = vmatprep.subr.bf16.mxu0 %v1405
        %2173 = vmatpush1.bf16.msra.mxu0 %v1404
        %2174 = vmatprep.subr.bf16.mxu0 %v1413
        %2175 = vmatpush1.bf16.msra.mxu0 %v1412
        %2176 = vmatprep.subr.bf16.mxu0 %v1421
        %2177 = vmatpush1.bf16.msra.mxu0 %v1420
        %2178 = vmatprep.subr.bf16.mxu0 %v1429
        %2179 = vmatpush1.bf16.msra.mxu0 %v1428
        %2180 = vmatprep.subr.bf16.mxu0 %v1437
        %2181 = vmatpush1.bf16.msra.mxu0 %v1436
        %2182 = vmatprep.subr.bf16.mxu0 %v1445
        %2183 = vmatpush1.bf16.msra.mxu0 %v1444
        %2184 = vmatprep.subr.bf16.mxu0 %v1453
        %2185 = vmatpush1.bf16.msra.mxu0 %v1452
        %2186 = vmatprep.subr.bf16.mxu0 %v1461
        %2187 = vmatpush1.bf16.msra.mxu0 %v1460
        %2188 = vmatprep.mubr.bf16.mxu0 %v735
        %2189 = vmatmul.mubr.bf16.gmra.mrb[0].mxu0 %v734
        %v2190 = vpop.f32.mrb[0].mxu0
        %v2191 = vadd.f32 %v681, %v2190
        %v2192 = vpop.f32.mrb[0].mxu0
        %v2193 = vadd.f32 %v685, %v2192
        %v2194 = vpop.f32.mrb[0].mxu0
        %v2195 = vadd.f32 %v681, %v2194
        %v2196 = vpop.f32.mrb[0].mxu0
        %v2197 = vadd.f32 %v685, %v2196
        %2198 = vmatprep.mubr.bf16.mxu0 %v738
        %2199 = vmatmul.mubr.bf16.gmra.mrb[0].mxu0 %v737
        %v2200 = vpop.f32.mrb[0].mxu0
        %v2201 = vadd.f32 %v681, %v2200
        %v2202 = vpop.f32.mrb[0].mxu0
        %v2203 = vadd.f32 %v685, %v2202
        %v2204 = vpop.f32.mrb[0].mxu0
        %v2205 = vadd.f32 %v681, %v2204
        %v2206 = vpop.f32.mrb[0].mxu0
        %v2207 = vadd.f32 %v685, %v2206
        %2208 = vmatprep.mubr.bf16.mxu0 %v741
        %2209 = vmatmul.mubr.bf16.gmra.mrb[0].mxu0 %v740
        %v2210 = vpop.f32.mrb[0].mxu0
        %v2211 = vadd.f32 %v681, %v2210
        %v2212 = vpop.f32.mrb[0].mxu0
        %v2213 = vadd.f32 %v685, %v2212
        %v2214 = vpop.f32.mrb[0].mxu0
        %v2215 = vadd.f32 %v681, %v2214
        %v2216 = vpop.f32.mrb[0].mxu0
        %v2217 = vadd.f32 %v685, %v2216
        %2218 = vmatprep.mubr.bf16.mxu0 %v744
        %2219 = vmatmul.mubr.bf16.gmra.mrb[0].mxu0 %v743
        %v2220 = vpop.f32.mrb[0].mxu0
        %v2221 = vadd.f32 %v681, %v2220
        %v2222 = vpop.f32.mrb[0].mxu0
        %v2223 = vadd.f32 %v685, %v2222
        %v2224 = vpop.f32.mrb[0].mxu0
        %v2225 = vadd.f32 %v681, %v2224
        %v2226 = vpop.f32.mrb[0].mxu0
        %v2227 = vadd.f32 %v685, %v2226
        %2228 = vdwg.mxu0
        %2229 = vmatprep.subr.bf16.mxu0 %v1469
        %2230 = vmatpush1.bf16.msra.mxu0 %v1468
        %2231 = vmatprep.subr.bf16.mxu0 %v1477
        %2232 = vmatpush1.bf16.msra.mxu0 %v1476
        %2233 = vmatprep.subr.bf16.mxu0 %v1485
        %2234 = vmatpush1.bf16.msra.mxu0 %v1484
        %2235 = vmatprep.subr.bf16.mxu0 %v1493
        %2236 = vmatpush1.bf16.msra.mxu0 %v1492
        %2237 = vmatprep.subr.bf16.mxu0 %v1501
        %2238 = vmatpush1.bf16.msra.mxu0 %v1500
        %2239 = vmatprep.subr.bf16.mxu0 %v1509
        %2240 = vmatpush1.bf16.msra.mxu0 %v1508
        %2241 = vmatprep.subr.bf16.mxu0 %v1517
        %2242 = vmatpush1.bf16.msra.mxu0 %v1516
        %2243 = vmatprep.subr.bf16.mxu0 %v1525
        %2244 = vmatpush1.bf16.msra.mxu0 %v1524
        %2245 = vmatprep.subr.bf16.mxu0 0
        %2246 = vmatpush1.bf16.msra.mxu0 0
        %2247 = vmatprep.subr.bf16.mxu0 0
        %2248 = vmatpush1.bf16.msra.mxu0 0
        %2249 = vmatprep.subr.bf16.mxu0 0
        %2250 = vmatpush1.bf16.msra.mxu0 0
        %2251 = vmatprep.subr.bf16.mxu0 0
        %2252 = vmatpush1.bf16.msra.mxu0 0
        %2253 = vmatprep.subr.bf16.mxu0 0
        %2254 = vmatpush1.bf16.msra.mxu0 0
        %2255 = vmatprep.subr.bf16.mxu0 0
        %2256 = vmatpush1.bf16.msra.mxu0 0
        %2257 = vmatprep.subr.bf16.mxu0 0
        %2258 = vmatpush1.bf16.msra.mxu0 0
        %2259 = vmatprep.subr.bf16.mxu0 0
        %2260 = vmatpush1.bf16.msra.mxu0 0
        %2261 = vmatprep.mubr.bf16.mxu0 0
        %2262 = vmatmul.mubr.bf16.gmra.mrb[0].mxu0 %v736
        %v2263 = vpop.f32.mrb[0].mxu0
        %v2264 = vadd.f32 %v2191, %v2263
        %v2265 = vpop.f32.mrb[0].mxu0
        %v2266 = vadd.f32 %v2193, %v2265
        %v2267 = vpop.f32.mrb[0].mxu0
        %v2268 = vadd.f32 %v2195, %v2267
        %v2269 = vpop.f32.mrb[0].mxu0
        %v2270 = vadd.f32 %v2197, %v2269
        %2271 = vmatprep.mubr.bf16.mxu0 0
        %2272 = vmatmul.mubr.bf16.gmra.mrb[0].mxu0 %v739
        %v2273 = vpop.f32.mrb[0].mxu0
        %v2274 = vadd.f32 %v2201, %v2273
        %v2275 = vpop.f32.mrb[0].mxu0
        %v2276 = vadd.f32 %v2203, %v2275
        %v2277 = vpop.f32.mrb[0].mxu0
        %v2278 = vadd.f32 %v2205, %v2277
        %v2279 = vpop.f32.mrb[0].mxu0
        %v2280 = vadd.f32 %v2207, %v2279
        %2281 = vmatprep.mubr.bf16.mxu0 0
        %2282 = vmatmul.mubr.bf16.gmra.mrb[0].mxu0 %v742
        %v2283 = vpop.f32.mrb[0].mxu0
        %v2284 = vadd.f32 %v2211, %v2283
        %v2285 = vpop.f32.mrb[0].mxu0
        %v2286 = vadd.f32 %v2213, %v2285
        %v2287 = vpop.f32.mrb[0].mxu0
        %v2288 = vadd.f32 %v2215, %v2287
        %v2289 = vpop.f32.mrb[0].mxu0
        %v2290 = vadd.f32 %v2217, %v2289
        %2291 = vmatprep.mubr.bf16.mxu0 0
        %2292 = vmatmul.mubr.bf16.gmra.mrb[0].mxu0 %v745
        %v2293 = vpop.f32.mrb[0].mxu0
        %v2294 = vadd.f32 %v2221, %v2293
        %v2295 = vpop.f32.mrb[0].mxu0
        %v2296 = vadd.f32 %v2223, %v2295
        %v2297 = vpop.f32.mrb[0].mxu0
        %v2298 = vadd.f32 %v2225, %v2297
        %v2299 = vpop.f32.mrb[0].mxu0
        %v2300 = vadd.f32 %v2227, %v2299
        %2301 = vdwg.mxu0
        %2302 = vst [vmem:[#allocation4] sm:$0xff] %v1826
        %2303 = vst [vmem:[#allocation4 + $0x8] sm:$0xff] %v1828
        %2304 = vst [vmem:[#allocation4 + $0x10] sm:$0xff] %v1972
        %2305 = vst [vmem:[#allocation4 + $0x18] sm:$0xff] %v1974
        %2306 = vst [vmem:[#allocation4 + $0x20] sm:$0xff] %v2118
        %2307 = vst [vmem:[#allocation4 + $0x28] sm:$0xff] %v2120
        %2308 = vst [vmem:[#allocation4 + $0x30] sm:$0xff] %v2264
        %2309 = vst [vmem:[#allocation4 + $0x38] sm:$0xff] %v2266
        %2310 = vst [vmem:[#allocation4 + $0x40] sm:$0xff] %v1830
        %2311 = vst [vmem:[#allocation4 + $0x48] sm:$0xff] %v1832
        %2312 = vst [vmem:[#allocation4 + $0x50] sm:$0xff] %v1976
        %2313 = vst [vmem:[#allocation4 + $0x58] sm:$0xff] %v1978
        %2314 = vst [vmem:[#allocation4 + $0x60] sm:$0xff] %v2122
        %2315 = vst [vmem:[#allocation4 + $0x68] sm:$0xff] %v2124
        %2316 = vst [vmem:[#allocation4 + $0x70] sm:$0xff] %v2268
        %2317 = vst [vmem:[#allocation4 + $0x78] sm:$0xff] %v2270
        %2318 = vst [vmem:[#allocation4 + $0x80] sm:$0xff] %v1836
        %2319 = vst [vmem:[#allocation4 + $0x88] sm:$0xff] %v1838
        %2320 = vst [vmem:[#allocation4 + $0x90] sm:$0xff] %v1982
        %2321 = vst [vmem:[#allocation4 + $0x98] sm:$0xff] %v1984
        %2322 = vst [vmem:[#allocation4 + $0xa0] sm:$0xff] %v2128
        %2323 = vst [vmem:[#allocation4 + $0xa8] sm:$0xff] %v2130
        %2324 = vst [vmem:[#allocation4 + $0xb0] sm:$0xff] %v2274
        %2325 = vst [vmem:[#allocation4 + $0xb8] sm:$0xff] %v2276
        %2326 = vst [vmem:[#allocation4 + $0xc0] sm:$0xff] %v1840
        %2327 = vst [vmem:[#allocation4 + $0xc8] sm:$0xff] %v1842
        %2328 = vst [vmem:[#allocation4 + $0xd0] sm:$0xff] %v1986
        %2329 = vst [vmem:[#allocation4 + $0xd8] sm:$0xff] %v1988
        %2330 = vst [vmem:[#allocation4 + $0xe0] sm:$0xff] %v2132
        %2331 = vst [vmem:[#allocation4 + $0xe8] sm:$0xff] %v2134
        %2332 = vst [vmem:[#allocation4 + $0xf0] sm:$0xff] %v2278
        %2333 = vst [vmem:[#allocation4 + $0xf8] sm:$0xff] %v2280
        %2334 = vst [vmem:[#allocation4 + $0x100] sm:$0xff] %v1846
        %2335 = vst [vmem:[#allocation4 + $0x108] sm:$0xff] %v1848
        %2336 = vst [vmem:[#allocation4 + $0x110] sm:$0xff] %v1992
        %2337 = vst [vmem:[#allocation4 + $0x118] sm:$0xff] %v1994
        %2338 = vst [vmem:[#allocation4 + $0x120] sm:$0xff] %v2138
        %2339 = vst [vmem:[#allocation4 + $0x128] sm:$0xff] %v2140
        %2340 = vst [vmem:[#allocation4 + $0x130] sm:$0xff] %v2284
        %2341 = vst [vmem:[#allocation4 + $0x138] sm:$0xff] %v2286
        %2342 = vst [vmem:[#allocation4 + $0x140] sm:$0xff] %v1850
        %2343 = vst [vmem:[#allocation4 + $0x148] sm:$0xff] %v1852
        %2344 = vst [vmem:[#allocation4 + $0x150] sm:$0xff] %v1996
        %2345 = vst [vmem:[#allocation4 + $0x158] sm:$0xff] %v1998
        %2346 = vst [vmem:[#allocation4 + $0x160] sm:$0xff] %v2142
        %2347 = vst [vmem:[#allocation4 + $0x168] sm:$0xff] %v2144
        %2348 = vst [vmem:[#allocation4 + $0x170] sm:$0xff] %v2288
        %2349 = vst [vmem:[#allocation4 + $0x178] sm:$0xff] %v2290
        %2350 = vst [vmem:[#allocation4 + $0x180] sm:$0xff] %v1856
        %2351 = vst [vmem:[#allocation4 + $0x188] sm:$0xff] %v1858
        %2352 = vst [vmem:[#allocation4 + $0x190] sm:$0xff] %v2002
        %2353 = vst [vmem:[#allocation4 + $0x198] sm:$0xff] %v2004
        %2354 = vst [vmem:[#allocation4 + $0x1a0] sm:$0xff] %v2148
        %2355 = vst [vmem:[#allocation4 + $0x1a8] sm:$0xff] %v2150
        %2356 = vst [vmem:[#allocation4 + $0x1b0] sm:$0xff] %v2294
        %2357 = vst [vmem:[#allocation4 + $0x1b8] sm:$0xff] %v2296
        %2358 = vst [vmem:[#allocation4 + $0x1c0] sm:$0xff] %v1860
        %2359 = vst [vmem:[#allocation4 + $0x1c8] sm:$0xff] %v1862
        %2360 = vst [vmem:[#allocation4 + $0x1d0] sm:$0xff] %v2006
        %2361 = vst [vmem:[#allocation4 + $0x1d8] sm:$0xff] %v2008
        %2362 = vst [vmem:[#allocation4 + $0x1e0] sm:$0xff] %v2152
        %2363 = vst [vmem:[#allocation4 + $0x1e8] sm:$0xff] %v2154
        %2364 = vst [vmem:[#allocation4 + $0x1f0] sm:$0xff] %v2298
        %2365 = vst [vmem:[#allocation4 + $0x1f8] sm:$0xff] %v2300
        %v2366 = vld [vmem:[#allocation2] sm:$0xff]
        %v2367 = vld [vmem:[#allocation2 + $0x8] sm:$0xff]
        %v2368 = vld [vmem:[#allocation3] sm:$0xff]
        %v2369 = vld [vmem:[#allocation3 + $0x8] sm:$0xff]
        %v2370 = vld [vmem:[#allocation4] sm:$0xff]
        %v2371 = vld [vmem:[#allocation4 + $0x8] sm:$0xff]
        %v2372 = vld [vmem:[#allocation4 + $0x10] sm:$0xff]
        %v2373 = vld [vmem:[#allocation4 + $0x18] sm:$0xff]
        %v2374 = vld [vmem:[#allocation4 + $0x20] sm:$0xff]
        %v2375 = vld [vmem:[#allocation4 + $0x28] sm:$0xff]
        %v2376 = vld [vmem:[#allocation4 + $0x30] sm:$0xff]
        %v2377 = vld [vmem:[#allocation4 + $0x38] sm:$0xff]
        %v2378 = vpack.c.bf16 %v2366, %v2366
        %v2379 = vpack.c.bf16 %v2367, %v2367
        %v2380 = vld [vmem:[%s2] sm:$0xff]
        %v2381 = vld [vmem:[%s2 + $0x8] sm:$0xff]
        %v2382 = vld [vmem:[%s2 + $0x10] sm:$0xff]
        %v2383 = vld [vmem:[%s2 + $0x18] sm:$0xff]
        %v2384 = vld [vmem:[%s2 + $0x20] sm:$0xff]
        %v2385 = vld [vmem:[%s2 + $0x28] sm:$0xff]
        %v2386 = vld [vmem:[%s2 + $0x30] sm:$0xff]
        %v2387 = vld [vmem:[%s2 + $0x38] sm:$0xff]
        %v2388 = vld [vmem:[%s2 + $0x40] sm:$0xff]
        %v2389 = vld [vmem:[%s2 + $0x48] sm:$0xff]
        %v2390 = vld [vmem:[%s2 + $0x50] sm:$0xff]
        %v2391 = vld [vmem:[%s2 + $0x58] sm:$0xff]
        %v2392 = vld [vmem:[%s2 + $0x60] sm:$0xff]
        %v2393 = vld [vmem:[%s2 + $0x68] sm:$0xff]
        %v2394 = vld [vmem:[%s2 + $0x70] sm:$0xff]
        %v2395 = vld [vmem:[%s2 + $0x78] sm:$0xff]
        %v2396 = vld [vmem:[%s2 + $0x80] sm:$0xff]
        %v2397 = vld [vmem:[%s2 + $0x88] sm:$0xff]
        %v2398 = vld [vmem:[%s2 + $0x90] sm:$0xff]
        %v2399 = vld [vmem:[%s2 + $0x98] sm:$0xff]
        %v2400 = vld [vmem:[%s2 + $0xa0] sm:$0xff]
        %v2401 = vld [vmem:[%s2 + $0xa8] sm:$0xff]
        %v2402 = vld [vmem:[%s2 + $0xb0] sm:$0xff]
        %v2403 = vld [vmem:[%s2 + $0xb8] sm:$0xff]
        %v2404 = vld [vmem:[%s2 + $0xc0] sm:$0xff]
        %v2405 = vld [vmem:[%s2 + $0xc8] sm:$0xff]
        %v2406 = vld [vmem:[%s2 + $0xd0] sm:$0xff]
        %v2407 = vld [vmem:[%s2 + $0xd8] sm:$0xff]
        %v2408 = vld [vmem:[%s2 + $0xe0] sm:$0xff]
        %v2409 = vld [vmem:[%s2 + $0xe8] sm:$0xff]
        %v2410 = vld [vmem:[%s2 + $0xf0] sm:$0xff]
        %v2411 = vld [vmem:[%s2 + $0xf8] sm:$0xff]
        %v2412 = vld [vmem:[%s2 + $0x100] sm:$0xff]
        %v2413 = vld [vmem:[%s2 + $0x108] sm:$0xff]
        %v2414 = vld [vmem:[%s2 + $0x110] sm:$0xff]
        %v2415 = vld [vmem:[%s2 + $0x118] sm:$0xff]
        %v2416 = vld [vmem:[%s2 + $0x120] sm:$0xff]
        %v2417 = vld [vmem:[%s2 + $0x128] sm:$0xff]
        %v2418 = vld [vmem:[%s2 + $0x130] sm:$0xff]
        %v2419 = vld [vmem:[%s2 + $0x138] sm:$0xff]
        %v2420 = vld [vmem:[%s2 + $0x140] sm:$0xff]
        %v2421 = vld [vmem:[%s2 + $0x148] sm:$0xff]
        %v2422 = vld [vmem:[%s2 + $0x150] sm:$0xff]
        %v2423 = vld [vmem:[%s2 + $0x158] sm:$0xff]
        %v2424 = vld [vmem:[%s2 + $0x160] sm:$0xff]
        %v2425 = vld [vmem:[%s2 + $0x168] sm:$0xff]
        %v2426 = vld [vmem:[%s2 + $0x170] sm:$0xff]
        %v2427 = vld [vmem:[%s2 + $0x178] sm:$0xff]
        %v2428 = vld [vmem:[%s2 + $0x180] sm:$0xff]
        %v2429 = vld [vmem:[%s2 + $0x188] sm:$0xff]
        %v2430 = vld [vmem:[%s2 + $0x190] sm:$0xff]
        %v2431 = vld [vmem:[%s2 + $0x198] sm:$0xff]
        %v2432 = vld [vmem:[%s2 + $0x1a0] sm:$0xff]
        %v2433 = vld [vmem:[%s2 + $0x1a8] sm:$0xff]
        %v2434 = vld [vmem:[%s2 + $0x1b0] sm:$0xff]
        %v2435 = vld [vmem:[%s2 + $0x1b8] sm:$0xff]
        %v2436 = vld [vmem:[%s2 + $0x1c0] sm:$0xff]
        %v2437 = vld [vmem:[%s2 + $0x1c8] sm:$0xff]
        %v2438 = vld [vmem:[%s2 + $0x1d0] sm:$0xff]
        %v2439 = vld [vmem:[%s2 + $0x1d8] sm:$0xff]
        %v2440 = vld [vmem:[%s2 + $0x1e0] sm:$0xff]
        %v2441 = vld [vmem:[%s2 + $0x1e8] sm:$0xff]
        %v2442 = vld [vmem:[%s2 + $0x1f0] sm:$0xff]
        %v2443 = vld [vmem:[%s2 + $0x1f8] sm:$0xff]
        %v2444 = vld [vmem:[%s2 + $0x200] sm:$0xff]
        %v2445 = vld [vmem:[%s2 + $0x208] sm:$0xff]
        %v2446 = vld [vmem:[%s2 + $0x210] sm:$0xff]
        %v2447 = vld [vmem:[%s2 + $0x218] sm:$0xff]
        %v2448 = vld [vmem:[%s2 + $0x220] sm:$0xff]
        %v2449 = vld [vmem:[%s2 + $0x228] sm:$0xff]
        %v2450 = vld [vmem:[%s2 + $0x230] sm:$0xff]
        %v2451 = vld [vmem:[%s2 + $0x238] sm:$0xff]
        %v2452 = vld [vmem:[%s2 + $0x240] sm:$0xff]
        %v2453 = vld [vmem:[%s2 + $0x248] sm:$0xff]
        %v2454 = vld [vmem:[%s2 + $0x250] sm:$0xff]
        %v2455 = vld [vmem:[%s2 + $0x258] sm:$0xff]
        %v2456 = vld [vmem:[%s2 + $0x260] sm:$0xff]
        %v2457 = vld [vmem:[%s2 + $0x268] sm:$0xff]
        %v2458 = vld [vmem:[%s2 + $0x270] sm:$0xff]
        %v2459 = vld [vmem:[%s2 + $0x278] sm:$0xff]
        %v2460 = vld [vmem:[%s2 + $0x280] sm:$0xff]
        %v2461 = vld [vmem:[%s2 + $0x288] sm:$0xff]
        %v2462 = vld [vmem:[%s2 + $0x290] sm:$0xff]
        %v2463 = vld [vmem:[%s2 + $0x298] sm:$0xff]
        %v2464 = vld [vmem:[%s2 + $0x2a0] sm:$0xff]
        %v2465 = vld [vmem:[%s2 + $0x2a8] sm:$0xff]
        %v2466 = vld [vmem:[%s2 + $0x2b0] sm:$0xff]
        %v2467 = vld [vmem:[%s2 + $0x2b8] sm:$0xff]
        %v2468 = vld [vmem:[%s2 + $0x2c0] sm:$0xff]
        %v2469 = vld [vmem:[%s2 + $0x2c8] sm:$0xff]
        %v2470 = vld [vmem:[%s2 + $0x2d0] sm:$0xff]
        %v2471 = vld [vmem:[%s2 + $0x2d8] sm:$0xff]
        %v2472 = vld [vmem:[%s2 + $0x2e0] sm:$0xff]
        %v2473 = vld [vmem:[%s2 + $0x2e8] sm:$0xff]
        %v2474 = vld [vmem:[%s2 + $0x2f0] sm:$0xff]
        %v2475 = vld [vmem:[%s2 + $0x2f8] sm:$0xff]
        %v2476 = vld [vmem:[%s2 + $0x300] sm:$0xff]
        %v2477 = vld [vmem:[%s2 + $0x308] sm:$0xff]
        %v2478 = vld [vmem:[%s2 + $0x310] sm:$0xff]
        %v2479 = vld [vmem:[%s2 + $0x318] sm:$0xff]
        %v2480 = vld [vmem:[%s2 + $0x320] sm:$0xff]
        %v2481 = vld [vmem:[%s2 + $0x328] sm:$0xff]
        %v2482 = vld [vmem:[%s2 + $0x330] sm:$0xff]
        %v2483 = vld [vmem:[%s2 + $0x338] sm:$0xff]
        %v2484 = vld [vmem:[%s2 + $0x340] sm:$0xff]
        %v2485 = vld [vmem:[%s2 + $0x348] sm:$0xff]
        %v2486 = vld [vmem:[%s2 + $0x350] sm:$0xff]
        %v2487 = vld [vmem:[%s2 + $0x358] sm:$0xff]
        %v2488 = vld [vmem:[%s2 + $0x360] sm:$0xff]
        %v2489 = vld [vmem:[%s2 + $0x368] sm:$0xff]
        %v2490 = vld [vmem:[%s2 + $0x370] sm:$0xff]
        %v2491 = vld [vmem:[%s2 + $0x378] sm:$0xff]
        %v2492 = vld [vmem:[%s2 + $0x380] sm:$0xff]
        %v2493 = vld [vmem:[%s2 + $0x388] sm:$0xff]
        %v2494 = vld [vmem:[%s2 + $0x390] sm:$0xff]
        %v2495 = vld [vmem:[%s2 + $0x398] sm:$0xff]
        %v2496 = vld [vmem:[%s2 + $0x3a0] sm:$0xff]
        %v2497 = vld [vmem:[%s2 + $0x3a8] sm:$0xff]
        %v2498 = vld [vmem:[%s2 + $0x3b0] sm:$0xff]
        %v2499 = vld [vmem:[%s2 + $0x3b8] sm:$0xff]
        %v2500 = vld [vmem:[%s2 + $0x3c0] sm:$0xff]
        %v2501 = vld [vmem:[%s2 + $0x3c8] sm:$0xff]
        %v2502 = vld [vmem:[%s2 + $0x3d0] sm:$0xff]
        %v2503 = vld [vmem:[%s2 + $0x3d8] sm:$0xff]
        %v2504 = vld [vmem:[%s2 + $0x3e0] sm:$0xff]
        %v2505 = vld [vmem:[%s2 + $0x3e8] sm:$0xff]
        %v2506 = vld [vmem:[%s2 + $0x3f0] sm:$0xff]
        %v2507 = vld [vmem:[%s2 + $0x3f8] sm:$0xff]
        %v2636 = vunpack.c.l.b16 %v2380
        %v2637 = vunpack.c.h.b16 %v2380
        %v2638 = vunpack.c.l.b16 %v2381
        %v2639 = vunpack.c.h.b16 %v2381
        %v2640 = vunpack.c.l.b16 %v2382
        %v2641 = vunpack.c.h.b16 %v2382
        %v2642 = vunpack.c.l.b16 %v2383
        %v2643 = vunpack.c.h.b16 %v2383
        %v2644 = vunpack.c.l.b16 %v2384
        %v2645 = vunpack.c.h.b16 %v2384
        %v2646 = vunpack.c.l.b16 %v2385
        %v2647 = vunpack.c.h.b16 %v2385
        %v2648 = vunpack.c.l.b16 %v2386
        %v2649 = vunpack.c.h.b16 %v2386
        %v2650 = vunpack.c.l.b16 %v2387
        %v2651 = vunpack.c.h.b16 %v2387
        %v2652 = vunpack.c.l.b16 %v2388
        %v2653 = vunpack.c.h.b16 %v2388
        %v2654 = vunpack.c.l.b16 %v2389
        %v2655 = vunpack.c.h.b16 %v2389
        %v2656 = vunpack.c.l.b16 %v2390
        %v2657 = vunpack.c.h.b16 %v2390
        %v2658 = vunpack.c.l.b16 %v2391
        %v2659 = vunpack.c.h.b16 %v2391
        %v2660 = vunpack.c.l.b16 %v2392
        %v2661 = vunpack.c.h.b16 %v2392
        %v2662 = vunpack.c.l.b16 %v2393
        %v2663 = vunpack.c.h.b16 %v2393
        %v2664 = vunpack.c.l.b16 %v2394
        %v2665 = vunpack.c.h.b16 %v2394
        %v2666 = vunpack.c.l.b16 %v2395
        %v2667 = vunpack.c.h.b16 %v2395
        %v2668 = vunpack.c.l.b16 %v2396
        %v2669 = vunpack.c.h.b16 %v2396
        %v2670 = vunpack.c.l.b16 %v2397
        %v2671 = vunpack.c.h.b16 %v2397
        %v2672 = vunpack.c.l.b16 %v2398
        %v2673 = vunpack.c.h.b16 %v2398
        %v2674 = vunpack.c.l.b16 %v2399
        %v2675 = vunpack.c.h.b16 %v2399
        %v2676 = vunpack.c.l.b16 %v2400
        %v2677 = vunpack.c.h.b16 %v2400
        %v2678 = vunpack.c.l.b16 %v2401
        %v2679 = vunpack.c.h.b16 %v2401
        %v2680 = vunpack.c.l.b16 %v2402
        %v2681 = vunpack.c.h.b16 %v2402
        %v2682 = vunpack.c.l.b16 %v2403
        %v2683 = vunpack.c.h.b16 %v2403
        %v2684 = vunpack.c.l.b16 %v2404
        %v2685 = vunpack.c.h.b16 %v2404
        %v2686 = vunpack.c.l.b16 %v2405
        %v2687 = vunpack.c.h.b16 %v2405
        %v2688 = vunpack.c.l.b16 %v2406
        %v2689 = vunpack.c.h.b16 %v2406
        %v2690 = vunpack.c.l.b16 %v2407
        %v2691 = vunpack.c.h.b16 %v2407
        %v2692 = vunpack.c.l.b16 %v2408
        %v2693 = vunpack.c.h.b16 %v2408
        %v2694 = vunpack.c.l.b16 %v2409
        %v2695 = vunpack.c.h.b16 %v2409
        %v2696 = vunpack.c.l.b16 %v2410
        %v2697 = vunpack.c.h.b16 %v2410
        %v2698 = vunpack.c.l.b16 %v2411
        %v2699 = vunpack.c.h.b16 %v2411
        %v2700 = vunpack.c.l.b16 %v2412
        %v2701 = vunpack.c.h.b16 %v2412
        %v2702 = vunpack.c.l.b16 %v2413
        %v2703 = vunpack.c.h.b16 %v2413
        %v2704 = vunpack.c.l.b16 %v2414
        %v2705 = vunpack.c.h.b16 %v2414
        %v2706 = vunpack.c.l.b16 %v2415
        %v2707 = vunpack.c.h.b16 %v2415
        %v2708 = vunpack.c.l.b16 %v2416
        %v2709 = vunpack.c.h.b16 %v2416
        %v2710 = vunpack.c.l.b16 %v2417
        %v2711 = vunpack.c.h.b16 %v2417
        %v2712 = vunpack.c.l.b16 %v2418
        %v2713 = vunpack.c.h.b16 %v2418
        %v2714 = vunpack.c.l.b16 %v2419
        %v2715 = vunpack.c.h.b16 %v2419
        %v2716 = vunpack.c.l.b16 %v2420
        %v2717 = vunpack.c.h.b16 %v2420
        %v2718 = vunpack.c.l.b16 %v2421
        %v2719 = vunpack.c.h.b16 %v2421
        %v2720 = vunpack.c.l.b16 %v2422
        %v2721 = vunpack.c.h.b16 %v2422
        %v2722 = vunpack.c.l.b16 %v2423
        %v2723 = vunpack.c.h.b16 %v2423
        %v2724 = vunpack.c.l.b16 %v2424
        %v2725 = vunpack.c.h.b16 %v2424
        %v2726 = vunpack.c.l.b16 %v2425
        %v2727 = vunpack.c.h.b16 %v2425
        %v2728 = vunpack.c.l.b16 %v2426
        %v2729 = vunpack.c.h.b16 %v2426
        %v2730 = vunpack.c.l.b16 %v2427
        %v2731 = vunpack.c.h.b16 %v2427
        %v2732 = vunpack.c.l.b16 %v2428
        %v2733 = vunpack.c.h.b16 %v2428
        %v2734 = vunpack.c.l.b16 %v2429
        %v2735 = vunpack.c.h.b16 %v2429
        %v2736 = vunpack.c.l.b16 %v2430
        %v2737 = vunpack.c.h.b16 %v2430
        %v2738 = vunpack.c.l.b16 %v2431
        %v2739 = vunpack.c.h.b16 %v2431
        %v2740 = vunpack.c.l.b16 %v2432
        %v2741 = vunpack.c.h.b16 %v2432
        %v2742 = vunpack.c.l.b16 %v2433
        %v2743 = vunpack.c.h.b16 %v2433
        %v2744 = vunpack.c.l.b16 %v2434
        %v2745 = vunpack.c.h.b16 %v2434
        %v2746 = vunpack.c.l.b16 %v2435
        %v2747 = vunpack.c.h.b16 %v2435
        %v2748 = vunpack.c.l.b16 %v2436
        %v2749 = vunpack.c.h.b16 %v2436
        %v2750 = vunpack.c.l.b16 %v2437
        %v2751 = vunpack.c.h.b16 %v2437
        %v2752 = vunpack.c.l.b16 %v2438
        %v2753 = vunpack.c.h.b16 %v2438
        %v2754 = vunpack.c.l.b16 %v2439
        %v2755 = vunpack.c.h.b16 %v2439
        %v2756 = vunpack.c.l.b16 %v2440
        %v2757 = vunpack.c.h.b16 %v2440
        %v2758 = vunpack.c.l.b16 %v2441
        %v2759 = vunpack.c.h.b16 %v2441
        %v2760 = vunpack.c.l.b16 %v2442
        %v2761 = vunpack.c.h.b16 %v2442
        %v2762 = vunpack.c.l.b16 %v2443
        %v2763 = vunpack.c.h.b16 %v2443
        %v2764 = vunpack.c.l.b16 %v2444
        %v2765 = vunpack.c.h.b16 %v2444
        %v2766 = vunpack.c.l.b16 %v2445
        %v2767 = vunpack.c.h.b16 %v2445
        %v2768 = vunpack.c.l.b16 %v2446
        %v2769 = vunpack.c.h.b16 %v2446
        %v2770 = vunpack.c.l.b16 %v2447
        %v2771 = vunpack.c.h.b16 %v2447
        %v2772 = vunpack.c.l.b16 %v2448
        %v2773 = vunpack.c.h.b16 %v2448
        %v2774 = vunpack.c.l.b16 %v2449
        %v2775 = vunpack.c.h.b16 %v2449
        %v2776 = vunpack.c.l.b16 %v2450
        %v2777 = vunpack.c.h.b16 %v2450
        %v2778 = vunpack.c.l.b16 %v2451
        %v2779 = vunpack.c.h.b16 %v2451
        %v2780 = vunpack.c.l.b16 %v2452
        %v2781 = vunpack.c.h.b16 %v2452
        %v2782 = vunpack.c.l.b16 %v2453
        %v2783 = vunpack.c.h.b16 %v2453
        %v2784 = vunpack.c.l.b16 %v2454
        %v2785 = vunpack.c.h.b16 %v2454
        %v2786 = vunpack.c.l.b16 %v2455
        %v2787 = vunpack.c.h.b16 %v2455
        %v2788 = vunpack.c.l.b16 %v2456
        %v2789 = vunpack.c.h.b16 %v2456
        %v2790 = vunpack.c.l.b16 %v2457
        %v2791 = vunpack.c.h.b16 %v2457
        %v2792 = vunpack.c.l.b16 %v2458
        %v2793 = vunpack.c.h.b16 %v2458
        %v2794 = vunpack.c.l.b16 %v2459
        %v2795 = vunpack.c.h.b16 %v2459
        %v2796 = vunpack.c.l.b16 %v2460
        %v2797 = vunpack.c.h.b16 %v2460
        %v2798 = vunpack.c.l.b16 %v2461
        %v2799 = vunpack.c.h.b16 %v2461
        %v2800 = vunpack.c.l.b16 %v2462
        %v2801 = vunpack.c.h.b16 %v2462
        %v2802 = vunpack.c.l.b16 %v2463
        %v2803 = vunpack.c.h.b16 %v2463
        %v2804 = vunpack.c.l.b16 %v2464
        %v2805 = vunpack.c.h.b16 %v2464
        %v2806 = vunpack.c.l.b16 %v2465
        %v2807 = vunpack.c.h.b16 %v2465
        %v2808 = vunpack.c.l.b16 %v2466
        %v2809 = vunpack.c.h.b16 %v2466
        %v2810 = vunpack.c.l.b16 %v2467
        %v2811 = vunpack.c.h.b16 %v2467
        %v2812 = vunpack.c.l.b16 %v2468
        %v2813 = vunpack.c.h.b16 %v2468
        %v2814 = vunpack.c.l.b16 %v2469
        %v2815 = vunpack.c.h.b16 %v2469
        %v2816 = vunpack.c.l.b16 %v2470
        %v2817 = vunpack.c.h.b16 %v2470
        %v2818 = vunpack.c.l.b16 %v2471
        %v2819 = vunpack.c.h.b16 %v2471
        %v2820 = vunpack.c.l.b16 %v2472
        %v2821 = vunpack.c.h.b16 %v2472
        %v2822 = vunpack.c.l.b16 %v2473
        %v2823 = vunpack.c.h.b16 %v2473
        %v2824 = vunpack.c.l.b16 %v2474
        %v2825 = vunpack.c.h.b16 %v2474
        %v2826 = vunpack.c.l.b16 %v2475
        %v2827 = vunpack.c.h.b16 %v2475
        %v2828 = vunpack.c.l.b16 %v2476
        %v2829 = vunpack.c.h.b16 %v2476
        %v2830 = vunpack.c.l.b16 %v2477
        %v2831 = vunpack.c.h.b16 %v2477
        %v2832 = vunpack.c.l.b16 %v2478
        %v2833 = vunpack.c.h.b16 %v2478
        %v2834 = vunpack.c.l.b16 %v2479
        %v2835 = vunpack.c.h.b16 %v2479
        %v2836 = vunpack.c.l.b16 %v2480
        %v2837 = vunpack.c.h.b16 %v2480
        %v2838 = vunpack.c.l.b16 %v2481
        %v2839 = vunpack.c.h.b16 %v2481
        %v2840 = vunpack.c.l.b16 %v2482
        %v2841 = vunpack.c.h.b16 %v2482
        %v2842 = vunpack.c.l.b16 %v2483
        %v2843 = vunpack.c.h.b16 %v2483
        %v2844 = vunpack.c.l.b16 %v2484
        %v2845 = vunpack.c.h.b16 %v2484
        %v2846 = vunpack.c.l.b16 %v2485
        %v2847 = vunpack.c.h.b16 %v2485
        %v2848 = vunpack.c.l.b16 %v2486
        %v2849 = vunpack.c.h.b16 %v2486
        %v2850 = vunpack.c.l.b16 %v2487
        %v2851 = vunpack.c.h.b16 %v2487
        %v2852 = vunpack.c.l.b16 %v2488
        %v2853 = vunpack.c.h.b16 %v2488
        %v2854 = vunpack.c.l.b16 %v2489
        %v2855 = vunpack.c.h.b16 %v2489
        %v2856 = vunpack.c.l.b16 %v2490
        %v2857 = vunpack.c.h.b16 %v2490
        %v2858 = vunpack.c.l.b16 %v2491
        %v2859 = vunpack.c.h.b16 %v2491
        %v2860 = vunpack.c.l.b16 %v2492
        %v2861 = vunpack.c.h.b16 %v2492
        %v2862 = vunpack.c.l.b16 %v2493
        %v2863 = vunpack.c.h.b16 %v2493
        %v2864 = vunpack.c.l.b16 %v2494
        %v2865 = vunpack.c.h.b16 %v2494
        %v2866 = vunpack.c.l.b16 %v2495
        %v2867 = vunpack.c.h.b16 %v2495
        %v2868 = vunpack.c.l.b16 %v2496
        %v2869 = vunpack.c.h.b16 %v2496
        %v2870 = vunpack.c.l.b16 %v2497
        %v2871 = vunpack.c.h.b16 %v2497
        %v2872 = vunpack.c.l.b16 %v2498
        %v2873 = vunpack.c.h.b16 %v2498
        %v2874 = vunpack.c.l.b16 %v2499
        %v2875 = vunpack.c.h.b16 %v2499
        %v2876 = vunpack.c.l.b16 %v2500
        %v2877 = vunpack.c.h.b16 %v2500
        %v2878 = vunpack.c.l.b16 %v2501
        %v2879 = vunpack.c.h.b16 %v2501
        %v2880 = vunpack.c.l.b16 %v2502
        %v2881 = vunpack.c.h.b16 %v2502
        %v2882 = vunpack.c.l.b16 %v2503
        %v2883 = vunpack.c.h.b16 %v2503
        %v2884 = vunpack.c.l.b16 %v2504
        %v2885 = vunpack.c.h.b16 %v2504
        %v2886 = vunpack.c.l.b16 %v2505
        %v2887 = vunpack.c.h.b16 %v2505
        %v2888 = vunpack.c.l.b16 %v2506
        %v2889 = vunpack.c.h.b16 %v2506
        %v2890 = vunpack.c.l.b16 %v2507
        %v2891 = vunpack.c.h.b16 %v2507
        %v2892 = vpack.c.b16 %v2644, %v2636
        %v2893 = vpack.c.b16 %v2645, %v2637
        %v2894 = vpack.c.b16 %v2646, %v2638
        %v2895 = vpack.c.b16 %v2647, %v2639
        %v2896 = vpack.c.b16 %v2648, %v2640
        %v2897 = vpack.c.b16 %v2649, %v2641
        %v2898 = vpack.c.b16 %v2650, %v2642
        %v2899 = vpack.c.b16 %v2651, %v2643
        %v2900 = vpack.c.b16 %v2660, %v2652
        %v2901 = vpack.c.b16 %v2661, %v2653
        %v2902 = vpack.c.b16 %v2662, %v2654
        %v2903 = vpack.c.b16 %v2663, %v2655
        %v2904 = vpack.c.b16 %v2664, %v2656
        %v2905 = vpack.c.b16 %v2665, %v2657
        %v2906 = vpack.c.b16 %v2666, %v2658
        %v2907 = vpack.c.b16 %v2667, %v2659
        %v2908 = vpack.c.b16 %v2676, %v2668
        %v2909 = vpack.c.b16 %v2677, %v2669
        %v2910 = vpack.c.b16 %v2678, %v2670
        %v2911 = vpack.c.b16 %v2679, %v2671
        %v2912 = vpack.c.b16 %v2680, %v2672
        %v2913 = vpack.c.b16 %v2681, %v2673
        %v2914 = vpack.c.b16 %v2682, %v2674
        %v2915 = vpack.c.b16 %v2683, %v2675
        %v2916 = vpack.c.b16 %v2692, %v2684
        %v2917 = vpack.c.b16 %v2693, %v2685
        %v2918 = vpack.c.b16 %v2694, %v2686
        %v2919 = vpack.c.b16 %v2695, %v2687
        %v2920 = vpack.c.b16 %v2696, %v2688
        %v2921 = vpack.c.b16 %v2697, %v2689
        %v2922 = vpack.c.b16 %v2698, %v2690
        %v2923 = vpack.c.b16 %v2699, %v2691
        %v2924 = vpack.c.b16 %v2708, %v2700
        %v2925 = vpack.c.b16 %v2709, %v2701
        %v2926 = vpack.c.b16 %v2710, %v2702
        %v2927 = vpack.c.b16 %v2711, %v2703
        %v2928 = vpack.c.b16 %v2712, %v2704
        %v2929 = vpack.c.b16 %v2713, %v2705
        %v2930 = vpack.c.b16 %v2714, %v2706
        %v2931 = vpack.c.b16 %v2715, %v2707
        %v2932 = vpack.c.b16 %v2724, %v2716
        %v2933 = vpack.c.b16 %v2725, %v2717
        %v2934 = vpack.c.b16 %v2726, %v2718
        %v2935 = vpack.c.b16 %v2727, %v2719
        %v2936 = vpack.c.b16 %v2728, %v2720
        %v2937 = vpack.c.b16 %v2729, %v2721
        %v2938 = vpack.c.b16 %v2730, %v2722
        %v2939 = vpack.c.b16 %v2731, %v2723
        %v2940 = vpack.c.b16 %v2740, %v2732
        %v2941 = vpack.c.b16 %v2741, %v2733
        %v2942 = vpack.c.b16 %v2742, %v2734
        %v2943 = vpack.c.b16 %v2743, %v2735
        %v2944 = vpack.c.b16 %v2744, %v2736
        %v2945 = vpack.c.b16 %v2745, %v2737
        %v2946 = vpack.c.b16 %v2746, %v2738
        %v2947 = vpack.c.b16 %v2747, %v2739
        %v2948 = vpack.c.b16 %v2756, %v2748
        %v2949 = vpack.c.b16 %v2757, %v2749
        %v2950 = vpack.c.b16 %v2758, %v2750
        %v2951 = vpack.c.b16 %v2759, %v2751
        %v2952 = vpack.c.b16 %v2760, %v2752
        %v2953 = vpack.c.b16 %v2761, %v2753
        %v2954 = vpack.c.b16 %v2762, %v2754
        %v2955 = vpack.c.b16 %v2763, %v2755
        %v2956 = vpack.c.b16 %v2772, %v2764
        %v2957 = vpack.c.b16 %v2773, %v2765
        %v2958 = vpack.c.b16 %v2774, %v2766
        %v2959 = vpack.c.b16 %v2775, %v2767
        %v2960 = vpack.c.b16 %v2776, %v2768
        %v2961 = vpack.c.b16 %v2777, %v2769
        %v2962 = vpack.c.b16 %v2778, %v2770
        %v2963 = vpack.c.b16 %v2779, %v2771
        %v2964 = vpack.c.b16 %v2788, %v2780
        %v2965 = vpack.c.b16 %v2789, %v2781
        %v2966 = vpack.c.b16 %v2790, %v2782
        %v2967 = vpack.c.b16 %v2791, %v2783
        %v2968 = vpack.c.b16 %v2792, %v2784
        %v2969 = vpack.c.b16 %v2793, %v2785
        %v2970 = vpack.c.b16 %v2794, %v2786
        %v2971 = vpack.c.b16 %v2795, %v2787
        %v2972 = vpack.c.b16 %v2804, %v2796
        %v2973 = vpack.c.b16 %v2805, %v2797
        %v2974 = vpack.c.b16 %v2806, %v2798
        %v2975 = vpack.c.b16 %v2807, %v2799
        %v2976 = vpack.c.b16 %v2808, %v2800
        %v2977 = vpack.c.b16 %v2809, %v2801
        %v2978 = vpack.c.b16 %v2810, %v2802
        %v2979 = vpack.c.b16 %v2811, %v2803
        %v2980 = vpack.c.b16 %v2820, %v2812
        %v2981 = vpack.c.b16 %v2821, %v2813
        %v2982 = vpack.c.b16 %v2822, %v2814
        %v2983 = vpack.c.b16 %v2823, %v2815
        %v2984 = vpack.c.b16 %v2824, %v2816
        %v2985 = vpack.c.b16 %v2825, %v2817
        %v2986 = vpack.c.b16 %v2826, %v2818
        %v2987 = vpack.c.b16 %v2827, %v2819
        %v2988 = vpack.c.b16 %v2836, %v2828
        %v2989 = vpack.c.b16 %v2837, %v2829
        %v2990 = vpack.c.b16 %v2838, %v2830
        %v2991 = vpack.c.b16 %v2839, %v2831
        %v2992 = vpack.c.b16 %v2840, %v2832
        %v2993 = vpack.c.b16 %v2841, %v2833
        %v2994 = vpack.c.b16 %v2842, %v2834
        %v2995 = vpack.c.b16 %v2843, %v2835
        %v2996 = vpack.c.b16 %v2852, %v2844
        %v2997 = vpack.c.b16 %v2853, %v2845
        %v2998 = vpack.c.b16 %v2854, %v2846
        %v2999 = vpack.c.b16 %v2855, %v2847
        %v3000 = vpack.c.b16 %v2856, %v2848
        %v3001 = vpack.c.b16 %v2857, %v2849
        %v3002 = vpack.c.b16 %v2858, %v2850
        %v3003 = vpack.c.b16 %v2859, %v2851
        %v3004 = vpack.c.b16 %v2868, %v2860
        %v3005 = vpack.c.b16 %v2869, %v2861
        %v3006 = vpack.c.b16 %v2870, %v2862
        %v3007 = vpack.c.b16 %v2871, %v2863
        %v3008 = vpack.c.b16 %v2872, %v2864
        %v3009 = vpack.c.b16 %v2873, %v2865
        %v3010 = vpack.c.b16 %v2874, %v2866
        %v3011 = vpack.c.b16 %v2875, %v2867
        %v3012 = vpack.c.b16 %v2884, %v2876
        %v3013 = vpack.c.b16 %v2885, %v2877
        %v3014 = vpack.c.b16 %v2886, %v2878
        %v3015 = vpack.c.b16 %v2887, %v2879
        %v3016 = vpack.c.b16 %v2888, %v2880
        %v3017 = vpack.c.b16 %v2889, %v2881
        %v3018 = vpack.c.b16 %v2890, %v2882
        %v3019 = vpack.c.b16 %v2891, %v2883
        %3148 = vmatprep.subr.bf16.mxu0 %v2893
        %3149 = vmatpush1.bf16.msra.mxu0 %v2892
        %3150 = vmatprep.subr.bf16.mxu0 %v2901
        %3151 = vmatpush1.bf16.msra.mxu0 %v2900
        %3152 = vmatprep.subr.bf16.mxu0 %v2909
        %3153 = vmatpush1.bf16.msra.mxu0 %v2908
        %3154 = vmatprep.subr.bf16.mxu0 %v2917
        %3155 = vmatpush1.bf16.msra.mxu0 %v2916
        %3156 = vmatprep.subr.bf16.mxu0 %v2925
        %3157 = vmatpush1.bf16.msra.mxu0 %v2924
        %3158 = vmatprep.subr.bf16.mxu0 %v2933
        %3159 = vmatpush1.bf16.msra.mxu0 %v2932
        %3160 = vmatprep.subr.bf16.mxu0 %v2941
        %3161 = vmatpush1.bf16.msra.mxu0 %v2940
        %3162 = vmatprep.subr.bf16.mxu0 %v2949
        %3163 = vmatpush1.bf16.msra.mxu0 %v2948
        %3164 = vmatprep.subr.bf16.mxu0 %v2957
        %3165 = vmatpush1.bf16.msra.mxu0 %v2956
        %3166 = vmatprep.subr.bf16.mxu0 %v2965
        %3167 = vmatpush1.bf16.msra.mxu0 %v2964
        %3168 = vmatprep.subr.bf16.mxu0 %v2973
        %3169 = vmatpush1.bf16.msra.mxu0 %v2972
        %3170 = vmatprep.subr.bf16.mxu0 %v2981
        %3171 = vmatpush1.bf16.msra.mxu0 %v2980
        %3172 = vmatprep.subr.bf16.mxu0 %v2989
        %3173 = vmatpush1.bf16.msra.mxu0 %v2988
        %3174 = vmatprep.subr.bf16.mxu0 %v2997
        %3175 = vmatpush1.bf16.msra.mxu0 %v2996
        %3176 = vmatprep.subr.bf16.mxu0 %v3005
        %3177 = vmatpush1.bf16.msra.mxu0 %v3004
        %3178 = vmatprep.subr.bf16.mxu0 %v3013
        %3179 = vmatpush1.bf16.msra.mxu0 %v3012
        %3180 = vmatprep.mubr.bf16.mxu0 %v2379
        %3181 = vmatmul.mubr.bf16.gmra.mrb[0].mxu0 %v2378
        %v3182 = vpop.f32.mrb[0].mxu0
        %v3183 = vadd.f32 0.0, %v3182
        %v3184 = vpop.f32.mrb[0].mxu0
        %v3185 = vadd.f32 0.0, %v3184
        %v3186 = vpop.f32.mrb[0].mxu0
        %v3187 = vpop.f32.mrb[0].mxu0
        %3188 = vdwg.mxu0
        %3189 = vmatprep.subr.bf16.mxu0 %v2895
        %3190 = vmatpush1.bf16.msra.mxu0 %v2894
        %3191 = vmatprep.subr.bf16.mxu0 %v2903
        %3192 = vmatpush1.bf16.msra.mxu0 %v2902
        %3193 = vmatprep.subr.bf16.mxu0 %v2911
        %3194 = vmatpush1.bf16.msra.mxu0 %v2910
        %3195 = vmatprep.subr.bf16.mxu0 %v2919
        %3196 = vmatpush1.bf16.msra.mxu0 %v2918
        %3197 = vmatprep.subr.bf16.mxu0 %v2927
        %3198 = vmatpush1.bf16.msra.mxu0 %v2926
        %3199 = vmatprep.subr.bf16.mxu0 %v2935
        %3200 = vmatpush1.bf16.msra.mxu0 %v2934
        %3201 = vmatprep.subr.bf16.mxu0 %v2943
        %3202 = vmatpush1.bf16.msra.mxu0 %v2942
        %3203 = vmatprep.subr.bf16.mxu0 %v2951
        %3204 = vmatpush1.bf16.msra.mxu0 %v2950
        %3205 = vmatprep.subr.bf16.mxu0 %v2959
        %3206 = vmatpush1.bf16.msra.mxu0 %v2958
        %3207 = vmatprep.subr.bf16.mxu0 %v2967
        %3208 = vmatpush1.bf16.msra.mxu0 %v2966
        %3209 = vmatprep.subr.bf16.mxu0 %v2975
        %3210 = vmatpush1.bf16.msra.mxu0 %v2974
        %3211 = vmatprep.subr.bf16.mxu0 %v2983
        %3212 = vmatpush1.bf16.msra.mxu0 %v2982
        %3213 = vmatprep.subr.bf16.mxu0 %v2991
        %3214 = vmatpush1.bf16.msra.mxu0 %v2990
        %3215 = vmatprep.subr.bf16.mxu0 %v2999
        %3216 = vmatpush1.bf16.msra.mxu0 %v2998
        %3217 = vmatprep.subr.bf16.mxu0 %v3007
        %3218 = vmatpush1.bf16.msra.mxu0 %v3006
        %3219 = vmatprep.subr.bf16.mxu0 %v3015
        %3220 = vmatpush1.bf16.msra.mxu0 %v3014
        %3221 = vmatprep.mubr.bf16.mxu0 %v2379
        %3222 = vmatmul.mubr.bf16.gmra.mrb[0].mxu0 %v2378
        %v3223 = vpop.f32.mrb[0].mxu0
        %v3224 = vadd.f32 0.0, %v3223
        %v3225 = vpop.f32.mrb[0].mxu0
        %v3226 = vadd.f32 0.0, %v3225
        %v3227 = vpop.f32.mrb[0].mxu0
        %v3228 = vpop.f32.mrb[0].mxu0
        %3229 = vdwg.mxu0
        %3230 = vmatprep.subr.bf16.mxu0 %v2897
        %3231 = vmatpush1.bf16.msra.mxu0 %v2896
        %3232 = vmatprep.subr.bf16.mxu0 %v2905
        %3233 = vmatpush1.bf16.msra.mxu0 %v2904
        %3234 = vmatprep.subr.bf16.mxu0 %v2913
        %3235 = vmatpush1.bf16.msra.mxu0 %v2912
        %3236 = vmatprep.subr.bf16.mxu0 %v2921
        %3237 = vmatpush1.bf16.msra.mxu0 %v2920
        %3238 = vmatprep.subr.bf16.mxu0 %v2929
        %3239 = vmatpush1.bf16.msra.mxu0 %v2928
        %3240 = vmatprep.subr.bf16.mxu0 %v2937
        %3241 = vmatpush1.bf16.msra.mxu0 %v2936
        %3242 = vmatprep.subr.bf16.mxu0 %v2945
        %3243 = vmatpush1.bf16.msra.mxu0 %v2944
        %3244 = vmatprep.subr.bf16.mxu0 %v2953
        %3245 = vmatpush1.bf16.msra.mxu0 %v2952
        %3246 = vmatprep.subr.bf16.mxu0 %v2961
        %3247 = vmatpush1.bf16.msra.mxu0 %v2960
        %3248 = vmatprep.subr.bf16.mxu0 %v2969
        %3249 = vmatpush1.bf16.msra.mxu0 %v2968
        %3250 = vmatprep.subr.bf16.mxu0 %v2977
        %3251 = vmatpush1.bf16.msra.mxu0 %v2976
        %3252 = vmatprep.subr.bf16.mxu0 %v2985
        %3253 = vmatpush1.bf16.msra.mxu0 %v2984
        %3254 = vmatprep.subr.bf16.mxu0 %v2993
        %3255 = vmatpush1.bf16.msra.mxu0 %v2992
        %3256 = vmatprep.subr.bf16.mxu0 %v3001
        %3257 = vmatpush1.bf16.msra.mxu0 %v3000
        %3258 = vmatprep.subr.bf16.mxu0 %v3009
        %3259 = vmatpush1.bf16.msra.mxu0 %v3008
        %3260 = vmatprep.subr.bf16.mxu0 %v3017
        %3261 = vmatpush1.bf16.msra.mxu0 %v3016
        %3262 = vmatprep.mubr.bf16.mxu0 %v2379
        %3263 = vmatmul.mubr.bf16.gmra.mrb[0].mxu0 %v2378
        %v3264 = vpop.f32.mrb[0].mxu0
        %v3265 = vadd.f32 0.0, %v3264
        %v3266 = vpop.f32.mrb[0].mxu0
        %v3267 = vadd.f32 0.0, %v3266
        %v3268 = vpop.f32.mrb[0].mxu0
        %v3269 = vpop.f32.mrb[0].mxu0
        %3270 = vdwg.mxu0
        %3271 = vmatprep.subr.bf16.mxu0 %v2899
        %3272 = vmatpush1.bf16.msra.mxu0 %v2898
        %3273 = vmatprep.subr.bf16.mxu0 %v2907
        %3274 = vmatpush1.bf16.msra.mxu0 %v2906
        %3275 = vmatprep.subr.bf16.mxu0 %v2915
        %3276 = vmatpush1.bf16.msra.mxu0 %v2914
        %3277 = vmatprep.subr.bf16.mxu0 %v2923
        %3278 = vmatpush1.bf16.msra.mxu0 %v2922
        %3279 = vmatprep.subr.bf16.mxu0 %v2931
        %3280 = vmatpush1.bf16.msra.mxu0 %v2930
        %3281 = vmatprep.subr.bf16.mxu0 %v2939
        %3282 = vmatpush1.bf16.msra.mxu0 %v2938
        %3283 = vmatprep.subr.bf16.mxu0 %v2947
        %3284 = vmatpush1.bf16.msra.mxu0 %v2946
        %3285 = vmatprep.subr.bf16.mxu0 %v2955
        %3286 = vmatpush1.bf16.msra.mxu0 %v2954
        %3287 = vmatprep.subr.bf16.mxu0 %v2963
        %3288 = vmatpush1.bf16.msra.mxu0 %v2962
        %3289 = vmatprep.subr.bf16.mxu0 %v2971
        %3290 = vmatpush1.bf16.msra.mxu0 %v2970
        %3291 = vmatprep.subr.bf16.mxu0 %v2979
        %3292 = vmatpush1.bf16.msra.mxu0 %v2978
        %3293 = vmatprep.subr.bf16.mxu0 %v2987
        %3294 = vmatpush1.bf16.msra.mxu0 %v2986
        %3295 = vmatprep.subr.bf16.mxu0 %v2995
        %3296 = vmatpush1.bf16.msra.mxu0 %v2994
        %3297 = vmatprep.subr.bf16.mxu0 %v3003
        %3298 = vmatpush1.bf16.msra.mxu0 %v3002
        %3299 = vmatprep.subr.bf16.mxu0 %v3011
        %3300 = vmatpush1.bf16.msra.mxu0 %v3010
        %3301 = vmatprep.subr.bf16.mxu0 %v3019
        %3302 = vmatpush1.bf16.msra.mxu0 %v3018
        %3303 = vmatprep.mubr.bf16.mxu0 %v2379
        %3304 = vmatmul.mubr.bf16.gmra.mrb[0].mxu0 %v2378
        %v3305 = vpop.f32.mrb[0].mxu0
        %v3306 = vadd.f32 0.0, %v3305
        %v3307 = vpop.f32.mrb[0].mxu0
        %v3308 = vadd.f32 0.0, %v3307
        %v3309 = vpop.f32.mrb[0].mxu0
        %v3310 = vpop.f32.mrb[0].mxu0
        %3311 = vdwg.mxu0
        %v3312 = vadd.f32 %v2370, %v3183
        %v3313 = vadd.f32 %v2371, %v3185
        %v3314 = vadd.f32 %v2372, %v3224
        %v3315 = vadd.f32 %v2373, %v3226
        %v3316 = vadd.f32 %v2374, %v3265
        %v3317 = vadd.f32 %v2375, %v3267
        %v3318 = vadd.f32 %v2376, %v3306
        %v3319 = vadd.f32 %v2377, %v3308
        %v3320 = vxor.u32 %v3312, 2147483648
        %v3321 = vxor.u32 %v3313, 2147483648
        %v3322 = vmul.f32 %v3320, 1.442695
        %v3323 = vpow.pop %v3322
        %v3324 = vmul.f32 %v3321, 1.442695
        %v3325 = vpow.pop %v3324
        %v3326 = vadd.f32 %v3323, 1.0
        %v3327 = vadd.f32 %v3325, 1.0
        %v3328 = vrcp.pop %v3326
        %v3329 = vmul.f32 1.0, %v3328
        %v3330 = vrcp.pop %v3327
        %v3331 = vmul.f32 1.0, %v3330
        %v3332 = vxor.u32 %v3314, 2147483648
        %v3333 = vxor.u32 %v3315, 2147483648
        %v3334 = vmul.f32 %v3332, 1.442695
        %v3335 = vpow.pop %v3334
        %v3336 = vmul.f32 %v3333, 1.442695
        %v3337 = vpow.pop %v3336
        %v3338 = vadd.f32 %v3335, 1.0
        %v3339 = vadd.f32 %v3337, 1.0
        %v3340 = vrcp.pop %v3338
        %v3341 = vmul.f32 1.0, %v3340
        %v3342 = vrcp.pop %v3339
        %v3343 = vmul.f32 1.0, %v3342
        %v3344 = vtanh.pop %v3316
        %v3345 = vtanh.pop %v3317
        %v3346 = vxor.u32 %v3318, 2147483648
        %v3347 = vxor.u32 %v3319, 2147483648
        %v3348 = vmul.f32 %v3346, 1.442695
        %v3349 = vpow.pop %v3348
        %v3350 = vmul.f32 %v3347, 1.442695
        %v3351 = vpow.pop %v3350
        %v3352 = vadd.f32 %v3349, 1.0
        %v3353 = vadd.f32 %v3351, 1.0
        %v3354 = vrcp.pop %v3352
        %v3355 = vmul.f32 1.0, %v3354
        %v3356 = vrcp.pop %v3353
        %v3357 = vmul.f32 1.0, %v3356
        %v3358 = vmul.f32 %v3341, %v2368
        %v3359 = vmul.f32 %v3343, %v2369
        %v3360 = vmul.f32 %v3329, %v3344
        %v3361 = vmul.f32 %v3331, %v3345
        %v3362 = vadd.f32 %v3358, %v3360
        %v3363 = vadd.f32 %v3359, %v3361
        %v3364 = vtanh.pop %v3362
        %v3365 = vtanh.pop %v3363
        %v3366 = vmul.f32 %v3355, %v3364
        %v3367 = vmul.f32 %v3357, %v3365
        %s3368 = scalar_lea.vmem [#allocation4], 64
        %v3369 = vld [vmem:[%s3368] sm:$0xff]
        %v3370 = vld [vmem:[%s3368 + $0x8] sm:$0xff]
        %v3371 = vld [vmem:[%s3368 + $0x10] sm:$0xff]
        %v3372 = vld [vmem:[%s3368 + $0x18] sm:$0xff]
        %v3373 = vld [vmem:[%s3368 + $0x20] sm:$0xff]
        %v3374 = vld [vmem:[%s3368 + $0x28] sm:$0xff]
        %v3375 = vld [vmem:[%s3368 + $0x30] sm:$0xff]
        %v3376 = vld [vmem:[%s3368 + $0x38] sm:$0xff]
        %v3377 = vpack.c.bf16 %v3366, %v3366
        %v3378 = vpack.c.bf16 %v3367, %v3367
        %3379 = vmatprep.subr.bf16.mxu0 %v2893
        %3380 = vmatpush1.bf16.msra.mxu0 %v2892
        %3381 = vmatprep.subr.bf16.mxu0 %v2901
        %3382 = vmatpush1.bf16.msra.mxu0 %v2900
        %3383 = vmatprep.subr.bf16.mxu0 %v2909
        %3384 = vmatpush1.bf16.msra.mxu0 %v2908
        %3385 = vmatprep.subr.bf16.mxu0 %v2917
        %3386 = vmatpush1.bf16.msra.mxu0 %v2916
        %3387 = vmatprep.subr.bf16.mxu0 %v2925
        %3388 = vmatpush1.bf16.msra.mxu0 %v2924
        %3389 = vmatprep.subr.bf16.mxu0 %v2933
        %3390 = vmatpush1.bf16.msra.mxu0 %v2932
        %3391 = vmatprep.subr.bf16.mxu0 %v2941
        %3392 = vmatpush1.bf16.msra.mxu0 %v2940
        %3393 = vmatprep.subr.bf16.mxu0 %v2949
        %3394 = vmatpush1.bf16.msra.mxu0 %v2948
        %3395 = vmatprep.subr.bf16.mxu0 %v2957
        %3396 = vmatpush1.bf16.msra.mxu0 %v2956
        %3397 = vmatprep.subr.bf16.mxu0 %v2965
        %3398 = vmatpush1.bf16.msra.mxu0 %v2964
        %3399 = vmatprep.subr.bf16.mxu0 %v2973
        %3400 = vmatpush1.bf16.msra.mxu0 %v2972
        %3401 = vmatprep.subr.bf16.mxu0 %v2981
        %3402 = vmatpush1.bf16.msra.mxu0 %v2980
        %3403 = vmatprep.subr.bf16.mxu0 %v2989
        %3404 = vmatpush1.bf16.msra.mxu0 %v2988
        %3405 = vmatprep.subr.bf16.mxu0 %v2997
        %3406 = vmatpush1.bf16.msra.mxu0 %v2996
        %3407 = vmatprep.subr.bf16.mxu0 %v3005
        %3408 = vmatpush1.bf16.msra.mxu0 %v3004
        %3409 = vmatprep.subr.bf16.mxu0 %v3013
        %3410 = vmatpush1.bf16.msra.mxu0 %v3012
        %3411 = vmatprep.mubr.bf16.mxu0 %v3378
        %3412 = vmatmul.mubr.bf16.gmra.mrb[0].mxu0 %v3377
        %v3413 = vpop.f32.mrb[0].mxu0
        %v3414 = vadd.f32 0.0, %v3413
        %v3415 = vpop.f32.mrb[0].mxu0
        %v3416 = vadd.f32 0.0, %v3415
        %v3417 = vpop.f32.mrb[0].mxu0
        %v3418 = vpop.f32.mrb[0].mxu0
        %3419 = vdwg.mxu0
        %3420 = vmatprep.subr.bf16.mxu0 %v2895
        %3421 = vmatpush1.bf16.msra.mxu0 %v2894
        %3422 = vmatprep.subr.bf16.mxu0 %v2903
        %3423 = vmatpush1.bf16.msra.mxu0 %v2902
        %3424 = vmatprep.subr.bf16.mxu0 %v2911
        %3425 = vmatpush1.bf16.msra.mxu0 %v2910
        %3426 = vmatprep.subr.bf16.mxu0 %v2919
        %3427 = vmatpush1.bf16.msra.mxu0 %v2918
        %3428 = vmatprep.subr.bf16.mxu0 %v2927
        %3429 = vmatpush1.bf16.msra.mxu0 %v2926
        %3430 = vmatprep.subr.bf16.mxu0 %v2935
        %3431 = vmatpush1.bf16.msra.mxu0 %v2934
        %3432 = vmatprep.subr.bf16.mxu0 %v2943
        %3433 = vmatpush1.bf16.msra.mxu0 %v2942
        %3434 = vmatprep.subr.bf16.mxu0 %v2951
        %3435 = vmatpush1.bf16.msra.mxu0 %v2950
        %3436 = vmatprep.subr.bf16.mxu0 %v2959
        %3437 = vmatpush1.bf16.msra.mxu0 %v2958
        %3438 = vmatprep.subr.bf16.mxu0 %v2967
        %3439 = vmatpush1.bf16.msra.mxu0 %v2966
        %3440 = vmatprep.subr.bf16.mxu0 %v2975
        %3441 = vmatpush1.bf16.msra.mxu0 %v2974
        %3442 = vmatprep.subr.bf16.mxu0 %v2983
        %3443 = vmatpush1.bf16.msra.mxu0 %v2982
        %3444 = vmatprep.subr.bf16.mxu0 %v2991
        %3445 = vmatpush1.bf16.msra.mxu0 %v2990
        %3446 = vmatprep.subr.bf16.mxu0 %v2999
        %3447 = vmatpush1.bf16.msra.mxu0 %v2998
        %3448 = vmatprep.subr.bf16.mxu0 %v3007
        %3449 = vmatpush1.bf16.msra.mxu0 %v3006
        %3450 = vmatprep.subr.bf16.mxu0 %v3015
        %3451 = vmatpush1.bf16.msra.mxu0 %v3014
        %3452 = vmatprep.mubr.bf16.mxu0 %v3378
        %3453 = vmatmul.mubr.bf16.gmra.mrb[0].mxu0 %v3377
        %v3454 = vpop.f32.mrb[0].mxu0
        %v3455 = vadd.f32 0.0, %v3454
        %v3456 = vpop.f32.mrb[0].mxu0
        %v3457 = vadd.f32 0.0, %v3456
        %v3458 = vpop.f32.mrb[0].mxu0
        %v3459 = vpop.f32.mrb[0].mxu0
        %3460 = vdwg.mxu0
        %3461 = vmatprep.subr.bf16.mxu0 %v2897
        %3462 = vmatpush1.bf16.msra.mxu0 %v2896
        %3463 = vmatprep.subr.bf16.mxu0 %v2905
        %3464 = vmatpush1.bf16.msra.mxu0 %v2904
        %3465 = vmatprep.subr.bf16.mxu0 %v2913
        %3466 = vmatpush1.bf16.msra.mxu0 %v2912
        %3467 = vmatprep.subr.bf16.mxu0 %v2921
        %3468 = vmatpush1.bf16.msra.mxu0 %v2920
        %3469 = vmatprep.subr.bf16.mxu0 %v2929
        %3470 = vmatpush1.bf16.msra.mxu0 %v2928
        %3471 = vmatprep.subr.bf16.mxu0 %v2937
        %3472 = vmatpush1.bf16.msra.mxu0 %v2936
        %3473 = vmatprep.subr.bf16.mxu0 %v2945
        %3474 = vmatpush1.bf16.msra.mxu0 %v2944
        %3475 = vmatprep.subr.bf16.mxu0 %v2953
        %3476 = vmatpush1.bf16.msra.mxu0 %v2952
        %3477 = vmatprep.subr.bf16.mxu0 %v2961
        %3478 = vmatpush1.bf16.msra.mxu0 %v2960
        %3479 = vmatprep.subr.bf16.mxu0 %v2969
        %3480 = vmatpush1.bf16.msra.mxu0 %v2968
        %3481 = vmatprep.subr.bf16.mxu0 %v2977
        %3482 = vmatpush1.bf16.msra.mxu0 %v2976
        %3483 = vmatprep.subr.bf16.mxu0 %v2985
        %3484 = vmatpush1.bf16.msra.mxu0 %v2984
        %3485 = vmatprep.subr.bf16.mxu0 %v2993
        %3486 = vmatpush1.bf16.msra.mxu0 %v2992
        %3487 = vmatprep.subr.bf16.mxu0 %v3001
        %3488 = vmatpush1.bf16.msra.mxu0 %v3000
        %3489 = vmatprep.subr.bf16.mxu0 %v3009
        %3490 = vmatpush1.bf16.msra.mxu0 %v3008
        %3491 = vmatprep.subr.bf16.mxu0 %v3017
        %3492 = vmatpush1.bf16.msra.mxu0 %v3016
        %3493 = vmatprep.mubr.bf16.mxu0 %v3378
        %3494 = vmatmul.mubr.bf16.gmra.mrb[0].mxu0 %v3377
        %v3495 = vpop.f32.mrb[0].mxu0
        %v3496 = vadd.f32 0.0, %v3495
        %v3497 = vpop.f32.mrb[0].mxu0
        %v3498 = vadd.f32 0.0, %v3497
        %v3499 = vpop.f32.mrb[0].mxu0
        %v3500 = vpop.f32.mrb[0].mxu0
        %3501 = vdwg.mxu0
        %3502 = vmatprep.subr.bf16.mxu0 %v2899
        %3503 = vmatpush1.bf16.msra.mxu0 %v2898
        %3504 = vmatprep.subr.bf16.mxu0 %v2907
        %3505 = vmatpush1.bf16.msra.mxu0 %v2906
        %3506 = vmatprep.subr.bf16.mxu0 %v2915
        %3507 = vmatpush1.bf16.msra.mxu0 %v2914
        %3508 = vmatprep.subr.bf16.mxu0 %v2923
        %3509 = vmatpush1.bf16.msra.mxu0 %v2922
        %3510 = vmatprep.subr.bf16.mxu0 %v2931
        %3511 = vmatpush1.bf16.msra.mxu0 %v2930
        %3512 = vmatprep.subr.bf16.mxu0 %v2939
        %3513 = vmatpush1.bf16.msra.mxu0 %v2938
        %3514 = vmatprep.subr.bf16.mxu0 %v2947
        %3515 = vmatpush1.bf16.msra.mxu0 %v2946
        %3516 = vmatprep.subr.bf16.mxu0 %v2955
        %3517 = vmatpush1.bf16.msra.mxu0 %v2954
        %3518 = vmatprep.subr.bf16.mxu0 %v2963
        %3519 = vmatpush1.bf16.msra.mxu0 %v2962
        %3520 = vmatprep.subr.bf16.mxu0 %v2971
        %3521 = vmatpush1.bf16.msra.mxu0 %v2970
        %3522 = vmatprep.subr.bf16.mxu0 %v2979
        %3523 = vmatpush1.bf16.msra.mxu0 %v2978
        %3524 = vmatprep.subr.bf16.mxu0 %v2987
        %3525 = vmatpush1.bf16.msra.mxu0 %v2986
        %3526 = vmatprep.subr.bf16.mxu0 %v2995
        %3527 = vmatpush1.bf16.msra.mxu0 %v2994
        %3528 = vmatprep.subr.bf16.mxu0 %v3003
        %3529 = vmatpush1.bf16.msra.mxu0 %v3002
        %3530 = vmatprep.subr.bf16.mxu0 %v3011
        %3531 = vmatpush1.bf16.msra.mxu0 %v3010
        %3532 = vmatprep.subr.bf16.mxu0 %v3019
        %3533 = vmatpush1.bf16.msra.mxu0 %v3018
        %3534 = vmatprep.mubr.bf16.mxu0 %v3378
        %3535 = vmatmul.mubr.bf16.gmra.mrb[0].mxu0 %v3377
        %v3536 = vpop.f32.mrb[0].mxu0
        %v3537 = vadd.f32 0.0, %v3536
        %v3538 = vpop.f32.mrb[0].mxu0
        %v3539 = vadd.f32 0.0, %v3538
        %v3540 = vpop.f32.mrb[0].mxu0
        %v3541 = vpop.f32.mrb[0].mxu0
        %3542 = vdwg.mxu0
        %v3543 = vadd.f32 %v3369, %v3414
        %v3544 = vadd.f32 %v3370, %v3416
        %v3545 = vadd.f32 %v3371, %v3455
        %v3546 = vadd.f32 %v3372, %v3457
        %v3547 = vadd.f32 %v3373, %v3496
        %v3548 = vadd.f32 %v3374, %v3498
        %v3549 = vadd.f32 %v3375, %v3537
        %v3550 = vadd.f32 %v3376, %v3539
        %v3551 = vxor.u32 %v3543, 2147483648
        %v3552 = vxor.u32 %v3544, 2147483648
        %v3553 = vmul.f32 %v3551, 1.442695
        %v3554 = vpow.pop %v3553
        %v3555 = vmul.f32 %v3552, 1.442695
        %v3556 = vpow.pop %v3555
        %v3557 = vadd.f32 %v3554, 1.0
        %v3558 = vadd.f32 %v3556, 1.0
        %v3559 = vrcp.pop %v3557
        %v3560 = vmul.f32 1.0, %v3559
        %v3561 = vrcp.pop %v3558
        %v3562 = vmul.f32 1.0, %v3561
        %v3563 = vxor.u32 %v3545, 2147483648
        %v3564 = vxor.u32 %v3546, 2147483648
        %v3565 = vmul.f32 %v3563, 1.442695
        %v3566 = vpow.pop %v3565
        %v3567 = vmul.f32 %v3564, 1.442695
        %v3568 = vpow.pop %v3567
        %v3569 = vadd.f32 %v3566, 1.0
        %v3570 = vadd.f32 %v3568, 1.0
        %v3571 = vrcp.pop %v3569
        %v3572 = vmul.f32 1.0, %v3571
        %v3573 = vrcp.pop %v3570
        %v3574 = vmul.f32 1.0, %v3573
        %v3575 = vtanh.pop %v3547
        %v3576 = vtanh.pop %v3548
        %v3577 = vxor.u32 %v3549, 2147483648
        %v3578 = vxor.u32 %v3550, 2147483648
        %v3579 = vmul.f32 %v3577, 1.442695
        %v3580 = vpow.pop %v3579
        %v3581 = vmul.f32 %v3578, 1.442695
        %v3582 = vpow.pop %v3581
        %v3583 = vadd.f32 %v3580, 1.0
        %v3584 = vadd.f32 %v3582, 1.0
        %v3585 = vrcp.pop %v3583
        %v3586 = vmul.f32 1.0, %v3585
        %v3587 = vrcp.pop %v3584
        %v3588 = vmul.f32 1.0, %v3587
        %v3589 = vmul.f32 %v3572, %v3362
        %v3590 = vmul.f32 %v3574, %v3363
        %v3591 = vmul.f32 %v3560, %v3575
        %v3592 = vmul.f32 %v3562, %v3576
        %v3593 = vadd.f32 %v3589, %v3591
        %v3594 = vadd.f32 %v3590, %v3592
        %v3595 = vtanh.pop %v3593
        %v3596 = vtanh.pop %v3594
        %v3597 = vmul.f32 %v3586, %v3595
        %v3598 = vmul.f32 %v3588, %v3596
        %s3599 = scalar_lea.vmem [#allocation4], 128
        %v3600 = vld [vmem:[%s3599] sm:$0xff]
        %v3601 = vld [vmem:[%s3599 + $0x8] sm:$0xff]
        %v3602 = vld [vmem:[%s3599 + $0x10] sm:$0xff]
        %v3603 = vld [vmem:[%s3599 + $0x18] sm:$0xff]
        %v3604 = vld [vmem:[%s3599 + $0x20] sm:$0xff]
        %v3605 = vld [vmem:[%s3599 + $0x28] sm:$0xff]
        %v3606 = vld [vmem:[%s3599 + $0x30] sm:$0xff]
        %v3607 = vld [vmem:[%s3599 + $0x38] sm:$0xff]
        %v3608 = vpack.c.bf16 %v3597, %v3597
        %v3609 = vpack.c.bf16 %v3598, %v3598
        %3610 = vmatprep.subr.bf16.mxu0 %v2893
        %3611 = vmatpush1.bf16.msra.mxu0 %v2892
        %3612 = vmatprep.subr.bf16.mxu0 %v2901
        %3613 = vmatpush1.bf16.msra.mxu0 %v2900
        %3614 = vmatprep.subr.bf16.mxu0 %v2909
        %3615 = vmatpush1.bf16.msra.mxu0 %v2908
        %3616 = vmatprep.subr.bf16.mxu0 %v2917
        %3617 = vmatpush1.bf16.msra.mxu0 %v2916
        %3618 = vmatprep.subr.bf16.mxu0 %v2925
        %3619 = vmatpush1.bf16.msra.mxu0 %v2924
        %3620 = vmatprep.subr.bf16.mxu0 %v2933
        %3621 = vmatpush1.bf16.msra.mxu0 %v2932
        %3622 = vmatprep.subr.bf16.mxu0 %v2941
        %3623 = vmatpush1.bf16.msra.mxu0 %v2940
        %3624 = vmatprep.subr.bf16.mxu0 %v2949
        %3625 = vmatpush1.bf16.msra.mxu0 %v2948
        %3626 = vmatprep.subr.bf16.mxu0 %v2957
        %3627 = vmatpush1.bf16.msra.mxu0 %v2956
        %3628 = vmatprep.subr.bf16.mxu0 %v2965
        %3629 = vmatpush1.bf16.msra.mxu0 %v2964
        %3630 = vmatprep.subr.bf16.mxu0 %v2973
        %3631 = vmatpush1.bf16.msra.mxu0 %v2972
        %3632 = vmatprep.subr.bf16.mxu0 %v2981
        %3633 = vmatpush1.bf16.msra.mxu0 %v2980
        %3634 = vmatprep.subr.bf16.mxu0 %v2989
        %3635 = vmatpush1.bf16.msra.mxu0 %v2988
        %3636 = vmatprep.subr.bf16.mxu0 %v2997
        %3637 = vmatpush1.bf16.msra.mxu0 %v2996
        %3638 = vmatprep.subr.bf16.mxu0 %v3005
        %3639 = vmatpush1.bf16.msra.mxu0 %v3004
        %3640 = vmatprep.subr.bf16.mxu0 %v3013
        %3641 = vmatpush1.bf16.msra.mxu0 %v3012
        %3642 = vmatprep.mubr.bf16.mxu0 %v3609
        %3643 = vmatmul.mubr.bf16.gmra.mrb[0].mxu0 %v3608
        %v3644 = vpop.f32.mrb[0].mxu0
        %v3645 = vadd.f32 0.0, %v3644
        %v3646 = vpop.f32.mrb[0].mxu0
        %v3647 = vadd.f32 0.0, %v3646
        %v3648 = vpop.f32.mrb[0].mxu0
        %v3649 = vpop.f32.mrb[0].mxu0
        %3650 = vdwg.mxu0
        %3651 = vmatprep.subr.bf16.mxu0 %v2895
        %3652 = vmatpush1.bf16.msra.mxu0 %v2894
        %3653 = vmatprep.subr.bf16.mxu0 %v2903
        %3654 = vmatpush1.bf16.msra.mxu0 %v2902
        %3655 = vmatprep.subr.bf16.mxu0 %v2911
        %3656 = vmatpush1.bf16.msra.mxu0 %v2910
        %3657 = vmatprep.subr.bf16.mxu0 %v2919
        %3658 = vmatpush1.bf16.msra.mxu0 %v2918
        %3659 = vmatprep.subr.bf16.mxu0 %v2927
        %3660 = vmatpush1.bf16.msra.mxu0 %v2926
        %3661 = vmatprep.subr.bf16.mxu0 %v2935
        %3662 = vmatpush1.bf16.msra.mxu0 %v2934
        %3663 = vmatprep.subr.bf16.mxu0 %v2943
        %3664 = vmatpush1.bf16.msra.mxu0 %v2942
        %3665 = vmatprep.subr.bf16.mxu0 %v2951
        %3666 = vmatpush1.bf16.msra.mxu0 %v2950
        %3667 = vmatprep.subr.bf16.mxu0 %v2959
        %3668 = vmatpush1.bf16.msra.mxu0 %v2958
        %3669 = vmatprep.subr.bf16.mxu0 %v2967
        %3670 = vmatpush1.bf16.msra.mxu0 %v2966
        %3671 = vmatprep.subr.bf16.mxu0 %v2975
        %3672 = vmatpush1.bf16.msra.mxu0 %v2974
        %3673 = vmatprep.subr.bf16.mxu0 %v2983
        %3674 = vmatpush1.bf16.msra.mxu0 %v2982
        %3675 = vmatprep.subr.bf16.mxu0 %v2991
        %3676 = vmatpush1.bf16.msra.mxu0 %v2990
        %3677 = vmatprep.subr.bf16.mxu0 %v2999
        %3678 = vmatpush1.bf16.msra.mxu0 %v2998
        %3679 = vmatprep.subr.bf16.mxu0 %v3007
        %3680 = vmatpush1.bf16.msra.mxu0 %v3006
        %3681 = vmatprep.subr.bf16.mxu0 %v3015
        %3682 = vmatpush1.bf16.msra.mxu0 %v3014
        %3683 = vmatprep.mubr.bf16.mxu0 %v3609
        %3684 = vmatmul.mubr.bf16.gmra.mrb[0].mxu0 %v3608
        %v3685 = vpop.f32.mrb[0].mxu0
        %v3686 = vadd.f32 0.0, %v3685
        %v3687 = vpop.f32.mrb[0].mxu0
        %v3688 = vadd.f32 0.0, %v3687
        %v3689 = vpop.f32.mrb[0].mxu0
        %v3690 = vpop.f32.mrb[0].mxu0
        %3691 = vdwg.mxu0
        %3692 = vmatprep.subr.bf16.mxu0 %v2897
        %3693 = vmatpush1.bf16.msra.mxu0 %v2896
        %3694 = vmatprep.subr.bf16.mxu0 %v2905
        %3695 = vmatpush1.bf16.msra.mxu0 %v2904
        %3696 = vmatprep.subr.bf16.mxu0 %v2913
        %3697 = vmatpush1.bf16.msra.mxu0 %v2912
        %3698 = vmatprep.subr.bf16.mxu0 %v2921
        %3699 = vmatpush1.bf16.msra.mxu0 %v2920
        %3700 = vmatprep.subr.bf16.mxu0 %v2929
        %3701 = vmatpush1.bf16.msra.mxu0 %v2928
        %3702 = vmatprep.subr.bf16.mxu0 %v2937
        %3703 = vmatpush1.bf16.msra.mxu0 %v2936
        %3704 = vmatprep.subr.bf16.mxu0 %v2945
        %3705 = vmatpush1.bf16.msra.mxu0 %v2944
        %3706 = vmatprep.subr.bf16.mxu0 %v2953
        %3707 = vmatpush1.bf16.msra.mxu0 %v2952
        %3708 = vmatprep.subr.bf16.mxu0 %v2961
        %3709 = vmatpush1.bf16.msra.mxu0 %v2960
        %3710 = vmatprep.subr.bf16.mxu0 %v2969
        %3711 = vmatpush1.bf16.msra.mxu0 %v2968
        %3712 = vmatprep.subr.bf16.mxu0 %v2977
        %3713 = vmatpush1.bf16.msra.mxu0 %v2976
        %3714 = vmatprep.subr.bf16.mxu0 %v2985
        %3715 = vmatpush1.bf16.msra.mxu0 %v2984
        %3716 = vmatprep.subr.bf16.mxu0 %v2993
        %3717 = vmatpush1.bf16.msra.mxu0 %v2992
        %3718 = vmatprep.subr.bf16.mxu0 %v3001
        %3719 = vmatpush1.bf16.msra.mxu0 %v3000
        %3720 = vmatprep.subr.bf16.mxu0 %v3009
        %3721 = vmatpush1.bf16.msra.mxu0 %v3008
        %3722 = vmatprep.subr.bf16.mxu0 %v3017
        %3723 = vmatpush1.bf16.msra.mxu0 %v3016
        %3724 = vmatprep.mubr.bf16.mxu0 %v3609
        %3725 = vmatmul.mubr.bf16.gmra.mrb[0].mxu0 %v3608
        %v3726 = vpop.f32.mrb[0].mxu0
        %v3727 = vadd.f32 0.0, %v3726
        %v3728 = vpop.f32.mrb[0].mxu0
        %v3729 = vadd.f32 0.0, %v3728
        %v3730 = vpop.f32.mrb[0].mxu0
        %v3731 = vpop.f32.mrb[0].mxu0
        %3732 = vdwg.mxu0
        %3733 = vmatprep.subr.bf16.mxu0 %v2899
        %3734 = vmatpush1.bf16.msra.mxu0 %v2898
        %3735 = vmatprep.subr.bf16.mxu0 %v2907
        %3736 = vmatpush1.bf16.msra.mxu0 %v2906
        %3737 = vmatprep.subr.bf16.mxu0 %v2915
        %3738 = vmatpush1.bf16.msra.mxu0 %v2914
        %3739 = vmatprep.subr.bf16.mxu0 %v2923
        %3740 = vmatpush1.bf16.msra.mxu0 %v2922
        %3741 = vmatprep.subr.bf16.mxu0 %v2931
        %3742 = vmatpush1.bf16.msra.mxu0 %v2930
        %3743 = vmatprep.subr.bf16.mxu0 %v2939
        %3744 = vmatpush1.bf16.msra.mxu0 %v2938
        %3745 = vmatprep.subr.bf16.mxu0 %v2947
        %3746 = vmatpush1.bf16.msra.mxu0 %v2946
        %3747 = vmatprep.subr.bf16.mxu0 %v2955
        %3748 = vmatpush1.bf16.msra.mxu0 %v2954
        %3749 = vmatprep.subr.bf16.mxu0 %v2963
        %3750 = vmatpush1.bf16.msra.mxu0 %v2962
        %3751 = vmatprep.subr.bf16.mxu0 %v2971
        %3752 = vmatpush1.bf16.msra.mxu0 %v2970
        %3753 = vmatprep.subr.bf16.mxu0 %v2979
        %3754 = vmatpush1.bf16.msra.mxu0 %v2978
        %3755 = vmatprep.subr.bf16.mxu0 %v2987
        %3756 = vmatpush1.bf16.msra.mxu0 %v2986
        %3757 = vmatprep.subr.bf16.mxu0 %v2995
        %3758 = vmatpush1.bf16.msra.mxu0 %v2994
        %3759 = vmatprep.subr.bf16.mxu0 %v3003
        %3760 = vmatpush1.bf16.msra.mxu0 %v3002
        %3761 = vmatprep.subr.bf16.mxu0 %v3011
        %3762 = vmatpush1.bf16.msra.mxu0 %v3010
        %3763 = vmatprep.subr.bf16.mxu0 %v3019
        %3764 = vmatpush1.bf16.msra.mxu0 %v3018
        %3765 = vmatprep.mubr.bf16.mxu0 %v3609
        %3766 = vmatmul.mubr.bf16.gmra.mrb[0].mxu0 %v3608
        %v3767 = vpop.f32.mrb[0].mxu0
        %v3768 = vadd.f32 0.0, %v3767
        %v3769 = vpop.f32.mrb[0].mxu0
        %v3770 = vadd.f32 0.0, %v3769
        %v3771 = vpop.f32.mrb[0].mxu0
        %v3772 = vpop.f32.mrb[0].mxu0
        %3773 = vdwg.mxu0
        %v3774 = vadd.f32 %v3600, %v3645
        %v3775 = vadd.f32 %v3601, %v3647
        %v3776 = vadd.f32 %v3602, %v3686
        %v3777 = vadd.f32 %v3603, %v3688
        %v3778 = vadd.f32 %v3604, %v3727
        %v3779 = vadd.f32 %v3605, %v3729
        %v3780 = vadd.f32 %v3606, %v3768
        %v3781 = vadd.f32 %v3607, %v3770
        %v3782 = vxor.u32 %v3774, 2147483648
        %v3783 = vxor.u32 %v3775, 2147483648
        %v3784 = vmul.f32 %v3782, 1.442695
        %v3785 = vpow.pop %v3784
        %v3786 = vmul.f32 %v3783, 1.442695
        %v3787 = vpow.pop %v3786
        %v3788 = vadd.f32 %v3785, 1.0
        %v3789 = vadd.f32 %v3787, 1.0
        %v3790 = vrcp.pop %v3788
        %v3791 = vmul.f32 1.0, %v3790
        %v3792 = vrcp.pop %v3789
        %v3793 = vmul.f32 1.0, %v3792
        %v3794 = vxor.u32 %v3776, 2147483648
        %v3795 = vxor.u32 %v3777, 2147483648
        %v3796 = vmul.f32 %v3794, 1.442695
        %v3797 = vpow.pop %v3796
        %v3798 = vmul.f32 %v3795, 1.442695
        %v3799 = vpow.pop %v3798
        %v3800 = vadd.f32 %v3797, 1.0
        %v3801 = vadd.f32 %v3799, 1.0
        %v3802 = vrcp.pop %v3800
        %v3803 = vmul.f32 1.0, %v3802
        %v3804 = vrcp.pop %v3801
        %v3805 = vmul.f32 1.0, %v3804
        %v3806 = vtanh.pop %v3778
        %v3807 = vtanh.pop %v3779
        %v3808 = vxor.u32 %v3780, 2147483648
        %v3809 = vxor.u32 %v3781, 2147483648
        %v3810 = vmul.f32 %v3808, 1.442695
        %v3811 = vpow.pop %v3810
        %v3812 = vmul.f32 %v3809, 1.442695
        %v3813 = vpow.pop %v3812
        %v3814 = vadd.f32 %v3811, 1.0
        %v3815 = vadd.f32 %v3813, 1.0
        %v3816 = vrcp.pop %v3814
        %v3817 = vmul.f32 1.0, %v3816
        %v3818 = vrcp.pop %v3815
        %v3819 = vmul.f32 1.0, %v3818
        %v3820 = vmul.f32 %v3803, %v3593
        %v3821 = vmul.f32 %v3805, %v3594
        %v3822 = vmul.f32 %v3791, %v3806
        %v3823 = vmul.f32 %v3793, %v3807
        %v3824 = vadd.f32 %v3820, %v3822
        %v3825 = vadd.f32 %v3821, %v3823
        %v3826 = vtanh.pop %v3824
        %v3827 = vtanh.pop %v3825
        %v3828 = vmul.f32 %v3817, %v3826
        %v3829 = vmul.f32 %v3819, %v3827
        %s3830 = scalar_lea.vmem [#allocation4], 192
        %v3831 = vld [vmem:[%s3830] sm:$0xff]
        %v3832 = vld [vmem:[%s3830 + $0x8] sm:$0xff]
        %v3833 = vld [vmem:[%s3830 + $0x10] sm:$0xff]
        %v3834 = vld [vmem:[%s3830 + $0x18] sm:$0xff]
        %v3835 = vld [vmem:[%s3830 + $0x20] sm:$0xff]
        %v3836 = vld [vmem:[%s3830 + $0x28] sm:$0xff]
        %v3837 = vld [vmem:[%s3830 + $0x30] sm:$0xff]
        %v3838 = vld [vmem:[%s3830 + $0x38] sm:$0xff]
        %v3839 = vpack.c.bf16 %v3828, %v3828
        %v3840 = vpack.c.bf16 %v3829, %v3829
        %3841 = vmatprep.subr.bf16.mxu0 %v2893
        %3842 = vmatpush1.bf16.msra.mxu0 %v2892
        %3843 = vmatprep.subr.bf16.mxu0 %v2901
        %3844 = vmatpush1.bf16.msra.mxu0 %v2900
        %3845 = vmatprep.subr.bf16.mxu0 %v2909
        %3846 = vmatpush1.bf16.msra.mxu0 %v2908
        %3847 = vmatprep.subr.bf16.mxu0 %v2917
        %3848 = vmatpush1.bf16.msra.mxu0 %v2916
        %3849 = vmatprep.subr.bf16.mxu0 %v2925
        %3850 = vmatpush1.bf16.msra.mxu0 %v2924
        %3851 = vmatprep.subr.bf16.mxu0 %v2933
        %3852 = vmatpush1.bf16.msra.mxu0 %v2932
        %3853 = vmatprep.subr.bf16.mxu0 %v2941
        %3854 = vmatpush1.bf16.msra.mxu0 %v2940
        %3855 = vmatprep.subr.bf16.mxu0 %v2949
        %3856 = vmatpush1.bf16.msra.mxu0 %v2948
        %3857 = vmatprep.subr.bf16.mxu0 %v2957
        %3858 = vmatpush1.bf16.msra.mxu0 %v2956
        %3859 = vmatprep.subr.bf16.mxu0 %v2965
        %3860 = vmatpush1.bf16.msra.mxu0 %v2964
        %3861 = vmatprep.subr.bf16.mxu0 %v2973
        %3862 = vmatpush1.bf16.msra.mxu0 %v2972
        %3863 = vmatprep.subr.bf16.mxu0 %v2981
        %3864 = vmatpush1.bf16.msra.mxu0 %v2980
        %3865 = vmatprep.subr.bf16.mxu0 %v2989
        %3866 = vmatpush1.bf16.msra.mxu0 %v2988
        %3867 = vmatprep.subr.bf16.mxu0 %v2997
        %3868 = vmatpush1.bf16.msra.mxu0 %v2996
        %3869 = vmatprep.subr.bf16.mxu0 %v3005
        %3870 = vmatpush1.bf16.msra.mxu0 %v3004
        %3871 = vmatprep.subr.bf16.mxu0 %v3013
        %3872 = vmatpush1.bf16.msra.mxu0 %v3012
        %3873 = vmatprep.mubr.bf16.mxu0 %v3840
        %3874 = vmatmul.mubr.bf16.gmra.mrb[0].mxu0 %v3839
        %v3875 = vpop.f32.mrb[0].mxu0
        %v3876 = vadd.f32 0.0, %v3875
        %v3877 = vpop.f32.mrb[0].mxu0
        %v3878 = vadd.f32 0.0, %v3877
        %v3879 = vpop.f32.mrb[0].mxu0
        %v3880 = vpop.f32.mrb[0].mxu0
        %3881 = vdwg.mxu0
        %3882 = vmatprep.subr.bf16.mxu0 %v2895
        %3883 = vmatpush1.bf16.msra.mxu0 %v2894
        %3884 = vmatprep.subr.bf16.mxu0 %v2903
        %3885 = vmatpush1.bf16.msra.mxu0 %v2902
        %3886 = vmatprep.subr.bf16.mxu0 %v2911
        %3887 = vmatpush1.bf16.msra.mxu0 %v2910
        %3888 = vmatprep.subr.bf16.mxu0 %v2919
        %3889 = vmatpush1.bf16.msra.mxu0 %v2918
        %3890 = vmatprep.subr.bf16.mxu0 %v2927
        %3891 = vmatpush1.bf16.msra.mxu0 %v2926
        %3892 = vmatprep.subr.bf16.mxu0 %v2935
        %3893 = vmatpush1.bf16.msra.mxu0 %v2934
        %3894 = vmatprep.subr.bf16.mxu0 %v2943
        %3895 = vmatpush1.bf16.msra.mxu0 %v2942
        %3896 = vmatprep.subr.bf16.mxu0 %v2951
        %3897 = vmatpush1.bf16.msra.mxu0 %v2950
        %3898 = vmatprep.subr.bf16.mxu0 %v2959
        %3899 = vmatpush1.bf16.msra.mxu0 %v2958
        %3900 = vmatprep.subr.bf16.mxu0 %v2967
        %3901 = vmatpush1.bf16.msra.mxu0 %v2966
        %3902 = vmatprep.subr.bf16.mxu0 %v2975
        %3903 = vmatpush1.bf16.msra.mxu0 %v2974
        %3904 = vmatprep.subr.bf16.mxu0 %v2983
        %3905 = vmatpush1.bf16.msra.mxu0 %v2982
        %3906 = vmatprep.subr.bf16.mxu0 %v2991
        %3907 = vmatpush1.bf16.msra.mxu0 %v2990
        %3908 = vmatprep.subr.bf16.mxu0 %v2999
        %3909 = vmatpush1.bf16.msra.mxu0 %v2998
        %3910 = vmatprep.subr.bf16.mxu0 %v3007
        %3911 = vmatpush1.bf16.msra.mxu0 %v3006
        %3912 = vmatprep.subr.bf16.mxu0 %v3015
        %3913 = vmatpush1.bf16.msra.mxu0 %v3014
        %3914 = vmatprep.mubr.bf16.mxu0 %v3840
        %3915 = vmatmul.mubr.bf16.gmra.mrb[0].mxu0 %v3839
        %v3916 = vpop.f32.mrb[0].mxu0
        %v3917 = vadd.f32 0.0, %v3916
        %v3918 = vpop.f32.mrb[0].mxu0
        %v3919 = vadd.f32 0.0, %v3918
        %v3920 = vpop.f32.mrb[0].mxu0
        %v3921 = vpop.f32.mrb[0].mxu0
        %3922 = vdwg.mxu0
        %3923 = vmatprep.subr.bf16.mxu0 %v2897
        %3924 = vmatpush1.bf16.msra.mxu0 %v2896
        %3925 = vmatprep.subr.bf16.mxu0 %v2905
        %3926 = vmatpush1.bf16.msra.mxu0 %v2904
        %3927 = vmatprep.subr.bf16.mxu0 %v2913
        %3928 = vmatpush1.bf16.msra.mxu0 %v2912
        %3929 = vmatprep.subr.bf16.mxu0 %v2921
        %3930 = vmatpush1.bf16.msra.mxu0 %v2920
        %3931 = vmatprep.subr.bf16.mxu0 %v2929
        %3932 = vmatpush1.bf16.msra.mxu0 %v2928
        %3933 = vmatprep.subr.bf16.mxu0 %v2937
        %3934 = vmatpush1.bf16.msra.mxu0 %v2936
        %3935 = vmatprep.subr.bf16.mxu0 %v2945
        %3936 = vmatpush1.bf16.msra.mxu0 %v2944
        %3937 = vmatprep.subr.bf16.mxu0 %v2953
        %3938 = vmatpush1.bf16.msra.mxu0 %v2952
        %3939 = vmatprep.subr.bf16.mxu0 %v2961
        %3940 = vmatpush1.bf16.msra.mxu0 %v2960
        %3941 = vmatprep.subr.bf16.mxu0 %v2969
        %3942 = vmatpush1.bf16.msra.mxu0 %v2968
        %3943 = vmatprep.subr.bf16.mxu0 %v2977
        %3944 = vmatpush1.bf16.msra.mxu0 %v2976
        %3945 = vmatprep.subr.bf16.mxu0 %v2985
        %3946 = vmatpush1.bf16.msra.mxu0 %v2984
        %3947 = vmatprep.subr.bf16.mxu0 %v2993
        %3948 = vmatpush1.bf16.msra.mxu0 %v2992
        %3949 = vmatprep.subr.bf16.mxu0 %v3001
        %3950 = vmatpush1.bf16.msra.mxu0 %v3000
        %3951 = vmatprep.subr.bf16.mxu0 %v3009
        %3952 = vmatpush1.bf16.msra.mxu0 %v3008
        %3953 = vmatprep.subr.bf16.mxu0 %v3017
        %3954 = vmatpush1.bf16.msra.mxu0 %v3016
        %3955 = vmatprep.mubr.bf16.mxu0 %v3840
        %3956 = vmatmul.mubr.bf16.gmra.mrb[0].mxu0 %v3839
        %v3957 = vpop.f32.mrb[0].mxu0
        %v3958 = vadd.f32 0.0, %v3957
        %v3959 = vpop.f32.mrb[0].mxu0
        %v3960 = vadd.f32 0.0, %v3959
        %v3961 = vpop.f32.mrb[0].mxu0
        %v3962 = vpop.f32.mrb[0].mxu0
        %3963 = vdwg.mxu0
        %3964 = vmatprep.subr.bf16.mxu0 %v2899
        %3965 = vmatpush1.bf16.msra.mxu0 %v2898
        %3966 = vmatprep.subr.bf16.mxu0 %v2907
        %3967 = vmatpush1.bf16.msra.mxu0 %v2906
        %3968 = vmatprep.subr.bf16.mxu0 %v2915
        %3969 = vmatpush1.bf16.msra.mxu0 %v2914
        %3970 = vmatprep.subr.bf16.mxu0 %v2923
        %3971 = vmatpush1.bf16.msra.mxu0 %v2922
        %3972 = vmatprep.subr.bf16.mxu0 %v2931
        %3973 = vmatpush1.bf16.msra.mxu0 %v2930
        %3974 = vmatprep.subr.bf16.mxu0 %v2939
        %3975 = vmatpush1.bf16.msra.mxu0 %v2938
        %3976 = vmatprep.subr.bf16.mxu0 %v2947
        %3977 = vmatpush1.bf16.msra.mxu0 %v2946
        %3978 = vmatprep.subr.bf16.mxu0 %v2955
        %3979 = vmatpush1.bf16.msra.mxu0 %v2954
        %3980 = vmatprep.subr.bf16.mxu0 %v2963
        %3981 = vmatpush1.bf16.msra.mxu0 %v2962
        %3982 = vmatprep.subr.bf16.mxu0 %v2971
        %3983 = vmatpush1.bf16.msra.mxu0 %v2970
        %3984 = vmatprep.subr.bf16.mxu0 %v2979
        %3985 = vmatpush1.bf16.msra.mxu0 %v2978
        %3986 = vmatprep.subr.bf16.mxu0 %v2987
        %3987 = vmatpush1.bf16.msra.mxu0 %v2986
        %3988 = vmatprep.subr.bf16.mxu0 %v2995
        %3989 = vmatpush1.bf16.msra.mxu0 %v2994
        %3990 = vmatprep.subr.bf16.mxu0 %v3003
        %3991 = vmatpush1.bf16.msra.mxu0 %v3002
        %3992 = vmatprep.subr.bf16.mxu0 %v3011
        %3993 = vmatpush1.bf16.msra.mxu0 %v3010
        %3994 = vmatprep.subr.bf16.mxu0 %v3019
        %3995 = vmatpush1.bf16.msra.mxu0 %v3018
        %3996 = vmatprep.mubr.bf16.mxu0 %v3840
        %3997 = vmatmul.mubr.bf16.gmra.mrb[0].mxu0 %v3839
        %v3998 = vpop.f32.mrb[0].mxu0
        %v3999 = vadd.f32 0.0, %v3998
        %v4000 = vpop.f32.mrb[0].mxu0
        %v4001 = vadd.f32 0.0, %v4000
        %v4002 = vpop.f32.mrb[0].mxu0
        %v4003 = vpop.f32.mrb[0].mxu0
        %4004 = vdwg.mxu0
        %v4005 = vadd.f32 %v3831, %v3876
        %v4006 = vadd.f32 %v3832, %v3878
        %v4007 = vadd.f32 %v3833, %v3917
        %v4008 = vadd.f32 %v3834, %v3919
        %v4009 = vadd.f32 %v3835, %v3958
        %v4010 = vadd.f32 %v3836, %v3960
        %v4011 = vadd.f32 %v3837, %v3999
        %v4012 = vadd.f32 %v3838, %v4001
        %v4013 = vxor.u32 %v4005, 2147483648
        %v4014 = vxor.u32 %v4006, 2147483648
        %v4015 = vmul.f32 %v4013, 1.442695
        %v4016 = vpow.pop %v4015
        %v4017 = vmul.f32 %v4014, 1.442695
        %v4018 = vpow.pop %v4017
        %v4019 = vadd.f32 %v4016, 1.0
        %v4020 = vadd.f32 %v4018, 1.0
        %v4021 = vrcp.pop %v4019
        %v4022 = vmul.f32 1.0, %v4021
        %v4023 = vrcp.pop %v4020
        %v4024 = vmul.f32 1.0, %v4023
        %v4025 = vxor.u32 %v4007, 2147483648
        %v4026 = vxor.u32 %v4008, 2147483648
        %v4027 = vmul.f32 %v4025, 1.442695
        %v4028 = vpow.pop %v4027
        %v4029 = vmul.f32 %v4026, 1.442695
        %v4030 = vpow.pop %v4029
        %v4031 = vadd.f32 %v4028, 1.0
        %v4032 = vadd.f32 %v4030, 1.0
        %v4033 = vrcp.pop %v4031
        %v4034 = vmul.f32 1.0, %v4033
        %v4035 = vrcp.pop %v4032
        %v4036 = vmul.f32 1.0, %v4035
        %v4037 = vtanh.pop %v4009
        %v4038 = vtanh.pop %v4010
        %v4039 = vxor.u32 %v4011, 2147483648
        %v4040 = vxor.u32 %v4012, 2147483648
        %v4041 = vmul.f32 %v4039, 1.442695
        %v4042 = vpow.pop %v4041
        %v4043 = vmul.f32 %v4040, 1.442695
        %v4044 = vpow.pop %v4043
        %v4045 = vadd.f32 %v4042, 1.0
        %v4046 = vadd.f32 %v4044, 1.0
        %v4047 = vrcp.pop %v4045
        %v4048 = vmul.f32 1.0, %v4047
        %v4049 = vrcp.pop %v4046
        %v4050 = vmul.f32 1.0, %v4049
        %v4051 = vmul.f32 %v4034, %v3824
        %v4052 = vmul.f32 %v4036, %v3825
        %v4053 = vmul.f32 %v4022, %v4037
        %v4054 = vmul.f32 %v4024, %v4038
        %v4055 = vadd.f32 %v4051, %v4053
        %v4056 = vadd.f32 %v4052, %v4054
        %v4057 = vtanh.pop %v4055
        %v4058 = vtanh.pop %v4056
        %v4059 = vmul.f32 %v4048, %v4057
        %v4060 = vmul.f32 %v4050, %v4058
        %s4061 = scalar_lea.vmem [#allocation4], 256
        %v4062 = vld [vmem:[%s4061] sm:$0xff]
        %v4063 = vld [vmem:[%s4061 + $0x8] sm:$0xff]
        %v4064 = vld [vmem:[%s4061 + $0x10] sm:$0xff]
        %v4065 = vld [vmem:[%s4061 + $0x18] sm:$0xff]
        %v4066 = vld [vmem:[%s4061 + $0x20] sm:$0xff]
        %v4067 = vld [vmem:[%s4061 + $0x28] sm:$0xff]
        %v4068 = vld [vmem:[%s4061 + $0x30] sm:$0xff]
        %v4069 = vld [vmem:[%s4061 + $0x38] sm:$0xff]
        %v4070 = vpack.c.bf16 %v4059, %v4059
        %v4071 = vpack.c.bf16 %v4060, %v4060
        %4072 = vmatprep.subr.bf16.mxu0 %v2893
        %4073 = vmatpush1.bf16.msra.mxu0 %v2892
        %4074 = vmatprep.subr.bf16.mxu0 %v2901
        %4075 = vmatpush1.bf16.msra.mxu0 %v2900
        %4076 = vmatprep.subr.bf16.mxu0 %v2909
        %4077 = vmatpush1.bf16.msra.mxu0 %v2908
        %4078 = vmatprep.subr.bf16.mxu0 %v2917
        %4079 = vmatpush1.bf16.msra.mxu0 %v2916
        %4080 = vmatprep.subr.bf16.mxu0 %v2925
        %4081 = vmatpush1.bf16.msra.mxu0 %v2924
        %4082 = vmatprep.subr.bf16.mxu0 %v2933
        %4083 = vmatpush1.bf16.msra.mxu0 %v2932
        %4084 = vmatprep.subr.bf16.mxu0 %v2941
        %4085 = vmatpush1.bf16.msra.mxu0 %v2940
        %4086 = vmatprep.subr.bf16.mxu0 %v2949
        %4087 = vmatpush1.bf16.msra.mxu0 %v2948
        %4088 = vmatprep.subr.bf16.mxu0 %v2957
        %4089 = vmatpush1.bf16.msra.mxu0 %v2956
        %4090 = vmatprep.subr.bf16.mxu0 %v2965
        %4091 = vmatpush1.bf16.msra.mxu0 %v2964
        %4092 = vmatprep.subr.bf16.mxu0 %v2973
        %4093 = vmatpush1.bf16.msra.mxu0 %v2972
        %4094 = vmatprep.subr.bf16.mxu0 %v2981
        %4095 = vmatpush1.bf16.msra.mxu0 %v2980
        %4096 = vmatprep.subr.bf16.mxu0 %v2989
        %4097 = vmatpush1.bf16.msra.mxu0 %v2988
        %4098 = vmatprep.subr.bf16.mxu0 %v2997
        %4099 = vmatpush1.bf16.msra.mxu0 %v2996
        %4100 = vmatprep.subr.bf16.mxu0 %v3005
        %4101 = vmatpush1.bf16.msra.mxu0 %v3004
        %4102 = vmatprep.subr.bf16.mxu0 %v3013
        %4103 = vmatpush1.bf16.msra.mxu0 %v3012
        %4104 = vmatprep.mubr.bf16.mxu0 %v4071
        %4105 = vmatmul.mubr.bf16.gmra.mrb[0].mxu0 %v4070
        %v4106 = vpop.f32.mrb[0].mxu0
        %v4107 = vadd.f32 0.0, %v4106
        %v4108 = vpop.f32.mrb[0].mxu0
        %v4109 = vadd.f32 0.0, %v4108
        %v4110 = vpop.f32.mrb[0].mxu0
        %v4111 = vpop.f32.mrb[0].mxu0
        %4112 = vdwg.mxu0
        %4113 = vmatprep.subr.bf16.mxu0 %v2895
        %4114 = vmatpush1.bf16.msra.mxu0 %v2894
        %4115 = vmatprep.subr.bf16.mxu0 %v2903
        %4116 = vmatpush1.bf16.msra.mxu0 %v2902
        %4117 = vmatprep.subr.bf16.mxu0 %v2911
        %4118 = vmatpush1.bf16.msra.mxu0 %v2910
        %4119 = vmatprep.subr.bf16.mxu0 %v2919
        %4120 = vmatpush1.bf16.msra.mxu0 %v2918
        %4121 = vmatprep.subr.bf16.mxu0 %v2927
        %4122 = vmatpush1.bf16.msra.mxu0 %v2926
        %4123 = vmatprep.subr.bf16.mxu0 %v2935
        %4124 = vmatpush1.bf16.msra.mxu0 %v2934
        %4125 = vmatprep.subr.bf16.mxu0 %v2943
        %4126 = vmatpush1.bf16.msra.mxu0 %v2942
        %4127 = vmatprep.subr.bf16.mxu0 %v2951
        %4128 = vmatpush1.bf16.msra.mxu0 %v2950
        %4129 = vmatprep.subr.bf16.mxu0 %v2959
        %4130 = vmatpush1.bf16.msra.mxu0 %v2958
        %4131 = vmatprep.subr.bf16.mxu0 %v2967
        %4132 = vmatpush1.bf16.msra.mxu0 %v2966
        %4133 = vmatprep.subr.bf16.mxu0 %v2975
        %4134 = vmatpush1.bf16.msra.mxu0 %v2974
        %4135 = vmatprep.subr.bf16.mxu0 %v2983
        %4136 = vmatpush1.bf16.msra.mxu0 %v2982
        %4137 = vmatprep.subr.bf16.mxu0 %v2991
        %4138 = vmatpush1.bf16.msra.mxu0 %v2990
        %4139 = vmatprep.subr.bf16.mxu0 %v2999
        %4140 = vmatpush1.bf16.msra.mxu0 %v2998
        %4141 = vmatprep.subr.bf16.mxu0 %v3007
        %4142 = vmatpush1.bf16.msra.mxu0 %v3006
        %4143 = vmatprep.subr.bf16.mxu0 %v3015
        %4144 = vmatpush1.bf16.msra.mxu0 %v3014
        %4145 = vmatprep.mubr.bf16.mxu0 %v4071
        %4146 = vmatmul.mubr.bf16.gmra.mrb[0].mxu0 %v4070
        %v4147 = vpop.f32.mrb[0].mxu0
        %v4148 = vadd.f32 0.0, %v4147
        %v4149 = vpop.f32.mrb[0].mxu0
        %v4150 = vadd.f32 0.0, %v4149
        %v4151 = vpop.f32.mrb[0].mxu0
        %v4152 = vpop.f32.mrb[0].mxu0
        %4153 = vdwg.mxu0
        %4154 = vmatprep.subr.bf16.mxu0 %v2897
        %4155 = vmatpush1.bf16.msra.mxu0 %v2896
        %4156 = vmatprep.subr.bf16.mxu0 %v2905
        %4157 = vmatpush1.bf16.msra.mxu0 %v2904
        %4158 = vmatprep.subr.bf16.mxu0 %v2913
        %4159 = vmatpush1.bf16.msra.mxu0 %v2912
        %4160 = vmatprep.subr.bf16.mxu0 %v2921
        %4161 = vmatpush1.bf16.msra.mxu0 %v2920
        %4162 = vmatprep.subr.bf16.mxu0 %v2929
        %4163 = vmatpush1.bf16.msra.mxu0 %v2928
        %4164 = vmatprep.subr.bf16.mxu0 %v2937
        %4165 = vmatpush1.bf16.msra.mxu0 %v2936
        %4166 = vmatprep.subr.bf16.mxu0 %v2945
        %4167 = vmatpush1.bf16.msra.mxu0 %v2944
        %4168 = vmatprep.subr.bf16.mxu0 %v2953
        %4169 = vmatpush1.bf16.msra.mxu0 %v2952
        %4170 = vmatprep.subr.bf16.mxu0 %v2961
        %4171 = vmatpush1.bf16.msra.mxu0 %v2960
        %4172 = vmatprep.subr.bf16.mxu0 %v2969
        %4173 = vmatpush1.bf16.msra.mxu0 %v2968
        %4174 = vmatprep.subr.bf16.mxu0 %v2977
        %4175 = vmatpush1.bf16.msra.mxu0 %v2976
        %4176 = vmatprep.subr.bf16.mxu0 %v2985
        %4177 = vmatpush1.bf16.msra.mxu0 %v2984
        %4178 = vmatprep.subr.bf16.mxu0 %v2993
        %4179 = vmatpush1.bf16.msra.mxu0 %v2992
        %4180 = vmatprep.subr.bf16.mxu0 %v3001
        %4181 = vmatpush1.bf16.msra.mxu0 %v3000
        %4182 = vmatprep.subr.bf16.mxu0 %v3009
        %4183 = vmatpush1.bf16.msra.mxu0 %v3008
        %4184 = vmatprep.subr.bf16.mxu0 %v3017
        %4185 = vmatpush1.bf16.msra.mxu0 %v3016
        %4186 = vmatprep.mubr.bf16.mxu0 %v4071
        %4187 = vmatmul.mubr.bf16.gmra.mrb[0].mxu0 %v4070
        %v4188 = vpop.f32.mrb[0].mxu0
        %v4189 = vadd.f32 0.0, %v4188
        %v4190 = vpop.f32.mrb[0].mxu0
        %v4191 = vadd.f32 0.0, %v4190
        %v4192 = vpop.f32.mrb[0].mxu0
        %v4193 = vpop.f32.mrb[0].mxu0
        %4194 = vdwg.mxu0
        %4195 = vmatprep.subr.bf16.mxu0 %v2899
        %4196 = vmatpush1.bf16.msra.mxu0 %v2898
        %4197 = vmatprep.subr.bf16.mxu0 %v2907
        %4198 = vmatpush1.bf16.msra.mxu0 %v2906
        %4199 = vmatprep.subr.bf16.mxu0 %v2915
        %4200 = vmatpush1.bf16.msra.mxu0 %v2914
        %4201 = vmatprep.subr.bf16.mxu0 %v2923
        %4202 = vmatpush1.bf16.msra.mxu0 %v2922
        %4203 = vmatprep.subr.bf16.mxu0 %v2931
        %4204 = vmatpush1.bf16.msra.mxu0 %v2930
        %4205 = vmatprep.subr.bf16.mxu0 %v2939
        %4206 = vmatpush1.bf16.msra.mxu0 %v2938
        %4207 = vmatprep.subr.bf16.mxu0 %v2947
        %4208 = vmatpush1.bf16.msra.mxu0 %v2946
        %4209 = vmatprep.subr.bf16.mxu0 %v2955
        %4210 = vmatpush1.bf16.msra.mxu0 %v2954
        %4211 = vmatprep.subr.bf16.mxu0 %v2963
        %4212 = vmatpush1.bf16.msra.mxu0 %v2962
        %4213 = vmatprep.subr.bf16.mxu0 %v2971
        %4214 = vmatpush1.bf16.msra.mxu0 %v2970
        %4215 = vmatprep.subr.bf16.mxu0 %v2979
        %4216 = vmatpush1.bf16.msra.mxu0 %v2978
        %4217 = vmatprep.subr.bf16.mxu0 %v2987
        %4218 = vmatpush1.bf16.msra.mxu0 %v2986
        %4219 = vmatprep.subr.bf16.mxu0 %v2995
        %4220 = vmatpush1.bf16.msra.mxu0 %v2994
        %4221 = vmatprep.subr.bf16.mxu0 %v3003
        %4222 = vmatpush1.bf16.msra.mxu0 %v3002
        %4223 = vmatprep.subr.bf16.mxu0 %v3011
        %4224 = vmatpush1.bf16.msra.mxu0 %v3010
        %4225 = vmatprep.subr.bf16.mxu0 %v3019
        %4226 = vmatpush1.bf16.msra.mxu0 %v3018
        %4227 = vmatprep.mubr.bf16.mxu0 %v4071
        %4228 = vmatmul.mubr.bf16.gmra.mrb[0].mxu0 %v4070
        %v4229 = vpop.f32.mrb[0].mxu0
        %v4230 = vadd.f32 0.0, %v4229
        %v4231 = vpop.f32.mrb[0].mxu0
        %v4232 = vadd.f32 0.0, %v4231
        %v4233 = vpop.f32.mrb[0].mxu0
        %v4234 = vpop.f32.mrb[0].mxu0
        %4235 = vdwg.mxu0
        %v4236 = vadd.f32 %v4062, %v4107
        %v4237 = vadd.f32 %v4063, %v4109
        %v4238 = vadd.f32 %v4064, %v4148
        %v4239 = vadd.f32 %v4065, %v4150
        %v4240 = vadd.f32 %v4066, %v4189
        %v4241 = vadd.f32 %v4067, %v4191
        %v4242 = vadd.f32 %v4068, %v4230
        %v4243 = vadd.f32 %v4069, %v4232
        %v4244 = vxor.u32 %v4236, 2147483648
        %v4245 = vxor.u32 %v4237, 2147483648
        %v4246 = vmul.f32 %v4244, 1.442695
        %v4247 = vpow.pop %v4246
        %v4248 = vmul.f32 %v4245, 1.442695
        %v4249 = vpow.pop %v4248
        %v4250 = vadd.f32 %v4247, 1.0
        %v4251 = vadd.f32 %v4249, 1.0
        %v4252 = vrcp.pop %v4250
        %v4253 = vmul.f32 1.0, %v4252
        %v4254 = vrcp.pop %v4251
        %v4255 = vmul.f32 1.0, %v4254
        %v4256 = vxor.u32 %v4238, 2147483648
        %v4257 = vxor.u32 %v4239, 2147483648
        %v4258 = vmul.f32 %v4256, 1.442695
        %v4259 = vpow.pop %v4258
        %v4260 = vmul.f32 %v4257, 1.442695
        %v4261 = vpow.pop %v4260
        %v4262 = vadd.f32 %v4259, 1.0
        %v4263 = vadd.f32 %v4261, 1.0
        %v4264 = vrcp.pop %v4262
        %v4265 = vmul.f32 1.0, %v4264
        %v4266 = vrcp.pop %v4263
        %v4267 = vmul.f32 1.0, %v4266
        %v4268 = vtanh.pop %v4240
        %v4269 = vtanh.pop %v4241
        %v4270 = vxor.u32 %v4242, 2147483648
        %v4271 = vxor.u32 %v4243, 2147483648
        %v4272 = vmul.f32 %v4270, 1.442695
        %v4273 = vpow.pop %v4272
        %v4274 = vmul.f32 %v4271, 1.442695
        %v4275 = vpow.pop %v4274
        %v4276 = vadd.f32 %v4273, 1.0
        %v4277 = vadd.f32 %v4275, 1.0
        %v4278 = vrcp.pop %v4276
        %v4279 = vmul.f32 1.0, %v4278
        %v4280 = vrcp.pop %v4277
        %v4281 = vmul.f32 1.0, %v4280
        %v4282 = vmul.f32 %v4265, %v4055
        %v4283 = vmul.f32 %v4267, %v4056
        %v4284 = vmul.f32 %v4253, %v4268
        %v4285 = vmul.f32 %v4255, %v4269
        %v4286 = vadd.f32 %v4282, %v4284
        %v4287 = vadd.f32 %v4283, %v4285
        %v4288 = vtanh.pop %v4286
        %v4289 = vtanh.pop %v4287
        %v4290 = vmul.f32 %v4279, %v4288
        %v4291 = vmul.f32 %v4281, %v4289
        %s4292 = scalar_lea.vmem [#allocation4], 320
        %v4293 = vld [vmem:[%s4292] sm:$0xff]
        %v4294 = vld [vmem:[%s4292 + $0x8] sm:$0xff]
        %v4295 = vld [vmem:[%s4292 + $0x10] sm:$0xff]
        %v4296 = vld [vmem:[%s4292 + $0x18] sm:$0xff]
        %v4297 = vld [vmem:[%s4292 + $0x20] sm:$0xff]
        %v4298 = vld [vmem:[%s4292 + $0x28] sm:$0xff]
        %v4299 = vld [vmem:[%s4292 + $0x30] sm:$0xff]
        %v4300 = vld [vmem:[%s4292 + $0x38] sm:$0xff]
        %v4301 = vpack.c.bf16 %v4290, %v4290
        %v4302 = vpack.c.bf16 %v4291, %v4291
        %4303 = vmatprep.subr.bf16.mxu0 %v2893
        %4304 = vmatpush1.bf16.msra.mxu0 %v2892
        %4305 = vmatprep.subr.bf16.mxu0 %v2901
        %4306 = vmatpush1.bf16.msra.mxu0 %v2900
        %4307 = vmatprep.subr.bf16.mxu0 %v2909
        %4308 = vmatpush1.bf16.msra.mxu0 %v2908
        %4309 = vmatprep.subr.bf16.mxu0 %v2917
        %4310 = vmatpush1.bf16.msra.mxu0 %v2916
        %4311 = vmatprep.subr.bf16.mxu0 %v2925
        %4312 = vmatpush1.bf16.msra.mxu0 %v2924
        %4313 = vmatprep.subr.bf16.mxu0 %v2933
        %4314 = vmatpush1.bf16.msra.mxu0 %v2932
        %4315 = vmatprep.subr.bf16.mxu0 %v2941
        %4316 = vmatpush1.bf16.msra.mxu0 %v2940
        %4317 = vmatprep.subr.bf16.mxu0 %v2949
        %4318 = vmatpush1.bf16.msra.mxu0 %v2948
        %4319 = vmatprep.subr.bf16.mxu0 %v2957
        %4320 = vmatpush1.bf16.msra.mxu0 %v2956
        %4321 = vmatprep.subr.bf16.mxu0 %v2965
        %4322 = vmatpush1.bf16.msra.mxu0 %v2964
        %4323 = vmatprep.subr.bf16.mxu0 %v2973
        %4324 = vmatpush1.bf16.msra.mxu0 %v2972
        %4325 = vmatprep.subr.bf16.mxu0 %v2981
        %4326 = vmatpush1.bf16.msra.mxu0 %v2980
        %4327 = vmatprep.subr.bf16.mxu0 %v2989
        %4328 = vmatpush1.bf16.msra.mxu0 %v2988
        %4329 = vmatprep.subr.bf16.mxu0 %v2997
        %4330 = vmatpush1.bf16.msra.mxu0 %v2996
        %4331 = vmatprep.subr.bf16.mxu0 %v3005
        %4332 = vmatpush1.bf16.msra.mxu0 %v3004
        %4333 = vmatprep.subr.bf16.mxu0 %v3013
        %4334 = vmatpush1.bf16.msra.mxu0 %v3012
        %4335 = vmatprep.mubr.bf16.mxu0 %v4302
        %4336 = vmatmul.mubr.bf16.gmra.mrb[0].mxu0 %v4301
        %v4337 = vpop.f32.mrb[0].mxu0
        %v4338 = vadd.f32 0.0, %v4337
        %v4339 = vpop.f32.mrb[0].mxu0
        %v4340 = vadd.f32 0.0, %v4339
        %v4341 = vpop.f32.mrb[0].mxu0
        %v4342 = vpop.f32.mrb[0].mxu0
        %4343 = vdwg.mxu0
        %4344 = vmatprep.subr.bf16.mxu0 %v2895
        %4345 = vmatpush1.bf16.msra.mxu0 %v2894
        %4346 = vmatprep.subr.bf16.mxu0 %v2903
        %4347 = vmatpush1.bf16.msra.mxu0 %v2902
        %4348 = vmatprep.subr.bf16.mxu0 %v2911
        %4349 = vmatpush1.bf16.msra.mxu0 %v2910
        %4350 = vmatprep.subr.bf16.mxu0 %v2919
        %4351 = vmatpush1.bf16.msra.mxu0 %v2918
        %4352 = vmatprep.subr.bf16.mxu0 %v2927
        %4353 = vmatpush1.bf16.msra.mxu0 %v2926
        %4354 = vmatprep.subr.bf16.mxu0 %v2935
        %4355 = vmatpush1.bf16.msra.mxu0 %v2934
        %4356 = vmatprep.subr.bf16.mxu0 %v2943
        %4357 = vmatpush1.bf16.msra.mxu0 %v2942
        %4358 = vmatprep.subr.bf16.mxu0 %v2951
        %4359 = vmatpush1.bf16.msra.mxu0 %v2950
        %4360 = vmatprep.subr.bf16.mxu0 %v2959
        %4361 = vmatpush1.bf16.msra.mxu0 %v2958
        %4362 = vmatprep.subr.bf16.mxu0 %v2967
        %4363 = vmatpush1.bf16.msra.mxu0 %v2966
        %4364 = vmatprep.subr.bf16.mxu0 %v2975
        %4365 = vmatpush1.bf16.msra.mxu0 %v2974
        %4366 = vmatprep.subr.bf16.mxu0 %v2983
        %4367 = vmatpush1.bf16.msra.mxu0 %v2982
        %4368 = vmatprep.subr.bf16.mxu0 %v2991
        %4369 = vmatpush1.bf16.msra.mxu0 %v2990
        %4370 = vmatprep.subr.bf16.mxu0 %v2999
        %4371 = vmatpush1.bf16.msra.mxu0 %v2998
        %4372 = vmatprep.subr.bf16.mxu0 %v3007
        %4373 = vmatpush1.bf16.msra.mxu0 %v3006
        %4374 = vmatprep.subr.bf16.mxu0 %v3015
        %4375 = vmatpush1.bf16.msra.mxu0 %v3014
        %4376 = vmatprep.mubr.bf16.mxu0 %v4302
        %4377 = vmatmul.mubr.bf16.gmra.mrb[0].mxu0 %v4301
        %v4378 = vpop.f32.mrb[0].mxu0
        %v4379 = vadd.f32 0.0, %v4378
        %v4380 = vpop.f32.mrb[0].mxu0
        %v4381 = vadd.f32 0.0, %v4380
        %v4382 = vpop.f32.mrb[0].mxu0
        %v4383 = vpop.f32.mrb[0].mxu0
        %4384 = vdwg.mxu0
        %4385 = vmatprep.subr.bf16.mxu0 %v2897
        %4386 = vmatpush1.bf16.msra.mxu0 %v2896
        %4387 = vmatprep.subr.bf16.mxu0 %v2905
        %4388 = vmatpush1.bf16.msra.mxu0 %v2904
        %4389 = vmatprep.subr.bf16.mxu0 %v2913
        %4390 = vmatpush1.bf16.msra.mxu0 %v2912
        %4391 = vmatprep.subr.bf16.mxu0 %v2921
        %4392 = vmatpush1.bf16.msra.mxu0 %v2920
        %4393 = vmatprep.subr.bf16.mxu0 %v2929
        %4394 = vmatpush1.bf16.msra.mxu0 %v2928
        %4395 = vmatprep.subr.bf16.mxu0 %v2937
        %4396 = vmatpush1.bf16.msra.mxu0 %v2936
        %4397 = vmatprep.subr.bf16.mxu0 %v2945
        %4398 = vmatpush1.bf16.msra.mxu0 %v2944
        %4399 = vmatprep.subr.bf16.mxu0 %v2953
        %4400 = vmatpush1.bf16.msra.mxu0 %v2952
        %4401 = vmatprep.subr.bf16.mxu0 %v2961
        %4402 = vmatpush1.bf16.msra.mxu0 %v2960
        %4403 = vmatprep.subr.bf16.mxu0 %v2969
        %4404 = vmatpush1.bf16.msra.mxu0 %v2968
        %4405 = vmatprep.subr.bf16.mxu0 %v2977
        %4406 = vmatpush1.bf16.msra.mxu0 %v2976
        %4407 = vmatprep.subr.bf16.mxu0 %v2985
        %4408 = vmatpush1.bf16.msra.mxu0 %v2984
        %4409 = vmatprep.subr.bf16.mxu0 %v2993
        %4410 = vmatpush1.bf16.msra.mxu0 %v2992
        %4411 = vmatprep.subr.bf16.mxu0 %v3001
        %4412 = vmatpush1.bf16.msra.mxu0 %v3000
        %4413 = vmatprep.subr.bf16.mxu0 %v3009
        %4414 = vmatpush1.bf16.msra.mxu0 %v3008
        %4415 = vmatprep.subr.bf16.mxu0 %v3017
        %4416 = vmatpush1.bf16.msra.mxu0 %v3016
        %4417 = vmatprep.mubr.bf16.mxu0 %v4302
        %4418 = vmatmul.mubr.bf16.gmra.mrb[0].mxu0 %v4301
        %v4419 = vpop.f32.mrb[0].mxu0
        %v4420 = vadd.f32 0.0, %v4419
        %v4421 = vpop.f32.mrb[0].mxu0
        %v4422 = vadd.f32 0.0, %v4421
        %v4423 = vpop.f32.mrb[0].mxu0
        %v4424 = vpop.f32.mrb[0].mxu0
        %4425 = vdwg.mxu0
        %4426 = vmatprep.subr.bf16.mxu0 %v2899
        %4427 = vmatpush1.bf16.msra.mxu0 %v2898
        %4428 = vmatprep.subr.bf16.mxu0 %v2907
        %4429 = vmatpush1.bf16.msra.mxu0 %v2906
        %4430 = vmatprep.subr.bf16.mxu0 %v2915
        %4431 = vmatpush1.bf16.msra.mxu0 %v2914
        %4432 = vmatprep.subr.bf16.mxu0 %v2923
        %4433 = vmatpush1.bf16.msra.mxu0 %v2922
        %4434 = vmatprep.subr.bf16.mxu0 %v2931
        %4435 = vmatpush1.bf16.msra.mxu0 %v2930
        %4436 = vmatprep.subr.bf16.mxu0 %v2939
        %4437 = vmatpush1.bf16.msra.mxu0 %v2938
        %4438 = vmatprep.subr.bf16.mxu0 %v2947
        %4439 = vmatpush1.bf16.msra.mxu0 %v2946
        %4440 = vmatprep.subr.bf16.mxu0 %v2955
        %4441 = vmatpush1.bf16.msra.mxu0 %v2954
        %4442 = vmatprep.subr.bf16.mxu0 %v2963
        %4443 = vmatpush1.bf16.msra.mxu0 %v2962
        %4444 = vmatprep.subr.bf16.mxu0 %v2971
        %4445 = vmatpush1.bf16.msra.mxu0 %v2970
        %4446 = vmatprep.subr.bf16.mxu0 %v2979
        %4447 = vmatpush1.bf16.msra.mxu0 %v2978
        %4448 = vmatprep.subr.bf16.mxu0 %v2987
        %4449 = vmatpush1.bf16.msra.mxu0 %v2986
        %4450 = vmatprep.subr.bf16.mxu0 %v2995
        %4451 = vmatpush1.bf16.msra.mxu0 %v2994
        %4452 = vmatprep.subr.bf16.mxu0 %v3003
        %4453 = vmatpush1.bf16.msra.mxu0 %v3002
        %4454 = vmatprep.subr.bf16.mxu0 %v3011
        %4455 = vmatpush1.bf16.msra.mxu0 %v3010
        %4456 = vmatprep.subr.bf16.mxu0 %v3019
        %4457 = vmatpush1.bf16.msra.mxu0 %v3018
        %4458 = vmatprep.mubr.bf16.mxu0 %v4302
        %4459 = vmatmul.mubr.bf16.gmra.mrb[0].mxu0 %v4301
        %v4460 = vpop.f32.mrb[0].mxu0
        %v4461 = vadd.f32 0.0, %v4460
        %v4462 = vpop.f32.mrb[0].mxu0
        %v4463 = vadd.f32 0.0, %v4462
        %v4464 = vpop.f32.mrb[0].mxu0
        %v4465 = vpop.f32.mrb[0].mxu0
        %4466 = vdwg.mxu0
        %v4467 = vadd.f32 %v4293, %v4338
        %v4468 = vadd.f32 %v4294, %v4340
        %v4469 = vadd.f32 %v4295, %v4379
        %v4470 = vadd.f32 %v4296, %v4381
        %v4471 = vadd.f32 %v4297, %v4420
        %v4472 = vadd.f32 %v4298, %v4422
        %v4473 = vadd.f32 %v4299, %v4461
        %v4474 = vadd.f32 %v4300, %v4463
        %v4475 = vxor.u32 %v4467, 2147483648
        %v4476 = vxor.u32 %v4468, 2147483648
        %v4477 = vmul.f32 %v4475, 1.442695
        %v4478 = vpow.pop %v4477
        %v4479 = vmul.f32 %v4476, 1.442695
        %v4480 = vpow.pop %v4479
        %v4481 = vadd.f32 %v4478, 1.0
        %v4482 = vadd.f32 %v4480, 1.0
        %v4483 = vrcp.pop %v4481
        %v4484 = vmul.f32 1.0, %v4483
        %v4485 = vrcp.pop %v4482
        %v4486 = vmul.f32 1.0, %v4485
        %v4487 = vxor.u32 %v4469, 2147483648
        %v4488 = vxor.u32 %v4470, 2147483648
        %v4489 = vmul.f32 %v4487, 1.442695
        %v4490 = vpow.pop %v4489
        %v4491 = vmul.f32 %v4488, 1.442695
        %v4492 = vpow.pop %v4491
        %v4493 = vadd.f32 %v4490, 1.0
        %v4494 = vadd.f32 %v4492, 1.0
        %v4495 = vrcp.pop %v4493
        %v4496 = vmul.f32 1.0, %v4495
        %v4497 = vrcp.pop %v4494
        %v4498 = vmul.f32 1.0, %v4497
        %v4499 = vtanh.pop %v4471
        %v4500 = vtanh.pop %v4472
        %v4501 = vxor.u32 %v4473, 2147483648
        %v4502 = vxor.u32 %v4474, 2147483648
        %v4503 = vmul.f32 %v4501, 1.442695
        %v4504 = vpow.pop %v4503
        %v4505 = vmul.f32 %v4502, 1.442695
        %v4506 = vpow.pop %v4505
        %v4507 = vadd.f32 %v4504, 1.0
        %v4508 = vadd.f32 %v4506, 1.0
        %v4509 = vrcp.pop %v4507
        %v4510 = vmul.f32 1.0, %v4509
        %v4511 = vrcp.pop %v4508
        %v4512 = vmul.f32 1.0, %v4511
        %v4513 = vmul.f32 %v4496, %v4286
        %v4514 = vmul.f32 %v4498, %v4287
        %v4515 = vmul.f32 %v4484, %v4499
        %v4516 = vmul.f32 %v4486, %v4500
        %v4517 = vadd.f32 %v4513, %v4515
        %v4518 = vadd.f32 %v4514, %v4516
        %v4519 = vtanh.pop %v4517
        %v4520 = vtanh.pop %v4518
        %v4521 = vmul.f32 %v4510, %v4519
        %v4522 = vmul.f32 %v4512, %v4520
        %s4523 = scalar_lea.vmem [#allocation4], 384
        %v4524 = vld [vmem:[%s4523] sm:$0xff]
        %v4525 = vld [vmem:[%s4523 + $0x8] sm:$0xff]
        %v4526 = vld [vmem:[%s4523 + $0x10] sm:$0xff]
        %v4527 = vld [vmem:[%s4523 + $0x18] sm:$0xff]
        %v4528 = vld [vmem:[%s4523 + $0x20] sm:$0xff]
        %v4529 = vld [vmem:[%s4523 + $0x28] sm:$0xff]
        %v4530 = vld [vmem:[%s4523 + $0x30] sm:$0xff]
        %v4531 = vld [vmem:[%s4523 + $0x38] sm:$0xff]
        %v4532 = vpack.c.bf16 %v4521, %v4521
        %v4533 = vpack.c.bf16 %v4522, %v4522
        %4534 = vmatprep.subr.bf16.mxu0 %v2893
        %4535 = vmatpush1.bf16.msra.mxu0 %v2892
        %4536 = vmatprep.subr.bf16.mxu0 %v2901
        %4537 = vmatpush1.bf16.msra.mxu0 %v2900
        %4538 = vmatprep.subr.bf16.mxu0 %v2909
        %4539 = vmatpush1.bf16.msra.mxu0 %v2908
        %4540 = vmatprep.subr.bf16.mxu0 %v2917
        %4541 = vmatpush1.bf16.msra.mxu0 %v2916
        %4542 = vmatprep.subr.bf16.mxu0 %v2925
        %4543 = vmatpush1.bf16.msra.mxu0 %v2924
        %4544 = vmatprep.subr.bf16.mxu0 %v2933
        %4545 = vmatpush1.bf16.msra.mxu0 %v2932
        %4546 = vmatprep.subr.bf16.mxu0 %v2941
        %4547 = vmatpush1.bf16.msra.mxu0 %v2940
        %4548 = vmatprep.subr.bf16.mxu0 %v2949
        %4549 = vmatpush1.bf16.msra.mxu0 %v2948
        %4550 = vmatprep.subr.bf16.mxu0 %v2957
        %4551 = vmatpush1.bf16.msra.mxu0 %v2956
        %4552 = vmatprep.subr.bf16.mxu0 %v2965
        %4553 = vmatpush1.bf16.msra.mxu0 %v2964
        %4554 = vmatprep.subr.bf16.mxu0 %v2973
        %4555 = vmatpush1.bf16.msra.mxu0 %v2972
        %4556 = vmatprep.subr.bf16.mxu0 %v2981
        %4557 = vmatpush1.bf16.msra.mxu0 %v2980
        %4558 = vmatprep.subr.bf16.mxu0 %v2989
        %4559 = vmatpush1.bf16.msra.mxu0 %v2988
        %4560 = vmatprep.subr.bf16.mxu0 %v2997
        %4561 = vmatpush1.bf16.msra.mxu0 %v2996
        %4562 = vmatprep.subr.bf16.mxu0 %v3005
        %4563 = vmatpush1.bf16.msra.mxu0 %v3004
        %4564 = vmatprep.subr.bf16.mxu0 %v3013
        %4565 = vmatpush1.bf16.msra.mxu0 %v3012
        %4566 = vmatprep.mubr.bf16.mxu0 %v4533
        %4567 = vmatmul.mubr.bf16.gmra.mrb[0].mxu0 %v4532
        %v4568 = vpop.f32.mrb[0].mxu0
        %v4569 = vadd.f32 0.0, %v4568
        %v4570 = vpop.f32.mrb[0].mxu0
        %v4571 = vadd.f32 0.0, %v4570
        %v4572 = vpop.f32.mrb[0].mxu0
        %v4573 = vpop.f32.mrb[0].mxu0
        %4574 = vdwg.mxu0
        %4575 = vmatprep.subr.bf16.mxu0 %v2895
        %4576 = vmatpush1.bf16.msra.mxu0 %v2894
        %4577 = vmatprep.subr.bf16.mxu0 %v2903
        %4578 = vmatpush1.bf16.msra.mxu0 %v2902
        %4579 = vmatprep.subr.bf16.mxu0 %v2911
        %4580 = vmatpush1.bf16.msra.mxu0 %v2910
        %4581 = vmatprep.subr.bf16.mxu0 %v2919
        %4582 = vmatpush1.bf16.msra.mxu0 %v2918
        %4583 = vmatprep.subr.bf16.mxu0 %v2927
        %4584 = vmatpush1.bf16.msra.mxu0 %v2926
        %4585 = vmatprep.subr.bf16.mxu0 %v2935
        %4586 = vmatpush1.bf16.msra.mxu0 %v2934
        %4587 = vmatprep.subr.bf16.mxu0 %v2943
        %4588 = vmatpush1.bf16.msra.mxu0 %v2942
        %4589 = vmatprep.subr.bf16.mxu0 %v2951
        %4590 = vmatpush1.bf16.msra.mxu0 %v2950
        %4591 = vmatprep.subr.bf16.mxu0 %v2959
        %4592 = vmatpush1.bf16.msra.mxu0 %v2958
        %4593 = vmatprep.subr.bf16.mxu0 %v2967
        %4594 = vmatpush1.bf16.msra.mxu0 %v2966
        %4595 = vmatprep.subr.bf16.mxu0 %v2975
        %4596 = vmatpush1.bf16.msra.mxu0 %v2974
        %4597 = vmatprep.subr.bf16.mxu0 %v2983
        %4598 = vmatpush1.bf16.msra.mxu0 %v2982
        %4599 = vmatprep.subr.bf16.mxu0 %v2991
        %4600 = vmatpush1.bf16.msra.mxu0 %v2990
        %4601 = vmatprep.subr.bf16.mxu0 %v2999
        %4602 = vmatpush1.bf16.msra.mxu0 %v2998
        %4603 = vmatprep.subr.bf16.mxu0 %v3007
        %4604 = vmatpush1.bf16.msra.mxu0 %v3006
        %4605 = vmatprep.subr.bf16.mxu0 %v3015
        %4606 = vmatpush1.bf16.msra.mxu0 %v3014
        %4607 = vmatprep.mubr.bf16.mxu0 %v4533
        %4608 = vmatmul.mubr.bf16.gmra.mrb[0].mxu0 %v4532
        %v4609 = vpop.f32.mrb[0].mxu0
        %v4610 = vadd.f32 0.0, %v4609
        %v4611 = vpop.f32.mrb[0].mxu0
        %v4612 = vadd.f32 0.0, %v4611
        %v4613 = vpop.f32.mrb[0].mxu0
        %v4614 = vpop.f32.mrb[0].mxu0
        %4615 = vdwg.mxu0
        %4616 = vmatprep.subr.bf16.mxu0 %v2897
        %4617 = vmatpush1.bf16.msra.mxu0 %v2896
        %4618 = vmatprep.subr.bf16.mxu0 %v2905
        %4619 = vmatpush1.bf16.msra.mxu0 %v2904
        %4620 = vmatprep.subr.bf16.mxu0 %v2913
        %4621 = vmatpush1.bf16.msra.mxu0 %v2912
        %4622 = vmatprep.subr.bf16.mxu0 %v2921
        %4623 = vmatpush1.bf16.msra.mxu0 %v2920
        %4624 = vmatprep.subr.bf16.mxu0 %v2929
        %4625 = vmatpush1.bf16.msra.mxu0 %v2928
        %4626 = vmatprep.subr.bf16.mxu0 %v2937
        %4627 = vmatpush1.bf16.msra.mxu0 %v2936
        %4628 = vmatprep.subr.bf16.mxu0 %v2945
        %4629 = vmatpush1.bf16.msra.mxu0 %v2944
        %4630 = vmatprep.subr.bf16.mxu0 %v2953
        %4631 = vmatpush1.bf16.msra.mxu0 %v2952
        %4632 = vmatprep.subr.bf16.mxu0 %v2961
        %4633 = vmatpush1.bf16.msra.mxu0 %v2960
        %4634 = vmatprep.subr.bf16.mxu0 %v2969
        %4635 = vmatpush1.bf16.msra.mxu0 %v2968
        %4636 = vmatprep.subr.bf16.mxu0 %v2977
        %4637 = vmatpush1.bf16.msra.mxu0 %v2976
        %4638 = vmatprep.subr.bf16.mxu0 %v2985
        %4639 = vmatpush1.bf16.msra.mxu0 %v2984
        %4640 = vmatprep.subr.bf16.mxu0 %v2993
        %4641 = vmatpush1.bf16.msra.mxu0 %v2992
        %4642 = vmatprep.subr.bf16.mxu0 %v3001
        %4643 = vmatpush1.bf16.msra.mxu0 %v3000
        %4644 = vmatprep.subr.bf16.mxu0 %v3009
        %4645 = vmatpush1.bf16.msra.mxu0 %v3008
        %4646 = vmatprep.subr.bf16.mxu0 %v3017
        %4647 = vmatpush1.bf16.msra.mxu0 %v3016
        %4648 = vmatprep.mubr.bf16.mxu0 %v4533
        %4649 = vmatmul.mubr.bf16.gmra.mrb[0].mxu0 %v4532
        %v4650 = vpop.f32.mrb[0].mxu0
        %v4651 = vadd.f32 0.0, %v4650
        %v4652 = vpop.f32.mrb[0].mxu0
        %v4653 = vadd.f32 0.0, %v4652
        %v4654 = vpop.f32.mrb[0].mxu0
        %v4655 = vpop.f32.mrb[0].mxu0
        %4656 = vdwg.mxu0
        %4657 = vmatprep.subr.bf16.mxu0 %v2899
        %4658 = vmatpush1.bf16.msra.mxu0 %v2898
        %4659 = vmatprep.subr.bf16.mxu0 %v2907
        %4660 = vmatpush1.bf16.msra.mxu0 %v2906
        %4661 = vmatprep.subr.bf16.mxu0 %v2915
        %4662 = vmatpush1.bf16.msra.mxu0 %v2914
        %4663 = vmatprep.subr.bf16.mxu0 %v2923
        %4664 = vmatpush1.bf16.msra.mxu0 %v2922
        %4665 = vmatprep.subr.bf16.mxu0 %v2931
        %4666 = vmatpush1.bf16.msra.mxu0 %v2930
        %4667 = vmatprep.subr.bf16.mxu0 %v2939
        %4668 = vmatpush1.bf16.msra.mxu0 %v2938
        %4669 = vmatprep.subr.bf16.mxu0 %v2947
        %4670 = vmatpush1.bf16.msra.mxu0 %v2946
        %4671 = vmatprep.subr.bf16.mxu0 %v2955
        %4672 = vmatpush1.bf16.msra.mxu0 %v2954
        %4673 = vmatprep.subr.bf16.mxu0 %v2963
        %4674 = vmatpush1.bf16.msra.mxu0 %v2962
        %4675 = vmatprep.subr.bf16.mxu0 %v2971
        %4676 = vmatpush1.bf16.msra.mxu0 %v2970
        %4677 = vmatprep.subr.bf16.mxu0 %v2979
        %4678 = vmatpush1.bf16.msra.mxu0 %v2978
        %4679 = vmatprep.subr.bf16.mxu0 %v2987
        %4680 = vmatpush1.bf16.msra.mxu0 %v2986
        %4681 = vmatprep.subr.bf16.mxu0 %v2995
        %4682 = vmatpush1.bf16.msra.mxu0 %v2994
        %4683 = vmatprep.subr.bf16.mxu0 %v3003
        %4684 = vmatpush1.bf16.msra.mxu0 %v3002
        %4685 = vmatprep.subr.bf16.mxu0 %v3011
        %4686 = vmatpush1.bf16.msra.mxu0 %v3010
        %4687 = vmatprep.subr.bf16.mxu0 %v3019
        %4688 = vmatpush1.bf16.msra.mxu0 %v3018
        %4689 = vmatprep.mubr.bf16.mxu0 %v4533
        %4690 = vmatmul.mubr.bf16.gmra.mrb[0].mxu0 %v4532
        %v4691 = vpop.f32.mrb[0].mxu0
        %v4692 = vadd.f32 0.0, %v4691
        %v4693 = vpop.f32.mrb[0].mxu0
        %v4694 = vadd.f32 0.0, %v4693
        %v4695 = vpop.f32.mrb[0].mxu0
        %v4696 = vpop.f32.mrb[0].mxu0
        %4697 = vdwg.mxu0
        %v4698 = vadd.f32 %v4524, %v4569
        %v4699 = vadd.f32 %v4525, %v4571
        %v4700 = vadd.f32 %v4526, %v4610
        %v4701 = vadd.f32 %v4527, %v4612
        %v4702 = vadd.f32 %v4528, %v4651
        %v4703 = vadd.f32 %v4529, %v4653
        %v4704 = vadd.f32 %v4530, %v4692
        %v4705 = vadd.f32 %v4531, %v4694
        %v4706 = vxor.u32 %v4698, 2147483648
        %v4707 = vxor.u32 %v4699, 2147483648
        %v4708 = vmul.f32 %v4706, 1.442695
        %v4709 = vpow.pop %v4708
        %v4710 = vmul.f32 %v4707, 1.442695
        %v4711 = vpow.pop %v4710
        %v4712 = vadd.f32 %v4709, 1.0
        %v4713 = vadd.f32 %v4711, 1.0
        %v4714 = vrcp.pop %v4712
        %v4715 = vmul.f32 1.0, %v4714
        %v4716 = vrcp.pop %v4713
        %v4717 = vmul.f32 1.0, %v4716
        %v4718 = vxor.u32 %v4700, 2147483648
        %v4719 = vxor.u32 %v4701, 2147483648
        %v4720 = vmul.f32 %v4718, 1.442695
        %v4721 = vpow.pop %v4720
        %v4722 = vmul.f32 %v4719, 1.442695
        %v4723 = vpow.pop %v4722
        %v4724 = vadd.f32 %v4721, 1.0
        %v4725 = vadd.f32 %v4723, 1.0
        %v4726 = vrcp.pop %v4724
        %v4727 = vmul.f32 1.0, %v4726
        %v4728 = vrcp.pop %v4725
        %v4729 = vmul.f32 1.0, %v4728
        %v4730 = vtanh.pop %v4702
        %v4731 = vtanh.pop %v4703
        %v4732 = vxor.u32 %v4704, 2147483648
        %v4733 = vxor.u32 %v4705, 2147483648
        %v4734 = vmul.f32 %v4732, 1.442695
        %v4735 = vpow.pop %v4734
        %v4736 = vmul.f32 %v4733, 1.442695
        %v4737 = vpow.pop %v4736
        %v4738 = vadd.f32 %v4735, 1.0
        %v4739 = vadd.f32 %v4737, 1.0
        %v4740 = vrcp.pop %v4738
        %v4741 = vmul.f32 1.0, %v4740
        %v4742 = vrcp.pop %v4739
        %v4743 = vmul.f32 1.0, %v4742
        %v4744 = vmul.f32 %v4727, %v4517
        %v4745 = vmul.f32 %v4729, %v4518
        %v4746 = vmul.f32 %v4715, %v4730
        %v4747 = vmul.f32 %v4717, %v4731
        %v4748 = vadd.f32 %v4744, %v4746
        %v4749 = vadd.f32 %v4745, %v4747
        %v4750 = vtanh.pop %v4748
        %v4751 = vtanh.pop %v4749
        %v4752 = vmul.f32 %v4741, %v4750
        %v4753 = vmul.f32 %v4743, %v4751
        %s4754 = scalar_lea.vmem [#allocation4], 448
        %v4755 = vld [vmem:[%s4754] sm:$0xff]
        %v4756 = vld [vmem:[%s4754 + $0x8] sm:$0xff]
        %v4757 = vld [vmem:[%s4754 + $0x10] sm:$0xff]
        %v4758 = vld [vmem:[%s4754 + $0x18] sm:$0xff]
        %v4759 = vld [vmem:[%s4754 + $0x20] sm:$0xff]
        %v4760 = vld [vmem:[%s4754 + $0x28] sm:$0xff]
        %v4761 = vld [vmem:[%s4754 + $0x30] sm:$0xff]
        %v4762 = vld [vmem:[%s4754 + $0x38] sm:$0xff]
        %v4763 = vpack.c.bf16 %v4752, %v4752
        %v4764 = vpack.c.bf16 %v4753, %v4753
        %4765 = vmatprep.subr.bf16.mxu0 %v2893
        %4766 = vmatpush1.bf16.msra.mxu0 %v2892
        %4767 = vmatprep.subr.bf16.mxu0 %v2901
        %4768 = vmatpush1.bf16.msra.mxu0 %v2900
        %4769 = vmatprep.subr.bf16.mxu0 %v2909
        %4770 = vmatpush1.bf16.msra.mxu0 %v2908
        %4771 = vmatprep.subr.bf16.mxu0 %v2917
        %4772 = vmatpush1.bf16.msra.mxu0 %v2916
        %4773 = vmatprep.subr.bf16.mxu0 %v2925
        %4774 = vmatpush1.bf16.msra.mxu0 %v2924
        %4775 = vmatprep.subr.bf16.mxu0 %v2933
        %4776 = vmatpush1.bf16.msra.mxu0 %v2932
        %4777 = vmatprep.subr.bf16.mxu0 %v2941
        %4778 = vmatpush1.bf16.msra.mxu0 %v2940
        %4779 = vmatprep.subr.bf16.mxu0 %v2949
        %4780 = vmatpush1.bf16.msra.mxu0 %v2948
        %4781 = vmatprep.subr.bf16.mxu0 %v2957
        %4782 = vmatpush1.bf16.msra.mxu0 %v2956
        %4783 = vmatprep.subr.bf16.mxu0 %v2965
        %4784 = vmatpush1.bf16.msra.mxu0 %v2964
        %4785 = vmatprep.subr.bf16.mxu0 %v2973
        %4786 = vmatpush1.bf16.msra.mxu0 %v2972
        %4787 = vmatprep.subr.bf16.mxu0 %v2981
        %4788 = vmatpush1.bf16.msra.mxu0 %v2980
        %4789 = vmatprep.subr.bf16.mxu0 %v2989
        %4790 = vmatpush1.bf16.msra.mxu0 %v2988
        %4791 = vmatprep.subr.bf16.mxu0 %v2997
        %4792 = vmatpush1.bf16.msra.mxu0 %v2996
        %4793 = vmatprep.subr.bf16.mxu0 %v3005
        %4794 = vmatpush1.bf16.msra.mxu0 %v3004
        %4795 = vmatprep.subr.bf16.mxu0 %v3013
        %4796 = vmatpush1.bf16.msra.mxu0 %v3012
        %4797 = vmatprep.mubr.bf16.mxu0 %v4764
        %4798 = vmatmul.mubr.bf16.gmra.mrb[0].mxu0 %v4763
        %v4799 = vpop.f32.mrb[0].mxu0
        %v4800 = vadd.f32 0.0, %v4799
        %v4801 = vpop.f32.mrb[0].mxu0
        %v4802 = vadd.f32 0.0, %v4801
        %v4803 = vpop.f32.mrb[0].mxu0
        %v4804 = vpop.f32.mrb[0].mxu0
        %4805 = vdwg.mxu0
        %4806 = vmatprep.subr.bf16.mxu0 %v2895
        %4807 = vmatpush1.bf16.msra.mxu0 %v2894
        %4808 = vmatprep.subr.bf16.mxu0 %v2903
        %4809 = vmatpush1.bf16.msra.mxu0 %v2902
        %4810 = vmatprep.subr.bf16.mxu0 %v2911
        %4811 = vmatpush1.bf16.msra.mxu0 %v2910
        %4812 = vmatprep.subr.bf16.mxu0 %v2919
        %4813 = vmatpush1.bf16.msra.mxu0 %v2918
        %4814 = vmatprep.subr.bf16.mxu0 %v2927
        %4815 = vmatpush1.bf16.msra.mxu0 %v2926
        %4816 = vmatprep.subr.bf16.mxu0 %v2935
        %4817 = vmatpush1.bf16.msra.mxu0 %v2934
        %4818 = vmatprep.subr.bf16.mxu0 %v2943
        %4819 = vmatpush1.bf16.msra.mxu0 %v2942
        %4820 = vmatprep.subr.bf16.mxu0 %v2951
        %4821 = vmatpush1.bf16.msra.mxu0 %v2950
        %4822 = vmatprep.subr.bf16.mxu0 %v2959
        %4823 = vmatpush1.bf16.msra.mxu0 %v2958
        %4824 = vmatprep.subr.bf16.mxu0 %v2967
        %4825 = vmatpush1.bf16.msra.mxu0 %v2966
        %4826 = vmatprep.subr.bf16.mxu0 %v2975
        %4827 = vmatpush1.bf16.msra.mxu0 %v2974
        %4828 = vmatprep.subr.bf16.mxu0 %v2983
        %4829 = vmatpush1.bf16.msra.mxu0 %v2982
        %4830 = vmatprep.subr.bf16.mxu0 %v2991
        %4831 = vmatpush1.bf16.msra.mxu0 %v2990
        %4832 = vmatprep.subr.bf16.mxu0 %v2999
        %4833 = vmatpush1.bf16.msra.mxu0 %v2998
        %4834 = vmatprep.subr.bf16.mxu0 %v3007
        %4835 = vmatpush1.bf16.msra.mxu0 %v3006
        %4836 = vmatprep.subr.bf16.mxu0 %v3015
        %4837 = vmatpush1.bf16.msra.mxu0 %v3014
        %4838 = vmatprep.mubr.bf16.mxu0 %v4764
        %4839 = vmatmul.mubr.bf16.gmra.mrb[0].mxu0 %v4763
        %v4840 = vpop.f32.mrb[0].mxu0
        %v4841 = vadd.f32 0.0, %v4840
        %v4842 = vpop.f32.mrb[0].mxu0
        %v4843 = vadd.f32 0.0, %v4842
        %v4844 = vpop.f32.mrb[0].mxu0
        %v4845 = vpop.f32.mrb[0].mxu0
        %4846 = vdwg.mxu0
        %4847 = vmatprep.subr.bf16.mxu0 %v2897
        %4848 = vmatpush1.bf16.msra.mxu0 %v2896
        %4849 = vmatprep.subr.bf16.mxu0 %v2905
        %4850 = vmatpush1.bf16.msra.mxu0 %v2904
        %4851 = vmatprep.subr.bf16.mxu0 %v2913
        %4852 = vmatpush1.bf16.msra.mxu0 %v2912
        %4853 = vmatprep.subr.bf16.mxu0 %v2921
        %4854 = vmatpush1.bf16.msra.mxu0 %v2920
        %4855 = vmatprep.subr.bf16.mxu0 %v2929
        %4856 = vmatpush1.bf16.msra.mxu0 %v2928
        %4857 = vmatprep.subr.bf16.mxu0 %v2937
        %4858 = vmatpush1.bf16.msra.mxu0 %v2936
        %4859 = vmatprep.subr.bf16.mxu0 %v2945
        %4860 = vmatpush1.bf16.msra.mxu0 %v2944
        %4861 = vmatprep.subr.bf16.mxu0 %v2953
        %4862 = vmatpush1.bf16.msra.mxu0 %v2952
        %4863 = vmatprep.subr.bf16.mxu0 %v2961
        %4864 = vmatpush1.bf16.msra.mxu0 %v2960
        %4865 = vmatprep.subr.bf16.mxu0 %v2969
        %4866 = vmatpush1.bf16.msra.mxu0 %v2968
        %4867 = vmatprep.subr.bf16.mxu0 %v2977
        %4868 = vmatpush1.bf16.msra.mxu0 %v2976
        %4869 = vmatprep.subr.bf16.mxu0 %v2985
        %4870 = vmatpush1.bf16.msra.mxu0 %v2984
        %4871 = vmatprep.subr.bf16.mxu0 %v2993
        %4872 = vmatpush1.bf16.msra.mxu0 %v2992
        %4873 = vmatprep.subr.bf16.mxu0 %v3001
        %4874 = vmatpush1.bf16.msra.mxu0 %v3000
        %4875 = vmatprep.subr.bf16.mxu0 %v3009
        %4876 = vmatpush1.bf16.msra.mxu0 %v3008
        %4877 = vmatprep.subr.bf16.mxu0 %v3017
        %4878 = vmatpush1.bf16.msra.mxu0 %v3016
        %4879 = vmatprep.mubr.bf16.mxu0 %v4764
        %4880 = vmatmul.mubr.bf16.gmra.mrb[0].mxu0 %v4763
        %v4881 = vpop.f32.mrb[0].mxu0
        %v4882 = vadd.f32 0.0, %v4881
        %v4883 = vpop.f32.mrb[0].mxu0
        %v4884 = vadd.f32 0.0, %v4883
        %v4885 = vpop.f32.mrb[0].mxu0
        %v4886 = vpop.f32.mrb[0].mxu0
        %4887 = vdwg.mxu0
        %4888 = vmatprep.subr.bf16.mxu0 %v2899
        %4889 = vmatpush1.bf16.msra.mxu0 %v2898
        %4890 = vmatprep.subr.bf16.mxu0 %v2907
        %4891 = vmatpush1.bf16.msra.mxu0 %v2906
        %4892 = vmatprep.subr.bf16.mxu0 %v2915
        %4893 = vmatpush1.bf16.msra.mxu0 %v2914
        %4894 = vmatprep.subr.bf16.mxu0 %v2923
        %4895 = vmatpush1.bf16.msra.mxu0 %v2922
        %4896 = vmatprep.subr.bf16.mxu0 %v2931
        %4897 = vmatpush1.bf16.msra.mxu0 %v2930
        %4898 = vmatprep.subr.bf16.mxu0 %v2939
        %4899 = vmatpush1.bf16.msra.mxu0 %v2938
        %4900 = vmatprep.subr.bf16.mxu0 %v2947
        %4901 = vmatpush1.bf16.msra.mxu0 %v2946
        %4902 = vmatprep.subr.bf16.mxu0 %v2955
        %4903 = vmatpush1.bf16.msra.mxu0 %v2954
        %4904 = vmatprep.subr.bf16.mxu0 %v2963
        %4905 = vmatpush1.bf16.msra.mxu0 %v2962
        %4906 = vmatprep.subr.bf16.mxu0 %v2971
        %4907 = vmatpush1.bf16.msra.mxu0 %v2970
        %4908 = vmatprep.subr.bf16.mxu0 %v2979
        %4909 = vmatpush1.bf16.msra.mxu0 %v2978
        %4910 = vmatprep.subr.bf16.mxu0 %v2987
        %4911 = vmatpush1.bf16.msra.mxu0 %v2986
        %4912 = vmatprep.subr.bf16.mxu0 %v2995
        %4913 = vmatpush1.bf16.msra.mxu0 %v2994
        %4914 = vmatprep.subr.bf16.mxu0 %v3003
        %4915 = vmatpush1.bf16.msra.mxu0 %v3002
        %4916 = vmatprep.subr.bf16.mxu0 %v3011
        %4917 = vmatpush1.bf16.msra.mxu0 %v3010
        %4918 = vmatprep.subr.bf16.mxu0 %v3019
        %4919 = vmatpush1.bf16.msra.mxu0 %v3018
        %4920 = vmatprep.mubr.bf16.mxu0 %v4764
        %4921 = vmatmul.mubr.bf16.gmra.mrb[0].mxu0 %v4763
        %v4922 = vpop.f32.mrb[0].mxu0
        %v4923 = vadd.f32 0.0, %v4922
        %v4924 = vpop.f32.mrb[0].mxu0
        %v4925 = vadd.f32 0.0, %v4924
        %v4926 = vpop.f32.mrb[0].mxu0
        %v4927 = vpop.f32.mrb[0].mxu0
        %4928 = vdwg.mxu0
        %v4929 = vadd.f32 %v4755, %v4800
        %v4930 = vadd.f32 %v4756, %v4802
        %v4931 = vadd.f32 %v4757, %v4841
        %v4932 = vadd.f32 %v4758, %v4843
        %v4933 = vadd.f32 %v4759, %v4882
        %v4934 = vadd.f32 %v4760, %v4884
        %v4935 = vadd.f32 %v4761, %v4923
        %v4936 = vadd.f32 %v4762, %v4925
        %v4937 = vxor.u32 %v4929, 2147483648
        %v4938 = vxor.u32 %v4930, 2147483648
        %v4939 = vmul.f32 %v4937, 1.442695
        %v4940 = vpow.pop %v4939
        %v4941 = vmul.f32 %v4938, 1.442695
        %v4942 = vpow.pop %v4941
        %v4943 = vadd.f32 %v4940, 1.0
        %v4944 = vadd.f32 %v4942, 1.0
        %v4945 = vrcp.pop %v4943
        %v4946 = vmul.f32 1.0, %v4945
        %v4947 = vrcp.pop %v4944
        %v4948 = vmul.f32 1.0, %v4947
        %v4949 = vxor.u32 %v4931, 2147483648
        %v4950 = vxor.u32 %v4932, 2147483648
        %v4951 = vmul.f32 %v4949, 1.442695
        %v4952 = vpow.pop %v4951
        %v4953 = vmul.f32 %v4950, 1.442695
        %v4954 = vpow.pop %v4953
        %v4955 = vadd.f32 %v4952, 1.0
        %v4956 = vadd.f32 %v4954, 1.0
        %v4957 = vrcp.pop %v4955
        %v4958 = vmul.f32 1.0, %v4957
        %v4959 = vrcp.pop %v4956
        %v4960 = vmul.f32 1.0, %v4959
        %v4961 = vtanh.pop %v4933
        %v4962 = vtanh.pop %v4934
        %v4963 = vxor.u32 %v4935, 2147483648
        %v4964 = vxor.u32 %v4936, 2147483648
        %v4965 = vmul.f32 %v4963, 1.442695
        %v4966 = vpow.pop %v4965
        %v4967 = vmul.f32 %v4964, 1.442695
        %v4968 = vpow.pop %v4967
        %v4969 = vadd.f32 %v4966, 1.0
        %v4970 = vadd.f32 %v4968, 1.0
        %v4971 = vrcp.pop %v4969
        %v4972 = vmul.f32 1.0, %v4971
        %v4973 = vrcp.pop %v4970
        %v4974 = vmul.f32 1.0, %v4973
        %v4975 = vmul.f32 %v4958, %v4748
        %v4976 = vmul.f32 %v4960, %v4749
        %v4977 = vmul.f32 %v4946, %v4961
        %v4978 = vmul.f32 %v4948, %v4962
        %v4979 = vadd.f32 %v4975, %v4977
        %v4980 = vadd.f32 %v4976, %v4978
        %v4981 = vtanh.pop %v4979
        %v4982 = vtanh.pop %v4980
        %v4983 = vmul.f32 %v4972, %v4981
        %v4984 = vmul.f32 %v4974, %v4982
        %4985 = vst [vmem:[#allocation2] sm:$0xff] %v4983
        %4986 = vst [vmem:[#allocation2 + $0x8] sm:$0xff] %v4984
        %4987 = vst [vmem:[#allocation3] sm:$0xff] %v4979
        %4988 = vst [vmem:[#allocation3 + $0x8] sm:$0xff] %v4980
        %p4989 = scmp.eq.s32.totalorder %s30, 1
        // Predicated region
        $region77: #{lstm_net_forward.1} parent=59 // pred_check
          %p4990 = pneg %p4989
        $region78: #{lstm_net_forward.1} parent=59 // pred_check_branch
          %4992 = sbr.rel (%p4990) target = $region80
        $region79: #{lstm_net_forward.1} parent=59 // pred_region
          %v4993 = vpack.c.bf16 %v4983, %v4983
          %v4994 = vpack.c.bf16 %v4984, %v4984
          %v4995 = vld [vmem:[#allocation8] sm:$0xff]
          %v4996 = vld [vmem:[#allocation8 + $0x8] sm:$0xff]
          %v4997 = vld [vmem:[#allocation8 + $0x10] sm:$0xff]
          %v4998 = vld [vmem:[#allocation8 + $0x18] sm:$0xff]
          %v4999 = vld [vmem:[#allocation8 + $0x20] sm:$0xff]
          %v5000 = vld [vmem:[#allocation8 + $0x28] sm:$0xff]
          %v5001 = vld [vmem:[#allocation8 + $0x30] sm:$0xff]
          %v5002 = vld [vmem:[#allocation8 + $0x38] sm:$0xff]
          %v5003 = vld [vmem:[#allocation8 + $0x40] sm:$0xff]
          %v5004 = vld [vmem:[#allocation8 + $0x48] sm:$0xff]
          %v5005 = vld [vmem:[#allocation8 + $0x50] sm:$0xff]
          %v5006 = vld [vmem:[#allocation8 + $0x58] sm:$0xff]
          %v5007 = vld [vmem:[#allocation8 + $0x60] sm:$0xff]
          %v5008 = vld [vmem:[#allocation8 + $0x68] sm:$0xff]
          %v5009 = vld [vmem:[#allocation8 + $0x70] sm:$0xff]
          %v5010 = vld [vmem:[#allocation8 + $0x78] sm:$0xff]
          %v5011 = vld [vmem:[#allocation8 + $0x80] sm:$0xff]
          %v5012 = vld [vmem:[#allocation8 + $0x88] sm:$0xff]
          %v5013 = vld [vmem:[#allocation8 + $0x90] sm:$0xff]
          %v5014 = vld [vmem:[#allocation8 + $0x98] sm:$0xff]
          %v5015 = vld [vmem:[#allocation8 + $0xa0] sm:$0xff]
          %v5016 = vld [vmem:[#allocation8 + $0xa8] sm:$0xff]
          %v5017 = vld [vmem:[#allocation8 + $0xb0] sm:$0xff]
          %v5018 = vld [vmem:[#allocation8 + $0xb8] sm:$0xff]
          %v5019 = vld [vmem:[#allocation8 + $0xc0] sm:$0xff]
          %v5020 = vld [vmem:[#allocation8 + $0xc8] sm:$0xff]
          %v5021 = vld [vmem:[#allocation8 + $0xd0] sm:$0xff]
          %v5022 = vld [vmem:[#allocation8 + $0xd8] sm:$0xff]
          %v5023 = vld [vmem:[#allocation8 + $0xe0] sm:$0xff]
          %v5024 = vld [vmem:[#allocation8 + $0xe8] sm:$0xff]
          %v5025 = vld [vmem:[#allocation8 + $0xf0] sm:$0xff]
          %v5026 = vld [vmem:[#allocation8 + $0xf8] sm:$0xff]
          %v5027 = vld [vmem:[%s5] sm:$0x3]
          %v5029 = vlaneseq
          %v5030 = vshrl.u32 %v5029, 7
          %v5031 = vsub.s32 0, %v5030
          %v5032 = vrot.slane %v5027, %v5031
          %v5033 = vlaneseq
          %v5034 = vshrl.u32 %v5033, 7
          %v5035 = vsub.s32 1, %v5034
          %v5036 = vrot.slane %v5027, %v5035
          %v5071 = vunpack.c.l.b16 %v4995
          %v5072 = vunpack.c.h.b16 %v4995
          %v5073 = vunpack.c.l.b16 %v4996
          %v5074 = vunpack.c.h.b16 %v4996
          %v5075 = vunpack.c.l.b16 %v4997
          %v5076 = vunpack.c.h.b16 %v4997
          %v5077 = vunpack.c.l.b16 %v4998
          %v5078 = vunpack.c.h.b16 %v4998
          %v5079 = vunpack.c.l.b16 %v4999
          %v5080 = vunpack.c.h.b16 %v4999
          %v5081 = vunpack.c.l.b16 %v5000
          %v5082 = vunpack.c.h.b16 %v5000
          %v5083 = vunpack.c.l.b16 %v5001
          %v5084 = vunpack.c.h.b16 %v5001
          %v5085 = vunpack.c.l.b16 %v5002
          %v5086 = vunpack.c.h.b16 %v5002
          %v5087 = vunpack.c.l.b16 %v5003
          %v5088 = vunpack.c.h.b16 %v5003
          %v5089 = vunpack.c.l.b16 %v5004
          %v5090 = vunpack.c.h.b16 %v5004
          %v5091 = vunpack.c.l.b16 %v5005
          %v5092 = vunpack.c.h.b16 %v5005
          %v5093 = vunpack.c.l.b16 %v5006
          %v5094 = vunpack.c.h.b16 %v5006
          %v5095 = vunpack.c.l.b16 %v5007
          %v5096 = vunpack.c.h.b16 %v5007
          %v5097 = vunpack.c.l.b16 %v5008
          %v5098 = vunpack.c.h.b16 %v5008
          %v5099 = vunpack.c.l.b16 %v5009
          %v5100 = vunpack.c.h.b16 %v5009
          %v5101 = vunpack.c.l.b16 %v5010
          %v5102 = vunpack.c.h.b16 %v5010
          %v5103 = vunpack.c.l.b16 %v5011
          %v5104 = vunpack.c.h.b16 %v5011
          %v5105 = vunpack.c.l.b16 %v5012
          %v5106 = vunpack.c.h.b16 %v5012
          %v5107 = vunpack.c.l.b16 %v5013
          %v5108 = vunpack.c.h.b16 %v5013
          %v5109 = vunpack.c.l.b16 %v5014
          %v5110 = vunpack.c.h.b16 %v5014
          %v5111 = vunpack.c.l.b16 %v5015
          %v5112 = vunpack.c.h.b16 %v5015
          %v5113 = vunpack.c.l.b16 %v5016
          %v5114 = vunpack.c.h.b16 %v5016
          %v5115 = vunpack.c.l.b16 %v5017
          %v5116 = vunpack.c.h.b16 %v5017
          %v5117 = vunpack.c.l.b16 %v5018
          %v5118 = vunpack.c.h.b16 %v5018
          %v5119 = vunpack.c.l.b16 %v5019
          %v5120 = vunpack.c.h.b16 %v5019
          %v5121 = vunpack.c.l.b16 %v5020
          %v5122 = vunpack.c.h.b16 %v5020
          %v5123 = vunpack.c.l.b16 %v5021
          %v5124 = vunpack.c.h.b16 %v5021
          %v5125 = vunpack.c.l.b16 %v5022
          %v5126 = vunpack.c.h.b16 %v5022
          %v5127 = vunpack.c.l.b16 %v5023
          %v5128 = vunpack.c.h.b16 %v5023
          %v5129 = vunpack.c.l.b16 %v5024
          %v5130 = vunpack.c.h.b16 %v5024
          %v5131 = vunpack.c.l.b16 %v5025
          %v5132 = vunpack.c.h.b16 %v5025
          %v5133 = vunpack.c.l.b16 %v5026
          %v5134 = vunpack.c.h.b16 %v5026
          %v5135 = vpack.c.b16 %v5073, %v5071
          %v5136 = vpack.c.b16 %v5074, %v5072
          %v5137 = vpack.c.b16 %v5077, %v5075
          %v5138 = vpack.c.b16 %v5078, %v5076
          %v5139 = vpack.c.b16 %v5081, %v5079
          %v5140 = vpack.c.b16 %v5082, %v5080
          %v5141 = vpack.c.b16 %v5085, %v5083
          %v5142 = vpack.c.b16 %v5086, %v5084
          %v5143 = vpack.c.b16 %v5089, %v5087
          %v5144 = vpack.c.b16 %v5090, %v5088
          %v5145 = vpack.c.b16 %v5093, %v5091
          %v5146 = vpack.c.b16 %v5094, %v5092
          %v5147 = vpack.c.b16 %v5097, %v5095
          %v5148 = vpack.c.b16 %v5098, %v5096
          %v5149 = vpack.c.b16 %v5101, %v5099
          %v5150 = vpack.c.b16 %v5102, %v5100
          %v5151 = vpack.c.b16 %v5105, %v5103
          %v5152 = vpack.c.b16 %v5106, %v5104
          %v5153 = vpack.c.b16 %v5109, %v5107
          %v5154 = vpack.c.b16 %v5110, %v5108
          %v5155 = vpack.c.b16 %v5113, %v5111
          %v5156 = vpack.c.b16 %v5114, %v5112
          %v5157 = vpack.c.b16 %v5117, %v5115
          %v5158 = vpack.c.b16 %v5118, %v5116
          %v5159 = vpack.c.b16 %v5121, %v5119
          %v5160 = vpack.c.b16 %v5122, %v5120
          %v5161 = vpack.c.b16 %v5125, %v5123
          %v5162 = vpack.c.b16 %v5126, %v5124
          %v5163 = vpack.c.b16 %v5129, %v5127
          %v5164 = vpack.c.b16 %v5130, %v5128
          %v5165 = vpack.c.b16 %v5133, %v5131
          %v5166 = vpack.c.b16 %v5134, %v5132
          %5199 = vmatprep.subr.bf16.mxu0 %v5136
          %5200 = vmatpush1.bf16.msra.mxu0 %v5135
          %5201 = vmatprep.subr.bf16.mxu0 %v5138
          %5202 = vmatpush1.bf16.msra.mxu0 %v5137
          %5203 = vmatprep.subr.bf16.mxu0 %v5140
          %5204 = vmatpush1.bf16.msra.mxu0 %v5139
          %5205 = vmatprep.subr.bf16.mxu0 %v5142
          %5206 = vmatpush1.bf16.msra.mxu0 %v5141
          %5207 = vmatprep.subr.bf16.mxu0 %v5144
          %5208 = vmatpush1.bf16.msra.mxu0 %v5143
          %5209 = vmatprep.subr.bf16.mxu0 %v5146
          %5210 = vmatpush1.bf16.msra.mxu0 %v5145
          %5211 = vmatprep.subr.bf16.mxu0 %v5148
          %5212 = vmatpush1.bf16.msra.mxu0 %v5147
          %5213 = vmatprep.subr.bf16.mxu0 %v5150
          %5214 = vmatpush1.bf16.msra.mxu0 %v5149
          %5215 = vmatprep.subr.bf16.mxu0 %v5152
          %5216 = vmatpush1.bf16.msra.mxu0 %v5151
          %5217 = vmatprep.subr.bf16.mxu0 %v5154
          %5218 = vmatpush1.bf16.msra.mxu0 %v5153
          %5219 = vmatprep.subr.bf16.mxu0 %v5156
          %5220 = vmatpush1.bf16.msra.mxu0 %v5155
          %5221 = vmatprep.subr.bf16.mxu0 %v5158
          %5222 = vmatpush1.bf16.msra.mxu0 %v5157
          %5223 = vmatprep.subr.bf16.mxu0 %v5160
          %5224 = vmatpush1.bf16.msra.mxu0 %v5159
          %5225 = vmatprep.subr.bf16.mxu0 %v5162
          %5226 = vmatpush1.bf16.msra.mxu0 %v5161
          %5227 = vmatprep.subr.bf16.mxu0 %v5164
          %5228 = vmatpush1.bf16.msra.mxu0 %v5163
          %5229 = vmatprep.subr.bf16.mxu0 %v5166
          %5230 = vmatpush1.bf16.msra.mxu0 %v5165
          %5231 = vmatprep.mubr.bf16.mxu0 %v4994
          %5232 = vmatmul.mubr.bf16.gmra.mrb[0].mxu0 %v4993
          %v5233 = vpop.f32.mrb[0].mxu0
          %v5234 = vadd.f32 %v5032, %v5233
          %v5235 = vpop.f32.mrb[0].mxu0
          %v5236 = vadd.f32 %v5036, %v5235
          %v5237 = vpop.f32.mrb[0].mxu0
          %v5238 = vpop.f32.mrb[0].mxu0
          %5239 = vdwg.mxu0
          %v5240 = vmax.f32 %v5234, 0.0
          %v5241 = vmax.f32 %v5236, 0.0
          %v5242 = vpack.c.bf16 %v5240, %v5240
          %v5243 = vpack.c.bf16 %v5241, %v5241
          %v5244 = vld [vmem:[#allocation10] sm:$0xf]
          %v5245 = vld [vmem:[#allocation10 + $0x4] sm:$0xf]
          %v5246 = vld [vmem:[#allocation10 + $0x8] sm:$0xf]
          %v5247 = vld [vmem:[#allocation10 + $0xc] sm:$0xf]
          %v5248 = vld [vmem:[#allocation10 + $0x10] sm:$0xf]
          %v5249 = vld [vmem:[#allocation10 + $0x14] sm:$0xf]
          %v5250 = vld [vmem:[#allocation10 + $0x18] sm:$0xf]
          %v5251 = vld [vmem:[#allocation10 + $0x1c] sm:$0xf]
          %v5252 = vld [vmem:[#allocation10 + $0x20] sm:$0xf]
          %v5253 = vld [vmem:[#allocation10 + $0x24] sm:$0xf]
          %v5254 = vld [vmem:[#allocation10 + $0x28] sm:$0xf]
          %v5255 = vld [vmem:[#allocation10 + $0x2c] sm:$0xf]
          %v5256 = vld [vmem:[#allocation10 + $0x30] sm:$0xf]
          %v5257 = vld [vmem:[#allocation10 + $0x34] sm:$0xf]
          %v5258 = vld [vmem:[#allocation10 + $0x38] sm:$0xf]
          %v5259 = vld [vmem:[#allocation10 + $0x3c] sm:$0xf]
          %v5260 = vld [vmem:[#allocation10 + $0x40] sm:$0xf]
          %v5261 = vld [vmem:[#allocation10 + $0x44] sm:$0xf]
          %v5262 = vld [vmem:[#allocation10 + $0x48] sm:$0xf]
          %v5263 = vld [vmem:[#allocation10 + $0x4c] sm:$0xf]
          %v5264 = vld [vmem:[#allocation10 + $0x50] sm:$0xf]
          %v5265 = vld [vmem:[#allocation10 + $0x54] sm:$0xf]
          %v5266 = vld [vmem:[#allocation10 + $0x58] sm:$0xf]
          %v5267 = vld [vmem:[#allocation10 + $0x5c] sm:$0xf]
          %v5268 = vld [vmem:[#allocation10 + $0x60] sm:$0xf]
          %v5269 = vld [vmem:[#allocation10 + $0x64] sm:$0xf]
          %v5270 = vld [vmem:[#allocation10 + $0x68] sm:$0xf]
          %v5271 = vld [vmem:[#allocation10 + $0x6c] sm:$0xf]
          %v5272 = vld [vmem:[#allocation10 + $0x70] sm:$0xf]
          %v5273 = vld [vmem:[#allocation10 + $0x74] sm:$0xf]
          %v5274 = vld [vmem:[#allocation10 + $0x78] sm:$0xf]
          %v5275 = vld [vmem:[#allocation10 + $0x7c] sm:$0xf]
          %v5276 = vld [vmem:[%s7] sm:$0x1]
          %v5278 = vlaneseq
          %v5279 = vshrl.u32 %v5278, 7
          %v5280 = vsub.s32 0, %v5279
          %v5281 = vrot.slane %v5276, %v5280
          %v5315 = vunpack.c.l.b16 %v5244
          %v5316 = vunpack.c.l.b16 %v5245
          %v5317 = vunpack.c.l.b16 %v5246
          %v5318 = vunpack.c.l.b16 %v5247
          %v5319 = vunpack.c.l.b16 %v5248
          %v5320 = vunpack.c.l.b16 %v5249
          %v5321 = vunpack.c.l.b16 %v5250
          %v5322 = vunpack.c.l.b16 %v5251
          %v5323 = vunpack.c.l.b16 %v5252
          %v5324 = vunpack.c.l.b16 %v5253
          %v5325 = vunpack.c.l.b16 %v5254
          %v5326 = vunpack.c.l.b16 %v5255
          %v5327 = vunpack.c.l.b16 %v5256
          %v5328 = vunpack.c.l.b16 %v5257
          %v5329 = vunpack.c.l.b16 %v5258
          %v5330 = vunpack.c.l.b16 %v5259
          %v5331 = vunpack.c.l.b16 %v5260
          %v5332 = vunpack.c.l.b16 %v5261
          %v5333 = vunpack.c.l.b16 %v5262
          %v5334 = vunpack.c.l.b16 %v5263
          %v5335 = vunpack.c.l.b16 %v5264
          %v5336 = vunpack.c.l.b16 %v5265
          %v5337 = vunpack.c.l.b16 %v5266
          %v5338 = vunpack.c.l.b16 %v5267
          %v5339 = vunpack.c.l.b16 %v5268
          %v5340 = vunpack.c.l.b16 %v5269
          %v5341 = vunpack.c.l.b16 %v5270
          %v5342 = vunpack.c.l.b16 %v5271
          %v5343 = vunpack.c.l.b16 %v5272
          %v5344 = vunpack.c.l.b16 %v5273
          %v5345 = vunpack.c.l.b16 %v5274
          %v5346 = vunpack.c.l.b16 %v5275
          %v5347 = vpack.c.b16 %v5316, %v5315
          %v5348 = vpack.c.b16 %v5318, %v5317
          %v5349 = vpack.c.b16 %v5320, %v5319
          %v5350 = vpack.c.b16 %v5322, %v5321
          %v5351 = vpack.c.b16 %v5324, %v5323
          %v5352 = vpack.c.b16 %v5326, %v5325
          %v5353 = vpack.c.b16 %v5328, %v5327
          %v5354 = vpack.c.b16 %v5330, %v5329
          %v5355 = vpack.c.b16 %v5332, %v5331
          %v5356 = vpack.c.b16 %v5334, %v5333
          %v5357 = vpack.c.b16 %v5336, %v5335
          %v5358 = vpack.c.b16 %v5338, %v5337
          %v5359 = vpack.c.b16 %v5340, %v5339
          %v5360 = vpack.c.b16 %v5342, %v5341
          %v5361 = vpack.c.b16 %v5344, %v5343
          %v5362 = vpack.c.b16 %v5346, %v5345
          %5379 = vmatprep.subr.bf16.mxu0 0
          %5380 = vmatpush1.bf16.msra.mxu0 %v5347
          %5381 = vmatprep.subr.bf16.mxu0 0
          %5382 = vmatpush1.bf16.msra.mxu0 %v5348
          %5383 = vmatprep.subr.bf16.mxu0 0
          %5384 = vmatpush1.bf16.msra.mxu0 %v5349
          %5385 = vmatprep.subr.bf16.mxu0 0
          %5386 = vmatpush1.bf16.msra.mxu0 %v5350
          %5387 = vmatprep.subr.bf16.mxu0 0
          %5388 = vmatpush1.bf16.msra.mxu0 %v5351
          %5389 = vmatprep.subr.bf16.mxu0 0
          %5390 = vmatpush1.bf16.msra.mxu0 %v5352
          %5391 = vmatprep.subr.bf16.mxu0 0
          %5392 = vmatpush1.bf16.msra.mxu0 %v5353
          %5393 = vmatprep.subr.bf16.mxu0 0
          %5394 = vmatpush1.bf16.msra.mxu0 %v5354
          %5395 = vmatprep.subr.bf16.mxu0 0
          %5396 = vmatpush1.bf16.msra.mxu0 %v5355
          %5397 = vmatprep.subr.bf16.mxu0 0
          %5398 = vmatpush1.bf16.msra.mxu0 %v5356
          %5399 = vmatprep.subr.bf16.mxu0 0
          %5400 = vmatpush1.bf16.msra.mxu0 %v5357
          %5401 = vmatprep.subr.bf16.mxu0 0
          %5402 = vmatpush1.bf16.msra.mxu0 %v5358
          %5403 = vmatprep.subr.bf16.mxu0 0
          %5404 = vmatpush1.bf16.msra.mxu0 %v5359
          %5405 = vmatprep.subr.bf16.mxu0 0
          %5406 = vmatpush1.bf16.msra.mxu0 %v5360
          %5407 = vmatprep.subr.bf16.mxu0 0
          %5408 = vmatpush1.bf16.msra.mxu0 %v5361
          %5409 = vmatprep.subr.bf16.mxu0 0
          %5410 = vmatpush1.bf16.msra.mxu0 %v5362
          %5411 = vmatprep.mubr.bf16.mxu0 %v5243
          %5412 = vmatmul.mubr.bf16.gmra.mrb[0].mxu0 %v5242
          %v5413 = vpop.f32.mrb[0].mxu0
          %v5414 = vadd.f32 %v5281, %v5413
          %v5415 = vpop.f32.mrb[0].mxu0
          %v5416 = vpop.f32.mrb[0].mxu0
          %v5417 = vpop.f32.mrb[0].mxu0
          %5418 = vdwg.mxu0
          %v5419 = vmax.f32 %v5414, 0.0
          %v5420 = vld [vmem:[%s8] sm:$0xff]
          %v5421 = vld [vmem:[%s8 + $0x8] sm:$0xff]
          %v5422 = vld [vmem:[%s8 + $0x10] sm:$0xff]
          %v5423 = vld [vmem:[%s8 + $0x18] sm:$0xff]
          %v5424 = vld [vmem:[%s8 + $0x20] sm:$0xff]
          %v5425 = vld [vmem:[%s8 + $0x28] sm:$0xff]
          %v5426 = vld [vmem:[%s8 + $0x30] sm:$0xff]
          %v5427 = vld [vmem:[%s8 + $0x38] sm:$0xff]
          %v5428 = vld [vmem:[%s8 + $0x40] sm:$0xff]
          %v5429 = vld [vmem:[%s8 + $0x48] sm:$0xff]
          %v5430 = vld [vmem:[%s8 + $0x50] sm:$0xff]
          %v5431 = vld [vmem:[%s8 + $0x58] sm:$0xff]
          %v5432 = vld [vmem:[%s8 + $0x60] sm:$0xff]
          %v5433 = vld [vmem:[%s8 + $0x68] sm:$0xff]
          %v5434 = vld [vmem:[%s8 + $0x70] sm:$0xff]
          %v5435 = vld [vmem:[%s8 + $0x78] sm:$0xff]
          %v5436 = vld [vmem:[#allocation5] sm:$0x1]
          %v5438 = vlaneseq
          %v5439 = vshrl.u32 %v5438, 7
          %v5440 = vsub.s32 0, %v5439
          %v5441 = vrot.slane %v5436, %v5440
          %5443 = vmatprep.subr.mxu0 0.0
          %5444 = vmatpush1.msra.mxu0 %v5420
          %5445 = vmatprep.subr.mxu0 0.0
          %5446 = vmatpush1.msra.mxu0 %v5421
          %5447 = vmatprep.subr.mxu0 0.0
          %5448 = vmatpush1.msra.mxu0 %v5422
          %5449 = vmatprep.subr.mxu0 0.0
          %5450 = vmatpush1.msra.mxu0 %v5423
          %5451 = vmatprep.subr.mxu0 0.0
          %5452 = vmatpush1.msra.mxu0 %v5424
          %5453 = vmatprep.subr.mxu0 0.0
          %5454 = vmatpush1.msra.mxu0 %v5425
          %5455 = vmatprep.subr.mxu0 0.0
          %5456 = vmatpush1.msra.mxu0 %v5426
          %5457 = vmatprep.subr.mxu0 0.0
          %5458 = vmatpush1.msra.mxu0 %v5427
          %5459 = vmatprep.subr.mxu0 0.0
          %5460 = vmatpush1.msra.mxu0 %v5428
          %5461 = vmatprep.subr.mxu0 0.0
          %5462 = vmatpush1.msra.mxu0 %v5429
          %5463 = vmatprep.subr.mxu0 0.0
          %5464 = vmatpush1.msra.mxu0 %v5430
          %5465 = vmatprep.subr.mxu0 0.0
          %5466 = vmatpush1.msra.mxu0 %v5431
          %5467 = vmatprep.subr.mxu0 0.0
          %5468 = vmatpush1.msra.mxu0 %v5432
          %5469 = vmatprep.subr.mxu0 0.0
          %5470 = vmatpush1.msra.mxu0 %v5433
          %5471 = vmatprep.subr.mxu0 0.0
          %5472 = vmatpush1.msra.mxu0 %v5434
          %5473 = vmatprep.subr.mxu0 0.0
          %5474 = vmatpush1.msra.mxu0 %v5435
          %5475 = vmatprep.subr.mxu0 0.0
          %5476 = vmatpush1.msra.mxu0 0.0
          %5477 = vmatprep.subr.mxu0 0.0
          %5478 = vmatpush1.msra.mxu0 0.0
          %5479 = vmatprep.subr.mxu0 0.0
          %5480 = vmatpush1.msra.mxu0 0.0
          %5481 = vmatprep.subr.mxu0 0.0
          %5482 = vmatpush1.msra.mxu0 0.0
          %5483 = vmatprep.subr.mxu0 0.0
          %5484 = vmatpush1.msra.mxu0 0.0
          %5485 = vmatprep.subr.mxu0 0.0
          %5486 = vmatpush1.msra.mxu0 0.0
          %5487 = vmatprep.subr.mxu0 0.0
          %5488 = vmatpush1.msra.mxu0 0.0
          %5489 = vmatprep.subr.mxu0 0.0
          %5490 = vmatpush1.msra.mxu0 0.0
          %5491 = vmatprep.subr.mxu0 0.0
          %5492 = vmatpush1.msra.mxu0 0.0
          %5493 = vmatprep.subr.mxu0 0.0
          %5494 = vmatpush1.msra.mxu0 0.0
          %5495 = vmatprep.subr.mxu0 0.0
          %5496 = vmatpush1.msra.mxu0 0.0
          %5497 = vmatprep.subr.mxu0 0.0
          %5498 = vmatpush1.msra.mxu0 0.0
          %5499 = vmatprep.subr.mxu0 0.0
          %5500 = vmatpush1.msra.mxu0 0.0
          %5501 = vmatprep.subr.mxu0 0.0
          %5502 = vmatpush1.msra.mxu0 0.0
          %5503 = vmatprep.subr.mxu0 0.0
          %5504 = vmatpush1.msra.mxu0 0.0
          %5505 = vmatprep.subr.mxu0 0.0
          %5506 = vmatpush1.msra.mxu0 0.0
          %5507 = vmatprep.mubr.f32.mxu0 0.0
          %5508 = vmatmul.mubr.f32.gmra.mrb[0].mxu0 %v5419
          %v5509 = vpop.f32.mrb[0].mxu0
          %v5510 = vadd.f32 %v5441, %v5509
          %v5511 = vpop.f32.mrb[0].mxu0
          %5512 = vdwg.mxu0
          %vm5513 = vcmask 7168
          %5514 = vst.msk [vmem:[%s434] sm:$0xff] %vm5513, %v5510
        $region80: #{lstm_net_forward.1} parent=59 // pred_fallthru
          _
        %p5515 = scmp.lt.s32.totalorder %s29, 0
        %s5516 = scalar_select %p5515, %s29, 0
        %s5517 = smul.addr %s5516, 8
        %s5518 = scalar_lea.vmem %s10, %s5517
        // Predicated region
        $region81: #{lstm_net_forward.1} parent=59 // pred_check
          %p5519 = pneg %p272
        $region82: #{lstm_net_forward.1} parent=59 // pred_check_branch
          %5521 = sbr.rel (%p5519) target = $region84
        $region83: #{lstm_net_forward.1} parent=59 // pred_region
          _
        $region84: #{lstm_net_forward.1} parent=59 // pred_fallthru
          _
        // Predicated region
        $region85: #{lstm_net_forward.1} parent=59 // pred_check
          %p5522 = pneg %p272
        $region86: #{lstm_net_forward.1} parent=59 // pred_check_branch
          %5524 = sbr.rel (%p5522) target = $region88
        $region87: #{lstm_net_forward.1} parent=59 // pred_region
          %p5525 = scmp.lt.s32.totalorder %s29, 0
          %s5526 = scalar_select %p5525, %s29, 0
          %s5527 = smul.addr %s5526, 8
          %s5528 = scalar_lea.vmem %s10, %s5527
        $region88: #{lstm_net_forward.1} parent=59 // pred_fallthru
          _
      $region60: #{lstm_net_forward.1} parent=5 // pred_fallthru
        _
      %p5529 = scmp.le.s32.totalorder 2, %s20
      // Predicated region
      $region89: #{lstm_net_forward.1} parent=5 // pred_check
        %p5530 = pneg %p5529
      $region90: #{lstm_net_forward.1} parent=5 // pred_check_branch
        %5532 = sbr.rel (%p5530) target = $region92
      $region91: #{lstm_net_forward.1} parent=5 // pred_region
        %s5533 = ssub.s32 %s20, 2
      $region92: #{lstm_net_forward.1} parent=5 // pred_fallthru
        _
    $region6: #{lstm_net_forward.1} parent=1 // loop_footer
      %s24 = sadd.s32 1, %s20
    $region7: #{lstm_net_forward.1} parent=1 // loop_footer_branch
      %19 = sbr.rel target = $region3
    $region8: #{lstm_net_forward.1} parent=1 // loop_exit
      _
    %5534 = vsyncpa [#allocation7], 1
    %s5535 = scalar_lea.sflag [#allocation7], 1
    %5536 = vsyncpa %s5535, 1
    %5537 = vsyncpa [#allocation9], 1

</llo_original>
